<compile_context>
chip_gen: v6e
topology: v6e:2x2x1
jax: 0.10.0
libtpu: 0.0.40
codegen_flags: <defaults>
</compile_context>

<pallas_src>
import math
import functools

import jax
import jax.numpy as jnp
from jax import lax
from jax.experimental import pallas as pl
from jax.experimental.pallas import tpu as pltpu


# ----------------------------------------------------------------------------
# In-kernel helpers
# ----------------------------------------------------------------------------
def _layernorm(x, gamma, beta, eps=1e-5):
    # PyTorch nn.LayerNorm: biased variance over last dim, eps=1e-5.
    mu = jnp.mean(x, axis=-1, keepdims=True)
    xc = x - mu
    var = jnp.mean(xc * xc, axis=-1, keepdims=True)
    inv = lax.rsqrt(var + eps)
    return xc * inv * gamma + beta


def _gelu_exact(x):
    return 0.5 * x * (1.0 + lax.erf(x * (1.0 / math.sqrt(2.0))))


# ----------------------------------------------------------------------------
# Fused TGINet forward kernel:
#   pos-emb add -> [QKV proj -> MHA -> out proj -> Add&LN -> FFN(GELU) -> Add&LN] x L
#   -> masked mean pool
# ----------------------------------------------------------------------------
def tginet_kernel(num_heads, num_layers, use_cond, *refs):
    if use_cond:
        (x_ref, pos_ref, mask_ref, cond_ref,
         wqkv_ref, bqkv_ref, wo_ref, bo_ref, ln1g_ref, ln1b_ref,
         w1_ref, b1_ref, w2_ref, b2_ref, ln2g_ref, ln2b_ref,
         seq_ref, emb_ref) = refs
    else:
        (x_ref, pos_ref, mask_ref,
         wqkv_ref, bqkv_ref, wo_ref, bo_ref, ln1g_ref, ln1b_ref,
         w1_ref, b1_ref, w2_ref, b2_ref, ln2g_ref, ln2b_ref,
         seq_ref, emb_ref) = refs
        cond_ref = None

    x = x_ref[...].astype(jnp.float32)                 # (TB, S, D)
    TB, S, D = x.shape
    dh = D // num_heads
    attn_scale = 1.0 / math.sqrt(dh)

    # AbsolutePositionalEmbedding (l2norm_embed=False): emb[pos] * D**-0.5
    pos = pos_ref[...].astype(jnp.float32) * (D ** -0.5)      # (S, D)
    h2 = (x + pos[None, :, :]).reshape(TB * S, D)             # (TB*S, D)

    if use_cond:
        c2 = cond_ref[...].astype(jnp.float32).reshape(TB * S, D)

    for l in range(num_layers):                        # static unroll over layers
        wqkv = wqkv_ref[l]                             # (D, 3D)
        bqkv = bqkv_ref[l]                             # (1, 3D)
        wo = wo_ref[l]                                 # (D, D)
        bo = bo_ref[l]                                 # (1, D)

        # --- fused QKV projection (single wide MXU pass in the self-attn path)
        if use_cond:
            q = jnp.dot(h2, wqkv[:, :D],
                        preferred_element_type=jnp.float32) + bqkv[:, :D]
            kv = jnp.dot(c2, wqkv[:, D:],
                         preferred_element_type=jnp.float32) + bqkv[:, D:]
            k, v = kv[:, :D], kv[:, D:]
        else:
            qkv = jnp.dot(h2, wqkv, preferred_element_type=jnp.float32) + bqkv
            q, k, v = qkv[:, :D], qkv[:, D:2 * D], qkv[:, 2 * D:]

        q3 = q.reshape(TB, S, D)
        k3 = k.reshape(TB, S, D)
        v3 = v.reshape(TB, S, D)

        # --- multi-head attention, batched over the batch dim, unmasked
        #     (matches the reference which passes attn_mask=None).
        #     The output projection is folded per head and summed, so no
        #     lane-axis concatenate is needed.
        attn_acc = None
        for hd in range(num_heads):                    # static unroll, H small
            sl = slice(hd * dh, (hd + 1) * dh)
            qh, kh, vh = q3[:, :, sl], k3[:, :, sl], v3[:, :, sl]   # (TB,S,dh)
            s = jnp.einsum('bqd,bkd->bqk', qh, kh,
                           preferred_element_type=jnp.float32) * attn_scale
            s = s - jnp.max(s, axis=-1, keepdims=True)
            p = jnp.exp(s)
            p = p * pl.reciprocal(jnp.sum(p, axis=-1, keepdims=True), approx=True)
            ah = jnp.einsum('bqk,bkd->bqd', p, vh,
                            preferred_element_type=jnp.float32)     # (TB,S,dh)
            oh = jnp.dot(ah.reshape(TB * S, dh), wo[sl, :],
                         preferred_element_type=jnp.float32)        # (TB*S,D)
            attn_acc = oh if attn_acc is None else attn_acc + oh
        attn2 = attn_acc + bo                                       # (TB*S,D)

        # --- Add & Norm #1
        y = _layernorm(attn2 + h2, ln1g_ref[l], ln1b_ref[l])

        # --- FeedForward: Linear -> GELU(exact) -> (dropout=identity) -> Linear
        hmid = jnp.dot(y, w1_ref[l], preferred_element_type=jnp.float32) + b1_ref[l]
        hmid = _gelu_exact(hmid)
        f = jnp.dot(hmid, w2_ref[l], preferred_element_type=jnp.float32) + b2_ref[l]

        # --- Add & Norm #2
        h2 = _layernorm(f + y, ln2g_ref[l], ln2b_ref[l])

    # --- outputs: final sequence + masked mean pooling
    h3 = h2.reshape(TB, S, D)
    seq_ref[...] = h3.astype(seq_ref.dtype)

    m = mask_ref[...].astype(jnp.float32)              # (TB, S, 1)
    msum = jnp.sum(h3 * m, axis=1)                     # (TB, D)
    cnt = jnp.sum(m, axis=1)                           # (TB, 1)
    emb = msum * pl.reciprocal(jnp.maximum(cnt, 1e-9), approx=True)
    emb_ref[...] = emb.astype(emb_ref.dtype)


# ----------------------------------------------------------------------------
# Wrapper: one pallas_call for the whole forward pass
# ----------------------------------------------------------------------------
def tginet_forward(params, x, x_mask=None, condition_seq=None,
                   condition_mask=None, num_heads=4):
    """Mirrors TGINet.forward (eval mode). condition_mask is accepted but,
    exactly like the PyTorch reference, never applied to attention."""
    B, S, D = x.shape
    L = params['wqkv'].shape[0]
    use_cond = condition_seq is not None

    if x_mask is None:
        x_mask = jnp.ones((B, S), x.dtype)
    mask3 = x_mask.reshape(B, S, 1).astype(x.dtype)

    # Process the whole (small) batch in a single grid step so the MXU sees the
    # largest possible M; at larger B this would tile over B//TB with the axis
    # kept "parallel" (shards across v7x's two TensorCores).
    TB = B
    grid = (B // TB,)

    seq_spec = pl.BlockSpec((TB, S, D), lambda b: (b, 0, 0))
    mask_spec = pl.BlockSpec((TB, S, 1), lambda b: (b, 0, 0))
    pos_spec = pl.BlockSpec((S, D), lambda b: (0, 0))      # first S rows of table

    def full_spec(arr):
        nd = arr.ndim
        return pl.BlockSpec(arr.shape, lambda b, _nd=nd: (0,) * _nd)

    weight_names = ['wqkv', 'bqkv', 'wo', 'bo', 'ln1g', 'ln1b',
                    'w1', 'b1', 'w2', 'b2', 'ln2g', 'ln2b']
    weights = [params[n] for n in weight_names]

    in_specs = [seq_spec, pos_spec, mask_spec]
    args = [x, params['pos_emb'], mask3]
    if use_cond:
        in_specs.append(seq_spec)
        args.append(condition_seq)
    in_specs += [full_spec(w) for w in weights]
    args += weights

    kernel = functools.partial(tginet_kernel, num_heads, L, use_cond)
    seq_out, emb_out = pl.pallas_call(
        kernel,
        out_shape=[jax.ShapeDtypeStruct((B, S, D), x.dtype),
                   jax.ShapeDtypeStruct((B, D), x.dtype)],
        grid=grid,
        in_specs=in_specs,
        out_specs=[seq_spec, pl.BlockSpec((TB, D), lambda b: (b, 0))],
        compiler_params=pltpu.CompilerParams(dimension_semantics=("parallel",)),
    )(*args)
    return {'sequence': seq_out, 'embedding': emb_out}


# ----------------------------------------------------------------------------
# Parameter init (deterministic, synthetic), stacked per-layer weights
# ----------------------------------------------------------------------------
def init_params(key, hidden, intermediate, num_layers, max_pos):
    D, F_, L = hidden, intermediate, num_layers
    k = jax.random.split(key, 8)

    def nrm(kk, shape, s=0.02):
        return jax.random.normal(kk, shape, jnp.float32) * s

    return {
        'pos_emb': nrm(k[0], (max_pos, D)),                 # nn.Embedding(max_pos, D)
        # fused in-proj, stored as (in, out) for x @ W: columns [Q | K | V]
        'wqkv': nrm(k[1], (L, D, 3 * D)),
        'bqkv': nrm(k[2], (L, 1, 3 * D)),
        'wo':   nrm(k[3], (L, D, D)),
        'bo':   nrm(k[4], (L, 1, D)),
        'w1':   nrm(k[5], (L, D, F_)),
        'b1':   nrm(k[6], (L, 1, F_)),
        'w2':   nrm(k[7], (L, F_, D)),
        'b2':   jnp.zeros((L, 1, D), jnp.float32),
        'ln1g': jnp.ones((L, 1, D), jnp.float32),
        'ln1b': jnp.zeros((L, 1, D), jnp.float32),
        'ln2g': jnp.ones((L, 1, D), jnp.float32),
        'ln2b': jnp.zeros((L, 1, D), jnp.float32),
    }


# ----------------------------------------------------------------------------
if __name__ == "__main__":
    B, S, D = 2, 8, 32          # batch, seq, hidden_size
    HEADS = 4
    INTER = 64                  # intermediate_size
    LAYERS = 2                  # num_hidden_layers
    MAX_POS = 64                # max_position_embeddings (>= S)

    key = jax.random.PRNGKey(0)
    kx, kp = jax.random.split(key, 2)
    x = jax.random.normal(kx, (B, S, D), jnp.float32)
    # padding mask: batch 0 fully valid, batch 1 has last 3 tokens padded
    x_mask = jnp.array([[1.0] * S,
                        [1.0] * (S - 3) + [0.0] * 3], dtype=jnp.float32)

    params = init_params(kp, D, INTER, LAYERS, MAX_POS)
    out = tginet_forward(params, x, x_mask=x_mask,
                         condition_seq=None, condition_mask=x_mask,
                         num_heads=HEADS)

    jax.block_until_ready(out['sequence'])   # (B, S, D)
    jax.block_until_ready(out['embedding'])  # (B, D)
    print("KERNEL_OK")
</pallas_src>

<mosaic_0001>
module attributes {stable_mosaic.version = 11 : i64} {
  func.func @tginet_kernel(%arg0: i32, %arg1: memref<2x8x32xf32, #tpu.memory_space<vmem>>, %arg2: memref<8x32xf32, #tpu.memory_space<vmem>>, %arg3: memref<2x8x1xf32, #tpu.memory_space<vmem>>, %arg4: memref<2x32x96xf32, #tpu.memory_space<vmem>>, %arg5: memref<2x1x96xf32, #tpu.memory_space<vmem>>, %arg6: memref<2x32x32xf32, #tpu.memory_space<vmem>>, %arg7: memref<2x1x32xf32, #tpu.memory_space<vmem>>, %arg8: memref<2x1x32xf32, #tpu.memory_space<vmem>>, %arg9: memref<2x1x32xf32, #tpu.memory_space<vmem>>, %arg10: memref<2x32x64xf32, #tpu.memory_space<vmem>>, %arg11: memref<2x1x64xf32, #tpu.memory_space<vmem>>, %arg12: memref<2x64x32xf32, #tpu.memory_space<vmem>>, %arg13: memref<2x1x32xf32, #tpu.memory_space<vmem>>, %arg14: memref<2x1x32xf32, #tpu.memory_space<vmem>>, %arg15: memref<2x1x32xf32, #tpu.memory_space<vmem>>, %arg16: memref<2x8x32xf32, #tpu.memory_space<vmem>>, %arg17: memref<2x32xf32, #tpu.memory_space<vmem>>) attributes {dimension_semantics = [#tpu.dimension_semantics<parallel>], iteration_bounds = array<i64: 1>, scalar_prefetch = 0 : i64, scratch_operands = 0 : i64, tpu.core_type = #tpu.core_type<tc>, window_params = [{transform_indices = @transform_0, window_bounds = array<i64: 2, 8, 32>}, {transform_indices = @transform_1, window_bounds = array<i64: 8, 32>}, {transform_indices = @transform_2, window_bounds = array<i64: 2, 8, 1>}, {pipeline_mode = #tpu.pipeline_mode<synchronous>, transform_indices = @transform_3, window_bounds = array<i64: 2, 32, 96>}, {pipeline_mode = #tpu.pipeline_mode<synchronous>, transform_indices = @transform_4, window_bounds = array<i64: 2, 1, 96>}, {pipeline_mode = #tpu.pipeline_mode<synchronous>, transform_indices = @transform_5, window_bounds = array<i64: 2, 32, 32>}, {pipeline_mode = #tpu.pipeline_mode<synchronous>, transform_indices = @transform_6, window_bounds = array<i64: 2, 1, 32>}, {pipeline_mode = #tpu.pipeline_mode<synchronous>, transform_indices = @transform_7, window_bounds = array<i64: 2, 1, 32>}, {pipeline_mode = #tpu.pipeline_mode<synchronous>, transform_indices = @transform_8, window_bounds = array<i64: 2, 1, 32>}, {pipeline_mode = #tpu.pipeline_mode<synchronous>, transform_indices = @transform_9, window_bounds = array<i64: 2, 32, 64>}, {pipeline_mode = #tpu.pipeline_mode<synchronous>, transform_indices = @transform_10, window_bounds = array<i64: 2, 1, 64>}, {pipeline_mode = #tpu.pipeline_mode<synchronous>, transform_indices = @transform_11, window_bounds = array<i64: 2, 64, 32>}, {pipeline_mode = #tpu.pipeline_mode<synchronous>, transform_indices = @transform_12, window_bounds = array<i64: 2, 1, 32>}, {pipeline_mode = #tpu.pipeline_mode<synchronous>, transform_indices = @transform_13, window_bounds = array<i64: 2, 1, 32>}, {pipeline_mode = #tpu.pipeline_mode<synchronous>, transform_indices = @transform_14, window_bounds = array<i64: 2, 1, 32>}, {transform_indices = @transform_15, window_bounds = array<i64: 2, 8, 32>}, {transform_indices = @transform_16, window_bounds = array<i64: 2, 32>}]} {
    %c0 = arith.constant 0 : index
    %c0_0 = arith.constant 0 : index
    %c0_1 = arith.constant 0 : index
    %0 = vector.load %arg1[%c0, %c0_0, %c0_1] : memref<2x8x32xf32, #tpu.memory_space<vmem>>, vector<2x8x32xf32>
    %c0_2 = arith.constant 0 : index
    %c0_3 = arith.constant 0 : index
    %1 = vector.load %arg2[%c0_2, %c0_3] : memref<8x32xf32, #tpu.memory_space<vmem>>, vector<8x32xf32>
    %cst = arith.constant 0.176776692 : f32
    %2 = vector.broadcast %cst : f32 to vector<8x32xf32>
    %3 = arith.mulf %1, %2 : vector<8x32xf32>
    %4 = vector.shape_cast %3 : vector<8x32xf32> to vector<1x8x32xf32>
    %5 = vector.broadcast %4 : vector<1x8x32xf32> to vector<2x8x32xf32>
    %6 = arith.addf %0, %5 : vector<2x8x32xf32>
    %7 = vector.shape_cast %6 : vector<2x8x32xf32> to vector<16x32xf32>
    %c0_4 = arith.constant 0 : index
    %c0_5 = arith.constant 0 : index
    %c0_6 = arith.constant 0 : index
    %8 = vector.load %arg4[%c0_4, %c0_5, %c0_6] : memref<2x32x96xf32, #tpu.memory_space<vmem>>, vector<1x32x96xf32>
    %9 = vector.shape_cast %8 : vector<1x32x96xf32> to vector<32x96xf32>
    %c0_7 = arith.constant 0 : index
    %c0_8 = arith.constant 0 : index
    %c0_9 = arith.constant 0 : index
    %10 = vector.load %arg5[%c0_7, %c0_8, %c0_9] : memref<2x1x96xf32, #tpu.memory_space<vmem>>, vector<1x1x96xf32>
    %11 = vector.shape_cast %10 : vector<1x1x96xf32> to vector<1x96xf32>
    %c0_10 = arith.constant 0 : index
    %c0_11 = arith.constant 0 : index
    %c0_12 = arith.constant 0 : index
    %12 = vector.load %arg6[%c0_10, %c0_11, %c0_12] : memref<2x32x32xf32, #tpu.memory_space<vmem>>, vector<1x32x32xf32>
    %13 = vector.shape_cast %12 : vector<1x32x32xf32> to vector<32x32xf32>
    %c0_13 = arith.constant 0 : index
    %c0_14 = arith.constant 0 : index
    %c0_15 = arith.constant 0 : index
    %14 = vector.load %arg7[%c0_13, %c0_14, %c0_15] : memref<2x1x32xf32, #tpu.memory_space<vmem>>, vector<1x1x32xf32>
    %15 = vector.shape_cast %14 : vector<1x1x32xf32> to vector<1x32xf32>
    %cst_16 = arith.constant dense<0.000000e+00> : vector<16x96xf32>
    %16 = tpu.matmul %7, %9, %cst_16 {dimension_numbers = #tpu.dot_dimension_numbers<[1], [0], [0], [1], [0, 0, 1, 1], [], []>} : vector<16x32xf32>, vector<32x96xf32>, vector<16x96xf32> -> vector<16x96xf32>
    %17 = vector.broadcast %11 : vector<1x96xf32> to vector<16x96xf32>
    %18 = arith.addf %16, %17 : vector<16x96xf32>
    %19 = vector.extract_strided_slice %18 {offsets = [0, 0], sizes = [16, 32], strides = [1, 1]} : vector<16x96xf32> to vector<16x32xf32>
    %20 = vector.extract_strided_slice %18 {offsets = [0, 32], sizes = [16, 32], strides = [1, 1]} : vector<16x96xf32> to vector<16x32xf32>
    %21 = vector.extract_strided_slice %18 {offsets = [0, 64], sizes = [16, 32], strides = [1, 1]} : vector<16x96xf32> to vector<16x32xf32>
    %22 = vector.shape_cast %19 : vector<16x32xf32> to vector<2x8x32xf32>
    %23 = vector.shape_cast %20 : vector<16x32xf32> to vector<2x8x32xf32>
    %24 = vector.shape_cast %21 : vector<16x32xf32> to vector<2x8x32xf32>
    %25 = vector.extract_strided_slice %22 {offsets = [0, 0, 0], sizes = [2, 8, 8], strides = [1, 1, 1]} : vector<2x8x32xf32> to vector<2x8x8xf32>
    %26 = vector.extract_strided_slice %23 {offsets = [0, 0, 0], sizes = [2, 8, 8], strides = [1, 1, 1]} : vector<2x8x32xf32> to vector<2x8x8xf32>
    %27 = vector.extract_strided_slice %24 {offsets = [0, 0, 0], sizes = [2, 8, 8], strides = [1, 1, 1]} : vector<2x8x32xf32> to vector<2x8x8xf32>
    "tpu.trace_start"() <{level = 10 : i32, message = "bqd,bkd->bqk"}> : () -> ()
    %cst_17 = arith.constant dense<0.000000e+00> : vector<2x8x8xf32>
    %28 = tpu.matmul %25, %26, %cst_17 {dimension_numbers = #tpu.dot_dimension_numbers<[2], [2], [1], [1], [0, 0, 0, 1, 1, 1], [0], [0]>} : vector<2x8x8xf32>, vector<2x8x8xf32>, vector<2x8x8xf32> -> vector<2x8x8xf32>
    "tpu.trace_stop"() : () -> ()
    %cst_18 = arith.constant 0.353553385 : f32
    %29 = vector.broadcast %cst_18 : f32 to vector<2x8x8xf32>
    %30 = arith.mulf %28, %29 : vector<2x8x8xf32>
    %cst_19 = arith.constant dense<0xFF800000> : vector<2x8xf32>
    %31 = vector.multi_reduction <maximumf>, %30, %cst_19 [2] : vector<2x8x8xf32> to vector<2x8xf32>
    %32 = vector.shape_cast %31 : vector<2x8xf32> to vector<2x8x1xf32>
    %33 = vector.broadcast %32 : vector<2x8x1xf32> to vector<2x8x8xf32>
    %34 = arith.subf %30, %33 : vector<2x8x8xf32>
    %35 = math.exp %34 : vector<2x8x8xf32>
    %cst_20 = arith.constant dense<0.000000e+00> : vector<2x8xf32>
    %36 = vector.multi_reduction <add>, %35, %cst_20 [2] : vector<2x8x8xf32> to vector<2x8xf32>
    %37 = vector.shape_cast %36 : vector<2x8xf32> to vector<2x8x1xf32>
    %38 = tpu.reciprocal %37 {approx = true} : vector<2x8x1xf32> -> vector<2x8x1xf32>
    %39 = vector.broadcast %38 : vector<2x8x1xf32> to vector<2x8x8xf32>
    %40 = arith.mulf %35, %39 : vector<2x8x8xf32>
    "tpu.trace_start"() <{level = 10 : i32, message = "bqk,bkd->bqd"}> : () -> ()
    %cst_21 = arith.constant dense<0.000000e+00> : vector<2x8x8xf32>
    %41 = tpu.matmul %40, %27, %cst_21 {dimension_numbers = #tpu.dot_dimension_numbers<[2], [1], [1], [2], [0, 0, 0, 1, 1, 2], [0], [0]>} : vector<2x8x8xf32>, vector<2x8x8xf32>, vector<2x8x8xf32> -> vector<2x8x8xf32>
    "tpu.trace_stop"() : () -> ()
    %42 = vector.shape_cast %41 : vector<2x8x8xf32> to vector<16x8xf32>
    %43 = vector.extract_strided_slice %13 {offsets = [0, 0], sizes = [8, 32], strides = [1, 1]} : vector<32x32xf32> to vector<8x32xf32>
    %cst_22 = arith.constant dense<0.000000e+00> : vector<16x32xf32>
    %44 = tpu.matmul %42, %43, %cst_22 {dimension_numbers = #tpu.dot_dimension_numbers<[1], [0], [0], [1], [0, 0, 1, 1], [], []>} : vector<16x8xf32>, vector<8x32xf32>, vector<16x32xf32> -> vector<16x32xf32>
    %45 = vector.extract_strided_slice %22 {offsets = [0, 0, 8], sizes = [2, 8, 8], strides = [1, 1, 1]} : vector<2x8x32xf32> to vector<2x8x8xf32>
    %46 = vector.extract_strided_slice %23 {offsets = [0, 0, 8], sizes = [2, 8, 8], strides = [1, 1, 1]} : vector<2x8x32xf32> to vector<2x8x8xf32>
    %47 = vector.extract_strided_slice %24 {offsets = [0, 0, 8], sizes = [2, 8, 8], strides = [1, 1, 1]} : vector<2x8x32xf32> to vector<2x8x8xf32>
    "tpu.trace_start"() <{level = 10 : i32, message = "bqd,bkd->bqk"}> : () -> ()
    %cst_23 = arith.constant dense<0.000000e+00> : vector<2x8x8xf32>
    %48 = tpu.matmul %45, %46, %cst_23 {dimension_numbers = #tpu.dot_dimension_numbers<[2], [2], [1], [1], [0, 0, 0, 1, 1, 1], [0], [0]>} : vector<2x8x8xf32>, vector<2x8x8xf32>, vector<2x8x8xf32> -> vector<2x8x8xf32>
    "tpu.trace_stop"() : () -> ()
    %cst_24 = arith.constant 0.353553385 : f32
    %49 = vector.broadcast %cst_24 : f32 to vector<2x8x8xf32>
    %50 = arith.mulf %48, %49 : vector<2x8x8xf32>
    %cst_25 = arith.constant dense<0xFF800000> : vector<2x8xf32>
    %51 = vector.multi_reduction <maximumf>, %50, %cst_25 [2] : vector<2x8x8xf32> to vector<2x8xf32>
    %52 = vector.shape_cast %51 : vector<2x8xf32> to vector<2x8x1xf32>
    %53 = vector.broadcast %52 : vector<2x8x1xf32> to vector<2x8x8xf32>
    %54 = arith.subf %50, %53 : vector<2x8x8xf32>
    %55 = math.exp %54 : vector<2x8x8xf32>
    %cst_26 = arith.constant dense<0.000000e+00> : vector<2x8xf32>
    %56 = vector.multi_reduction <add>, %55, %cst_26 [2] : vector<2x8x8xf32> to vector<2x8xf32>
    %57 = vector.shape_cast %56 : vector<2x8xf32> to vector<2x8x1xf32>
    %58 = tpu.reciprocal %57 {approx = true} : vector<2x8x1xf32> -> vector<2x8x1xf32>
    %59 = vector.broadcast %58 : vector<2x8x1xf32> to vector<2x8x8xf32>
    %60 = arith.mulf %55, %59 : vector<2x8x8xf32>
    "tpu.trace_start"() <{level = 10 : i32, message = "bqk,bkd->bqd"}> : () -> ()
    %cst_27 = arith.constant dense<0.000000e+00> : vector<2x8x8xf32>
    %61 = tpu.matmul %60, %47, %cst_27 {dimension_numbers = #tpu.dot_dimension_numbers<[2], [1], [1], [2], [0, 0, 0, 1, 1, 2], [0], [0]>} : vector<2x8x8xf32>, vector<2x8x8xf32>, vector<2x8x8xf32> -> vector<2x8x8xf32>
    "tpu.trace_stop"() : () -> ()
    %62 = vector.shape_cast %61 : vector<2x8x8xf32> to vector<16x8xf32>
    %63 = vector.extract_strided_slice %13 {offsets = [8, 0], sizes = [8, 32], strides = [1, 1]} : vector<32x32xf32> to vector<8x32xf32>
    %cst_28 = arith.constant dense<0.000000e+00> : vector<16x32xf32>
    %64 = tpu.matmul %62, %63, %cst_28 {dimension_numbers = #tpu.dot_dimension_numbers<[1], [0], [0], [1], [0, 0, 1, 1], [], []>} : vector<16x8xf32>, vector<8x32xf32>, vector<16x32xf32> -> vector<16x32xf32>
    %65 = arith.addf %44, %64 : vector<16x32xf32>
    %66 = vector.extract_strided_slice %22 {offsets = [0, 0, 16], sizes = [2, 8, 8], strides = [1, 1, 1]} : vector<2x8x32xf32> to vector<2x8x8xf32>
    %67 = vector.extract_strided_slice %23 {offsets = [0, 0, 16], sizes = [2, 8, 8], strides = [1, 1, 1]} : vector<2x8x32xf32> to vector<2x8x8xf32>
    %68 = vector.extract_strided_slice %24 {offsets = [0, 0, 16], sizes = [2, 8, 8], strides = [1, 1, 1]} : vector<2x8x32xf32> to vector<2x8x8xf32>
    "tpu.trace_start"() <{level = 10 : i32, message = "bqd,bkd->bqk"}> : () -> ()
    %cst_29 = arith.constant dense<0.000000e+00> : vector<2x8x8xf32>
    %69 = tpu.matmul %66, %67, %cst_29 {dimension_numbers = #tpu.dot_dimension_numbers<[2], [2], [1], [1], [0, 0, 0, 1, 1, 1], [0], [0]>} : vector<2x8x8xf32>, vector<2x8x8xf32>, vector<2x8x8xf32> -> vector<2x8x8xf32>
    "tpu.trace_stop"() : () -> ()
    %cst_30 = arith.constant 0.353553385 : f32
    %70 = vector.broadcast %cst_30 : f32 to vector<2x8x8xf32>
    %71 = arith.mulf %69, %70 : vector<2x8x8xf32>
    %cst_31 = arith.constant dense<0xFF800000> : vector<2x8xf32>
    %72 = vector.multi_reduction <maximumf>, %71, %cst_31 [2] : vector<2x8x8xf32> to vector<2x8xf32>
    %73 = vector.shape_cast %72 : vector<2x8xf32> to vector<2x8x1xf32>
    %74 = vector.broadcast %73 : vector<2x8x1xf32> to vector<2x8x8xf32>
    %75 = arith.subf %71, %74 : vector<2x8x8xf32>
    %76 = math.exp %75 : vector<2x8x8xf32>
    %cst_32 = arith.constant dense<0.000000e+00> : vector<2x8xf32>
    %77 = vector.multi_reduction <add>, %76, %cst_32 [2] : vector<2x8x8xf32> to vector<2x8xf32>
    %78 = vector.shape_cast %77 : vector<2x8xf32> to vector<2x8x1xf32>
    %79 = tpu.reciprocal %78 {approx = true} : vector<2x8x1xf32> -> vector<2x8x1xf32>
    %80 = vector.broadcast %79 : vector<2x8x1xf32> to vector<2x8x8xf32>
    %81 = arith.mulf %76, %80 : vector<2x8x8xf32>
    "tpu.trace_start"() <{level = 10 : i32, message = "bqk,bkd->bqd"}> : () -> ()
    %cst_33 = arith.constant dense<0.000000e+00> : vector<2x8x8xf32>
    %82 = tpu.matmul %81, %68, %cst_33 {dimension_numbers = #tpu.dot_dimension_numbers<[2], [1], [1], [2], [0, 0, 0, 1, 1, 2], [0], [0]>} : vector<2x8x8xf32>, vector<2x8x8xf32>, vector<2x8x8xf32> -> vector<2x8x8xf32>
    "tpu.trace_stop"() : () -> ()
    %83 = vector.shape_cast %82 : vector<2x8x8xf32> to vector<16x8xf32>
    %84 = vector.extract_strided_slice %13 {offsets = [16, 0], sizes = [8, 32], strides = [1, 1]} : vector<32x32xf32> to vector<8x32xf32>
    %cst_34 = arith.constant dense<0.000000e+00> : vector<16x32xf32>
    %85 = tpu.matmul %83, %84, %cst_34 {dimension_numbers = #tpu.dot_dimension_numbers<[1], [0], [0], [1], [0, 0, 1, 1], [], []>} : vector<16x8xf32>, vector<8x32xf32>, vector<16x32xf32> -> vector<16x32xf32>
    %86 = arith.addf %65, %85 : vector<16x32xf32>
    %87 = vector.extract_strided_slice %22 {offsets = [0, 0, 24], sizes = [2, 8, 8], strides = [1, 1, 1]} : vector<2x8x32xf32> to vector<2x8x8xf32>
    %88 = vector.extract_strided_slice %23 {offsets = [0, 0, 24], sizes = [2, 8, 8], strides = [1, 1, 1]} : vector<2x8x32xf32> to vector<2x8x8xf32>
    %89 = vector.extract_strided_slice %24 {offsets = [0, 0, 24], sizes = [2, 8, 8], strides = [1, 1, 1]} : vector<2x8x32xf32> to vector<2x8x8xf32>
    "tpu.trace_start"() <{level = 10 : i32, message = "bqd,bkd->bqk"}> : () -> ()
    %cst_35 = arith.constant dense<0.000000e+00> : vector<2x8x8xf32>
    %90 = tpu.matmul %87, %88, %cst_35 {dimension_numbers = #tpu.dot_dimension_numbers<[2], [2], [1], [1], [0, 0, 0, 1, 1, 1], [0], [0]>} : vector<2x8x8xf32>, vector<2x8x8xf32>, vector<2x8x8xf32> -> vector<2x8x8xf32>
    "tpu.trace_stop"() : () -> ()
    %cst_36 = arith.constant 0.353553385 : f32
    %91 = vector.broadcast %cst_36 : f32 to vector<2x8x8xf32>
    %92 = arith.mulf %90, %91 : vector<2x8x8xf32>
    %cst_37 = arith.constant dense<0xFF800000> : vector<2x8xf32>
    %93 = vector.multi_reduction <maximumf>, %92, %cst_37 [2] : vector<2x8x8xf32> to vector<2x8xf32>
    %94 = vector.shape_cast %93 : vector<2x8xf32> to vector<2x8x1xf32>
    %95 = vector.broadcast %94 : vector<2x8x1xf32> to vector<2x8x8xf32>
    %96 = arith.subf %92, %95 : vector<2x8x8xf32>
    %97 = math.exp %96 : vector<2x8x8xf32>
    %cst_38 = arith.constant dense<0.000000e+00> : vector<2x8xf32>
    %98 = vector.multi_reduction <add>, %97, %cst_38 [2] : vector<2x8x8xf32> to vector<2x8xf32>
    %99 = vector.shape_cast %98 : vector<2x8xf32> to vector<2x8x1xf32>
    %100 = tpu.reciprocal %99 {approx = true} : vector<2x8x1xf32> -> vector<2x8x1xf32>
    %101 = vector.broadcast %100 : vector<2x8x1xf32> to vector<2x8x8xf32>
    %102 = arith.mulf %97, %101 : vector<2x8x8xf32>
    "tpu.trace_start"() <{level = 10 : i32, message = "bqk,bkd->bqd"}> : () -> ()
    %cst_39 = arith.constant dense<0.000000e+00> : vector<2x8x8xf32>
    %103 = tpu.matmul %102, %89, %cst_39 {dimension_numbers = #tpu.dot_dimension_numbers<[2], [1], [1], [2], [0, 0, 0, 1, 1, 2], [0], [0]>} : vector<2x8x8xf32>, vector<2x8x8xf32>, vector<2x8x8xf32> -> vector<2x8x8xf32>
    "tpu.trace_stop"() : () -> ()
    %104 = vector.shape_cast %103 : vector<2x8x8xf32> to vector<16x8xf32>
    %105 = vector.extract_strided_slice %13 {offsets = [24, 0], sizes = [8, 32], strides = [1, 1]} : vector<32x32xf32> to vector<8x32xf32>
    %cst_40 = arith.constant dense<0.000000e+00> : vector<16x32xf32>
    %106 = tpu.matmul %104, %105, %cst_40 {dimension_numbers = #tpu.dot_dimension_numbers<[1], [0], [0], [1], [0, 0, 1, 1], [], []>} : vector<16x8xf32>, vector<8x32xf32>, vector<16x32xf32> -> vector<16x32xf32>
    %107 = arith.addf %86, %106 : vector<16x32xf32>
    %108 = vector.broadcast %15 : vector<1x32xf32> to vector<16x32xf32>
    %109 = arith.addf %107, %108 : vector<16x32xf32>
    %110 = arith.addf %109, %7 : vector<16x32xf32>
    %c0_41 = arith.constant 0 : index
    %c0_42 = arith.constant 0 : index
    %c0_43 = arith.constant 0 : index
    %111 = vector.load %arg8[%c0_41, %c0_42, %c0_43] : memref<2x1x32xf32, #tpu.memory_space<vmem>>, vector<1x1x32xf32>
    %112 = vector.shape_cast %111 : vector<1x1x32xf32> to vector<1x32xf32>
    %c0_44 = arith.constant 0 : index
    %c0_45 = arith.constant 0 : index
    %c0_46 = arith.constant 0 : index
    %113 = vector.load %arg9[%c0_44, %c0_45, %c0_46] : memref<2x1x32xf32, #tpu.memory_space<vmem>>, vector<1x1x32xf32>
    %114 = vector.shape_cast %113 : vector<1x1x32xf32> to vector<1x32xf32>
    %cst_47 = arith.constant dense<0.000000e+00> : vector<16xf32>
    %115 = vector.multi_reduction <add>, %110, %cst_47 [1] : vector<16x32xf32> to vector<16xf32>
    %116 = vector.shape_cast %115 : vector<16xf32> to vector<16x1xf32>
    %cst_48 = arith.constant 3.200000e+01 : f32
    %117 = vector.broadcast %cst_48 : f32 to vector<16x1xf32>
    %118 = arith.divf %116, %117 : vector<16x1xf32>
    %119 = vector.broadcast %118 : vector<16x1xf32> to vector<16x32xf32>
    %120 = arith.subf %110, %119 : vector<16x32xf32>
    %121 = arith.mulf %120, %120 : vector<16x32xf32>
    %cst_49 = arith.constant dense<0.000000e+00> : vector<16xf32>
    %122 = vector.multi_reduction <add>, %121, %cst_49 [1] : vector<16x32xf32> to vector<16xf32>
    %123 = vector.shape_cast %122 : vector<16xf32> to vector<16x1xf32>
    %cst_50 = arith.constant 3.200000e+01 : f32
    %124 = vector.broadcast %cst_50 : f32 to vector<16x1xf32>
    %125 = arith.divf %123, %124 : vector<16x1xf32>
    %cst_51 = arith.constant 9.99999974E-6 : f32
    %126 = vector.broadcast %cst_51 : f32 to vector<16x1xf32>
    %127 = arith.addf %125, %126 : vector<16x1xf32>
    %128 = math.rsqrt %127 : vector<16x1xf32>
    %129 = vector.broadcast %128 : vector<16x1xf32> to vector<16x32xf32>
    %130 = arith.mulf %120, %129 : vector<16x32xf32>
    %131 = vector.broadcast %112 : vector<1x32xf32> to vector<16x32xf32>
    %132 = arith.mulf %130, %131 : vector<16x32xf32>
    %133 = vector.broadcast %114 : vector<1x32xf32> to vector<16x32xf32>
    %134 = arith.addf %132, %133 : vector<16x32xf32>
    %c0_52 = arith.constant 0 : index
    %c0_53 = arith.constant 0 : index
    %c0_54 = arith.constant 0 : index
    %135 = vector.load %arg10[%c0_52, %c0_53, %c0_54] : memref<2x32x64xf32, #tpu.memory_space<vmem>>, vector<1x32x64xf32>
    %136 = vector.shape_cast %135 : vector<1x32x64xf32> to vector<32x64xf32>
    %cst_55 = arith.constant dense<0.000000e+00> : vector<16x64xf32>
    %137 = tpu.matmul %134, %136, %cst_55 {dimension_numbers = #tpu.dot_dimension_numbers<[1], [0], [0], [1], [0, 0, 1, 1], [], []>} : vector<16x32xf32>, vector<32x64xf32>, vector<16x64xf32> -> vector<16x64xf32>
    %c0_56 = arith.constant 0 : index
    %c0_57 = arith.constant 0 : index
    %c0_58 = arith.constant 0 : index
    %138 = vector.load %arg11[%c0_56, %c0_57, %c0_58] : memref<2x1x64xf32, #tpu.memory_space<vmem>>, vector<1x1x64xf32>
    %139 = vector.shape_cast %138 : vector<1x1x64xf32> to vector<1x64xf32>
    %140 = vector.broadcast %139 : vector<1x64xf32> to vector<16x64xf32>
    %141 = arith.addf %137, %140 : vector<16x64xf32>
    %cst_59 = arith.constant 5.000000e-01 : f32
    %142 = vector.broadcast %cst_59 : f32 to vector<16x64xf32>
    %143 = arith.mulf %142, %141 : vector<16x64xf32>
    %cst_60 = arith.constant 0.707106769 : f32
    %144 = vector.broadcast %cst_60 : f32 to vector<16x64xf32>
    %145 = arith.mulf %141, %144 : vector<16x64xf32>
    %146 = math.erf %145 : vector<16x64xf32>
    %cst_61 = arith.constant 1.000000e+00 : f32
    %147 = vector.broadcast %cst_61 : f32 to vector<16x64xf32>
    %148 = arith.addf %147, %146 : vector<16x64xf32>
    %149 = arith.mulf %143, %148 : vector<16x64xf32>
    %c0_62 = arith.constant 0 : index
    %c0_63 = arith.constant 0 : index
    %c0_64 = arith.constant 0 : index
    %150 = vector.load %arg12[%c0_62, %c0_63, %c0_64] : memref<2x64x32xf32, #tpu.memory_space<vmem>>, vector<1x64x32xf32>
    %151 = vector.shape_cast %150 : vector<1x64x32xf32> to vector<64x32xf32>
    %cst_65 = arith.constant dense<0.000000e+00> : vector<16x32xf32>
    %152 = tpu.matmul %149, %151, %cst_65 {dimension_numbers = #tpu.dot_dimension_numbers<[1], [0], [0], [1], [0, 0, 1, 1], [], []>} : vector<16x64xf32>, vector<64x32xf32>, vector<16x32xf32> -> vector<16x32xf32>
    %c0_66 = arith.constant 0 : index
    %c0_67 = arith.constant 0 : index
    %c0_68 = arith.constant 0 : index
    %153 = vector.load %arg13[%c0_66, %c0_67, %c0_68] : memref<2x1x32xf32, #tpu.memory_space<vmem>>, vector<1x1x32xf32>
    %154 = vector.shape_cast %153 : vector<1x1x32xf32> to vector<1x32xf32>
    %155 = vector.broadcast %154 : vector<1x32xf32> to vector<16x32xf32>
    %156 = arith.addf %152, %155 : vector<16x32xf32>
    %157 = arith.addf %156, %134 : vector<16x32xf32>
    %c0_69 = arith.constant 0 : index
    %c0_70 = arith.constant 0 : index
    %c0_71 = arith.constant 0 : index
    %158 = vector.load %arg14[%c0_69, %c0_70, %c0_71] : memref<2x1x32xf32, #tpu.memory_space<vmem>>, vector<1x1x32xf32>
    %159 = vector.shape_cast %158 : vector<1x1x32xf32> to vector<1x32xf32>
    %c0_72 = arith.constant 0 : index
    %c0_73 = arith.constant 0 : index
    %c0_74 = arith.constant 0 : index
    %160 = vector.load %arg15[%c0_72, %c0_73, %c0_74] : memref<2x1x32xf32, #tpu.memory_space<vmem>>, vector<1x1x32xf32>
    %161 = vector.shape_cast %160 : vector<1x1x32xf32> to vector<1x32xf32>
    %cst_75 = arith.constant dense<0.000000e+00> : vector<16xf32>
    %162 = vector.multi_reduction <add>, %157, %cst_75 [1] : vector<16x32xf32> to vector<16xf32>
    %163 = vector.shape_cast %162 : vector<16xf32> to vector<16x1xf32>
    %cst_76 = arith.constant 3.200000e+01 : f32
    %164 = vector.broadcast %cst_76 : f32 to vector<16x1xf32>
    %165 = arith.divf %163, %164 : vector<16x1xf32>
    %166 = vector.broadcast %165 : vector<16x1xf32> to vector<16x32xf32>
    %167 = arith.subf %157, %166 : vector<16x32xf32>
    %168 = arith.mulf %167, %167 : vector<16x32xf32>
    %cst_77 = arith.constant dense<0.000000e+00> : vector<16xf32>
    %169 = vector.multi_reduction <add>, %168, %cst_77 [1] : vector<16x32xf32> to vector<16xf32>
    %170 = vector.shape_cast %169 : vector<16xf32> to vector<16x1xf32>
    %cst_78 = arith.constant 3.200000e+01 : f32
    %171 = vector.broadcast %cst_78 : f32 to vector<16x1xf32>
    %172 = arith.divf %170, %171 : vector<16x1xf32>
    %cst_79 = arith.constant 9.99999974E-6 : f32
    %173 = vector.broadcast %cst_79 : f32 to vector<16x1xf32>
    %174 = arith.addf %172, %173 : vector<16x1xf32>
    %175 = math.rsqrt %174 : vector<16x1xf32>
    %176 = vector.broadcast %175 : vector<16x1xf32> to vector<16x32xf32>
    %177 = arith.mulf %167, %176 : vector<16x32xf32>
    %178 = vector.broadcast %159 : vector<1x32xf32> to vector<16x32xf32>
    %179 = arith.mulf %177, %178 : vector<16x32xf32>
    %180 = vector.broadcast %161 : vector<1x32xf32> to vector<16x32xf32>
    %181 = arith.addf %179, %180 : vector<16x32xf32>
    %c1 = arith.constant 1 : index
    %c0_80 = arith.constant 0 : index
    %c0_81 = arith.constant 0 : index
    %182 = vector.load %arg4[%c1, %c0_80, %c0_81] : memref<2x32x96xf32, #tpu.memory_space<vmem>>, vector<1x32x96xf32>
    %183 = vector.shape_cast %182 : vector<1x32x96xf32> to vector<32x96xf32>
    %c1_82 = arith.constant 1 : index
    %c0_83 = arith.constant 0 : index
    %c0_84 = arith.constant 0 : index
    %184 = vector.load %arg5[%c1_82, %c0_83, %c0_84] : memref<2x1x96xf32, #tpu.memory_space<vmem>>, vector<1x1x96xf32>
    %185 = vector.shape_cast %184 : vector<1x1x96xf32> to vector<1x96xf32>
    %c1_85 = arith.constant 1 : index
    %c0_86 = arith.constant 0 : index
    %c0_87 = arith.constant 0 : index
    %186 = vector.load %arg6[%c1_85, %c0_86, %c0_87] : memref<2x32x32xf32, #tpu.memory_space<vmem>>, vector<1x32x32xf32>
    %187 = vector.shape_cast %186 : vector<1x32x32xf32> to vector<32x32xf32>
    %c1_88 = arith.constant 1 : index
    %c0_89 = arith.constant 0 : index
    %c0_90 = arith.constant 0 : index
    %188 = vector.load %arg7[%c1_88, %c0_89, %c0_90] : memref<2x1x32xf32, #tpu.memory_space<vmem>>, vector<1x1x32xf32>
    %189 = vector.shape_cast %188 : vector<1x1x32xf32> to vector<1x32xf32>
    %cst_91 = arith.constant dense<0.000000e+00> : vector<16x96xf32>
    %190 = tpu.matmul %181, %183, %cst_91 {dimension_numbers = #tpu.dot_dimension_numbers<[1], [0], [0], [1], [0, 0, 1, 1], [], []>} : vector<16x32xf32>, vector<32x96xf32>, vector<16x96xf32> -> vector<16x96xf32>
    %191 = vector.broadcast %185 : vector<1x96xf32> to vector<16x96xf32>
    %192 = arith.addf %190, %191 : vector<16x96xf32>
    %193 = vector.extract_strided_slice %192 {offsets = [0, 0], sizes = [16, 32], strides = [1, 1]} : vector<16x96xf32> to vector<16x32xf32>
    %194 = vector.extract_strided_slice %192 {offsets = [0, 32], sizes = [16, 32], strides = [1, 1]} : vector<16x96xf32> to vector<16x32xf32>
    %195 = vector.extract_strided_slice %192 {offsets = [0, 64], sizes = [16, 32], strides = [1, 1]} : vector<16x96xf32> to vector<16x32xf32>
    %196 = vector.shape_cast %193 : vector<16x32xf32> to vector<2x8x32xf32>
    %197 = vector.shape_cast %194 : vector<16x32xf32> to vector<2x8x32xf32>
    %198 = vector.shape_cast %195 : vector<16x32xf32> to vector<2x8x32xf32>
    %199 = vector.extract_strided_slice %196 {offsets = [0, 0, 0], sizes = [2, 8, 8], strides = [1, 1, 1]} : vector<2x8x32xf32> to vector<2x8x8xf32>
    %200 = vector.extract_strided_slice %197 {offsets = [0, 0, 0], sizes = [2, 8, 8], strides = [1, 1, 1]} : vector<2x8x32xf32> to vector<2x8x8xf32>
    %201 = vector.extract_strided_slice %198 {offsets = [0, 0, 0], sizes = [2, 8, 8], strides = [1, 1, 1]} : vector<2x8x32xf32> to vector<2x8x8xf32>
    "tpu.trace_start"() <{level = 10 : i32, message = "bqd,bkd->bqk"}> : () -> ()
    %cst_92 = arith.constant dense<0.000000e+00> : vector<2x8x8xf32>
    %202 = tpu.matmul %199, %200, %cst_92 {dimension_numbers = #tpu.dot_dimension_numbers<[2], [2], [1], [1], [0, 0, 0, 1, 1, 1], [0], [0]>} : vector<2x8x8xf32>, vector<2x8x8xf32>, vector<2x8x8xf32> -> vector<2x8x8xf32>
    "tpu.trace_stop"() : () -> ()
    %cst_93 = arith.constant 0.353553385 : f32
    %203 = vector.broadcast %cst_93 : f32 to vector<2x8x8xf32>
    %204 = arith.mulf %202, %203 : vector<2x8x8xf32>
    %cst_94 = arith.constant dense<0xFF800000> : vector<2x8xf32>
    %205 = vector.multi_reduction <maximumf>, %204, %cst_94 [2] : vector<2x8x8xf32> to vector<2x8xf32>
    %206 = vector.shape_cast %205 : vector<2x8xf32> to vector<2x8x1xf32>
    %207 = vector.broadcast %206 : vector<2x8x1xf32> to vector<2x8x8xf32>
    %208 = arith.subf %204, %207 : vector<2x8x8xf32>
    %209 = math.exp %208 : vector<2x8x8xf32>
    %cst_95 = arith.constant dense<0.000000e+00> : vector<2x8xf32>
    %210 = vector.multi_reduction <add>, %209, %cst_95 [2] : vector<2x8x8xf32> to vector<2x8xf32>
    %211 = vector.shape_cast %210 : vector<2x8xf32> to vector<2x8x1xf32>
    %212 = tpu.reciprocal %211 {approx = true} : vector<2x8x1xf32> -> vector<2x8x1xf32>
    %213 = vector.broadcast %212 : vector<2x8x1xf32> to vector<2x8x8xf32>
    %214 = arith.mulf %209, %213 : vector<2x8x8xf32>
    "tpu.trace_start"() <{level = 10 : i32, message = "bqk,bkd->bqd"}> : () -> ()
    %cst_96 = arith.constant dense<0.000000e+00> : vector<2x8x8xf32>
    %215 = tpu.matmul %214, %201, %cst_96 {dimension_numbers = #tpu.dot_dimension_numbers<[2], [1], [1], [2], [0, 0, 0, 1, 1, 2], [0], [0]>} : vector<2x8x8xf32>, vector<2x8x8xf32>, vector<2x8x8xf32> -> vector<2x8x8xf32>
    "tpu.trace_stop"() : () -> ()
    %216 = vector.shape_cast %215 : vector<2x8x8xf32> to vector<16x8xf32>
    %217 = vector.extract_strided_slice %187 {offsets = [0, 0], sizes = [8, 32], strides = [1, 1]} : vector<32x32xf32> to vector<8x32xf32>
    %cst_97 = arith.constant dense<0.000000e+00> : vector<16x32xf32>
    %218 = tpu.matmul %216, %217, %cst_97 {dimension_numbers = #tpu.dot_dimension_numbers<[1], [0], [0], [1], [0, 0, 1, 1], [], []>} : vector<16x8xf32>, vector<8x32xf32>, vector<16x32xf32> -> vector<16x32xf32>
    %219 = vector.extract_strided_slice %196 {offsets = [0, 0, 8], sizes = [2, 8, 8], strides = [1, 1, 1]} : vector<2x8x32xf32> to vector<2x8x8xf32>
    %220 = vector.extract_strided_slice %197 {offsets = [0, 0, 8], sizes = [2, 8, 8], strides = [1, 1, 1]} : vector<2x8x32xf32> to vector<2x8x8xf32>
    %221 = vector.extract_strided_slice %198 {offsets = [0, 0, 8], sizes = [2, 8, 8], strides = [1, 1, 1]} : vector<2x8x32xf32> to vector<2x8x8xf32>
    "tpu.trace_start"() <{level = 10 : i32, message = "bqd,bkd->bqk"}> : () -> ()
    %cst_98 = arith.constant dense<0.000000e+00> : vector<2x8x8xf32>
    %222 = tpu.matmul %219, %220, %cst_98 {dimension_numbers = #tpu.dot_dimension_numbers<[2], [2], [1], [1], [0, 0, 0, 1, 1, 1], [0], [0]>} : vector<2x8x8xf32>, vector<2x8x8xf32>, vector<2x8x8xf32> -> vector<2x8x8xf32>
    "tpu.trace_stop"() : () -> ()
    %cst_99 = arith.constant 0.353553385 : f32
    %223 = vector.broadcast %cst_99 : f32 to vector<2x8x8xf32>
    %224 = arith.mulf %222, %223 : vector<2x8x8xf32>
    %cst_100 = arith.constant dense<0xFF800000> : vector<2x8xf32>
    %225 = vector.multi_reduction <maximumf>, %224, %cst_100 [2] : vector<2x8x8xf32> to vector<2x8xf32>
    %226 = vector.shape_cast %225 : vector<2x8xf32> to vector<2x8x1xf32>
    %227 = vector.broadcast %226 : vector<2x8x1xf32> to vector<2x8x8xf32>
    %228 = arith.subf %224, %227 : vector<2x8x8xf32>
    %229 = math.exp %228 : vector<2x8x8xf32>
    %cst_101 = arith.constant dense<0.000000e+00> : vector<2x8xf32>
    %230 = vector.multi_reduction <add>, %229, %cst_101 [2] : vector<2x8x8xf32> to vector<2x8xf32>
    %231 = vector.shape_cast %230 : vector<2x8xf32> to vector<2x8x1xf32>
    %232 = tpu.reciprocal %231 {approx = true} : vector<2x8x1xf32> -> vector<2x8x1xf32>
    %233 = vector.broadcast %232 : vector<2x8x1xf32> to vector<2x8x8xf32>
    %234 = arith.mulf %229, %233 : vector<2x8x8xf32>
    "tpu.trace_start"() <{level = 10 : i32, message = "bqk,bkd->bqd"}> : () -> ()
    %cst_102 = arith.constant dense<0.000000e+00> : vector<2x8x8xf32>
    %235 = tpu.matmul %234, %221, %cst_102 {dimension_numbers = #tpu.dot_dimension_numbers<[2], [1], [1], [2], [0, 0, 0, 1, 1, 2], [0], [0]>} : vector<2x8x8xf32>, vector<2x8x8xf32>, vector<2x8x8xf32> -> vector<2x8x8xf32>
    "tpu.trace_stop"() : () -> ()
    %236 = vector.shape_cast %235 : vector<2x8x8xf32> to vector<16x8xf32>
    %237 = vector.extract_strided_slice %187 {offsets = [8, 0], sizes = [8, 32], strides = [1, 1]} : vector<32x32xf32> to vector<8x32xf32>
    %cst_103 = arith.constant dense<0.000000e+00> : vector<16x32xf32>
    %238 = tpu.matmul %236, %237, %cst_103 {dimension_numbers = #tpu.dot_dimension_numbers<[1], [0], [0], [1], [0, 0, 1, 1], [], []>} : vector<16x8xf32>, vector<8x32xf32>, vector<16x32xf32> -> vector<16x32xf32>
    %239 = arith.addf %218, %238 : vector<16x32xf32>
    %240 = vector.extract_strided_slice %196 {offsets = [0, 0, 16], sizes = [2, 8, 8], strides = [1, 1, 1]} : vector<2x8x32xf32> to vector<2x8x8xf32>
    %241 = vector.extract_strided_slice %197 {offsets = [0, 0, 16], sizes = [2, 8, 8], strides = [1, 1, 1]} : vector<2x8x32xf32> to vector<2x8x8xf32>
    %242 = vector.extract_strided_slice %198 {offsets = [0, 0, 16], sizes = [2, 8, 8], strides = [1, 1, 1]} : vector<2x8x32xf32> to vector<2x8x8xf32>
    "tpu.trace_start"() <{level = 10 : i32, message = "bqd,bkd->bqk"}> : () -> ()
    %cst_104 = arith.constant dense<0.000000e+00> : vector<2x8x8xf32>
    %243 = tpu.matmul %240, %241, %cst_104 {dimension_numbers = #tpu.dot_dimension_numbers<[2], [2], [1], [1], [0, 0, 0, 1, 1, 1], [0], [0]>} : vector<2x8x8xf32>, vector<2x8x8xf32>, vector<2x8x8xf32> -> vector<2x8x8xf32>
    "tpu.trace_stop"() : () -> ()
    %cst_105 = arith.constant 0.353553385 : f32
    %244 = vector.broadcast %cst_105 : f32 to vector<2x8x8xf32>
    %245 = arith.mulf %243, %244 : vector<2x8x8xf32>
    %cst_106 = arith.constant dense<0xFF800000> : vector<2x8xf32>
    %246 = vector.multi_reduction <maximumf>, %245, %cst_106 [2] : vector<2x8x8xf32> to vector<2x8xf32>
    %247 = vector.shape_cast %246 : vector<2x8xf32> to vector<2x8x1xf32>
    %248 = vector.broadcast %247 : vector<2x8x1xf32> to vector<2x8x8xf32>
    %249 = arith.subf %245, %248 : vector<2x8x8xf32>
    %250 = math.exp %249 : vector<2x8x8xf32>
    %cst_107 = arith.constant dense<0.000000e+00> : vector<2x8xf32>
    %251 = vector.multi_reduction <add>, %250, %cst_107 [2] : vector<2x8x8xf32> to vector<2x8xf32>
    %252 = vector.shape_cast %251 : vector<2x8xf32> to vector<2x8x1xf32>
    %253 = tpu.reciprocal %252 {approx = true} : vector<2x8x1xf32> -> vector<2x8x1xf32>
    %254 = vector.broadcast %253 : vector<2x8x1xf32> to vector<2x8x8xf32>
    %255 = arith.mulf %250, %254 : vector<2x8x8xf32>
    "tpu.trace_start"() <{level = 10 : i32, message = "bqk,bkd->bqd"}> : () -> ()
    %cst_108 = arith.constant dense<0.000000e+00> : vector<2x8x8xf32>
    %256 = tpu.matmul %255, %242, %cst_108 {dimension_numbers = #tpu.dot_dimension_numbers<[2], [1], [1], [2], [0, 0, 0, 1, 1, 2], [0], [0]>} : vector<2x8x8xf32>, vector<2x8x8xf32>, vector<2x8x8xf32> -> vector<2x8x8xf32>
    "tpu.trace_stop"() : () -> ()
    %257 = vector.shape_cast %256 : vector<2x8x8xf32> to vector<16x8xf32>
    %258 = vector.extract_strided_slice %187 {offsets = [16, 0], sizes = [8, 32], strides = [1, 1]} : vector<32x32xf32> to vector<8x32xf32>
    %cst_109 = arith.constant dense<0.000000e+00> : vector<16x32xf32>
    %259 = tpu.matmul %257, %258, %cst_109 {dimension_numbers = #tpu.dot_dimension_numbers<[1], [0], [0], [1], [0, 0, 1, 1], [], []>} : vector<16x8xf32>, vector<8x32xf32>, vector<16x32xf32> -> vector<16x32xf32>
    %260 = arith.addf %239, %259 : vector<16x32xf32>
    %261 = vector.extract_strided_slice %196 {offsets = [0, 0, 24], sizes = [2, 8, 8], strides = [1, 1, 1]} : vector<2x8x32xf32> to vector<2x8x8xf32>
    %262 = vector.extract_strided_slice %197 {offsets = [0, 0, 24], sizes = [2, 8, 8], strides = [1, 1, 1]} : vector<2x8x32xf32> to vector<2x8x8xf32>
    %263 = vector.extract_strided_slice %198 {offsets = [0, 0, 24], sizes = [2, 8, 8], strides = [1, 1, 1]} : vector<2x8x32xf32> to vector<2x8x8xf32>
    "tpu.trace_start"() <{level = 10 : i32, message = "bqd,bkd->bqk"}> : () -> ()
    %cst_110 = arith.constant dense<0.000000e+00> : vector<2x8x8xf32>
    %264 = tpu.matmul %261, %262, %cst_110 {dimension_numbers = #tpu.dot_dimension_numbers<[2], [2], [1], [1], [0, 0, 0, 1, 1, 1], [0], [0]>} : vector<2x8x8xf32>, vector<2x8x8xf32>, vector<2x8x8xf32> -> vector<2x8x8xf32>
    "tpu.trace_stop"() : () -> ()
    %cst_111 = arith.constant 0.353553385 : f32
    %265 = vector.broadcast %cst_111 : f32 to vector<2x8x8xf32>
    %266 = arith.mulf %264, %265 : vector<2x8x8xf32>
    %cst_112 = arith.constant dense<0xFF800000> : vector<2x8xf32>
    %267 = vector.multi_reduction <maximumf>, %266, %cst_112 [2] : vector<2x8x8xf32> to vector<2x8xf32>
    %268 = vector.shape_cast %267 : vector<2x8xf32> to vector<2x8x1xf32>
    %269 = vector.broadcast %268 : vector<2x8x1xf32> to vector<2x8x8xf32>
    %270 = arith.subf %266, %269 : vector<2x8x8xf32>
    %271 = math.exp %270 : vector<2x8x8xf32>
    %cst_113 = arith.constant dense<0.000000e+00> : vector<2x8xf32>
    %272 = vector.multi_reduction <add>, %271, %cst_113 [2] : vector<2x8x8xf32> to vector<2x8xf32>
    %273 = vector.shape_cast %272 : vector<2x8xf32> to vector<2x8x1xf32>
    %274 = tpu.reciprocal %273 {approx = true} : vector<2x8x1xf32> -> vector<2x8x1xf32>
    %275 = vector.broadcast %274 : vector<2x8x1xf32> to vector<2x8x8xf32>
    %276 = arith.mulf %271, %275 : vector<2x8x8xf32>
    "tpu.trace_start"() <{level = 10 : i32, message = "bqk,bkd->bqd"}> : () -> ()
    %cst_114 = arith.constant dense<0.000000e+00> : vector<2x8x8xf32>
    %277 = tpu.matmul %276, %263, %cst_114 {dimension_numbers = #tpu.dot_dimension_numbers<[2], [1], [1], [2], [0, 0, 0, 1, 1, 2], [0], [0]>} : vector<2x8x8xf32>, vector<2x8x8xf32>, vector<2x8x8xf32> -> vector<2x8x8xf32>
    "tpu.trace_stop"() : () -> ()
    %278 = vector.shape_cast %277 : vector<2x8x8xf32> to vector<16x8xf32>
    %279 = vector.extract_strided_slice %187 {offsets = [24, 0], sizes = [8, 32], strides = [1, 1]} : vector<32x32xf32> to vector<8x32xf32>
    %cst_115 = arith.constant dense<0.000000e+00> : vector<16x32xf32>
    %280 = tpu.matmul %278, %279, %cst_115 {dimension_numbers = #tpu.dot_dimension_numbers<[1], [0], [0], [1], [0, 0, 1, 1], [], []>} : vector<16x8xf32>, vector<8x32xf32>, vector<16x32xf32> -> vector<16x32xf32>
    %281 = arith.addf %260, %280 : vector<16x32xf32>
    %282 = vector.broadcast %189 : vector<1x32xf32> to vector<16x32xf32>
    %283 = arith.addf %281, %282 : vector<16x32xf32>
    %284 = arith.addf %283, %181 : vector<16x32xf32>
    %c1_116 = arith.constant 1 : index
    %c0_117 = arith.constant 0 : index
    %c0_118 = arith.constant 0 : index
    %285 = vector.load %arg8[%c1_116, %c0_117, %c0_118] : memref<2x1x32xf32, #tpu.memory_space<vmem>>, vector<1x1x32xf32>
    %286 = vector.shape_cast %285 : vector<1x1x32xf32> to vector<1x32xf32>
    %c1_119 = arith.constant 1 : index
    %c0_120 = arith.constant 0 : index
    %c0_121 = arith.constant 0 : index
    %287 = vector.load %arg9[%c1_119, %c0_120, %c0_121] : memref<2x1x32xf32, #tpu.memory_space<vmem>>, vector<1x1x32xf32>
    %288 = vector.shape_cast %287 : vector<1x1x32xf32> to vector<1x32xf32>
    %cst_122 = arith.constant dense<0.000000e+00> : vector<16xf32>
    %289 = vector.multi_reduction <add>, %284, %cst_122 [1] : vector<16x32xf32> to vector<16xf32>
    %290 = vector.shape_cast %289 : vector<16xf32> to vector<16x1xf32>
    %cst_123 = arith.constant 3.200000e+01 : f32
    %291 = vector.broadcast %cst_123 : f32 to vector<16x1xf32>
    %292 = arith.divf %290, %291 : vector<16x1xf32>
    %293 = vector.broadcast %292 : vector<16x1xf32> to vector<16x32xf32>
    %294 = arith.subf %284, %293 : vector<16x32xf32>
    %295 = arith.mulf %294, %294 : vector<16x32xf32>
    %cst_124 = arith.constant dense<0.000000e+00> : vector<16xf32>
    %296 = vector.multi_reduction <add>, %295, %cst_124 [1] : vector<16x32xf32> to vector<16xf32>
    %297 = vector.shape_cast %296 : vector<16xf32> to vector<16x1xf32>
    %cst_125 = arith.constant 3.200000e+01 : f32
    %298 = vector.broadcast %cst_125 : f32 to vector<16x1xf32>
    %299 = arith.divf %297, %298 : vector<16x1xf32>
    %cst_126 = arith.constant 9.99999974E-6 : f32
    %300 = vector.broadcast %cst_126 : f32 to vector<16x1xf32>
    %301 = arith.addf %299, %300 : vector<16x1xf32>
    %302 = math.rsqrt %301 : vector<16x1xf32>
    %303 = vector.broadcast %302 : vector<16x1xf32> to vector<16x32xf32>
    %304 = arith.mulf %294, %303 : vector<16x32xf32>
    %305 = vector.broadcast %286 : vector<1x32xf32> to vector<16x32xf32>
    %306 = arith.mulf %304, %305 : vector<16x32xf32>
    %307 = vector.broadcast %288 : vector<1x32xf32> to vector<16x32xf32>
    %308 = arith.addf %306, %307 : vector<16x32xf32>
    %c1_127 = arith.constant 1 : index
    %c0_128 = arith.constant 0 : index
    %c0_129 = arith.constant 0 : index
    %309 = vector.load %arg10[%c1_127, %c0_128, %c0_129] : memref<2x32x64xf32, #tpu.memory_space<vmem>>, vector<1x32x64xf32>
    %310 = vector.shape_cast %309 : vector<1x32x64xf32> to vector<32x64xf32>
    %cst_130 = arith.constant dense<0.000000e+00> : vector<16x64xf32>
    %311 = tpu.matmul %308, %310, %cst_130 {dimension_numbers = #tpu.dot_dimension_numbers<[1], [0], [0], [1], [0, 0, 1, 1], [], []>} : vector<16x32xf32>, vector<32x64xf32>, vector<16x64xf32> -> vector<16x64xf32>
    %c1_131 = arith.constant 1 : index
    %c0_132 = arith.constant 0 : index
    %c0_133 = arith.constant 0 : index
    %312 = vector.load %arg11[%c1_131, %c0_132, %c0_133] : memref<2x1x64xf32, #tpu.memory_space<vmem>>, vector<1x1x64xf32>
    %313 = vector.shape_cast %312 : vector<1x1x64xf32> to vector<1x64xf32>
    %314 = vector.broadcast %313 : vector<1x64xf32> to vector<16x64xf32>
    %315 = arith.addf %311, %314 : vector<16x64xf32>
    %cst_134 = arith.constant 5.000000e-01 : f32
    %316 = vector.broadcast %cst_134 : f32 to vector<16x64xf32>
    %317 = arith.mulf %316, %315 : vector<16x64xf32>
    %cst_135 = arith.constant 0.707106769 : f32
    %318 = vector.broadcast %cst_135 : f32 to vector<16x64xf32>
    %319 = arith.mulf %315, %318 : vector<16x64xf32>
    %320 = math.erf %319 : vector<16x64xf32>
    %cst_136 = arith.constant 1.000000e+00 : f32
    %321 = vector.broadcast %cst_136 : f32 to vector<16x64xf32>
    %322 = arith.addf %321, %320 : vector<16x64xf32>
    %323 = arith.mulf %317, %322 : vector<16x64xf32>
    %c1_137 = arith.constant 1 : index
    %c0_138 = arith.constant 0 : index
    %c0_139 = arith.constant 0 : index
    %324 = vector.load %arg12[%c1_137, %c0_138, %c0_139] : memref<2x64x32xf32, #tpu.memory_space<vmem>>, vector<1x64x32xf32>
    %325 = vector.shape_cast %324 : vector<1x64x32xf32> to vector<64x32xf32>
    %cst_140 = arith.constant dense<0.000000e+00> : vector<16x32xf32>
    %326 = tpu.matmul %323, %325, %cst_140 {dimension_numbers = #tpu.dot_dimension_numbers<[1], [0], [0], [1], [0, 0, 1, 1], [], []>} : vector<16x64xf32>, vector<64x32xf32>, vector<16x32xf32> -> vector<16x32xf32>
    %c1_141 = arith.constant 1 : index
    %c0_142 = arith.constant 0 : index
    %c0_143 = arith.constant 0 : index
    %327 = vector.load %arg13[%c1_141, %c0_142, %c0_143] : memref<2x1x32xf32, #tpu.memory_space<vmem>>, vector<1x1x32xf32>
    %328 = vector.shape_cast %327 : vector<1x1x32xf32> to vector<1x32xf32>
    %329 = vector.broadcast %328 : vector<1x32xf32> to vector<16x32xf32>
    %330 = arith.addf %326, %329 : vector<16x32xf32>
    %331 = arith.addf %330, %308 : vector<16x32xf32>
    %c1_144 = arith.constant 1 : index
    %c0_145 = arith.constant 0 : index
    %c0_146 = arith.constant 0 : index
    %332 = vector.load %arg14[%c1_144, %c0_145, %c0_146] : memref<2x1x32xf32, #tpu.memory_space<vmem>>, vector<1x1x32xf32>
    %333 = vector.shape_cast %332 : vector<1x1x32xf32> to vector<1x32xf32>
    %c1_147 = arith.constant 1 : index
    %c0_148 = arith.constant 0 : index
    %c0_149 = arith.constant 0 : index
    %334 = vector.load %arg15[%c1_147, %c0_148, %c0_149] : memref<2x1x32xf32, #tpu.memory_space<vmem>>, vector<1x1x32xf32>
    %335 = vector.shape_cast %334 : vector<1x1x32xf32> to vector<1x32xf32>
    %cst_150 = arith.constant dense<0.000000e+00> : vector<16xf32>
    %336 = vector.multi_reduction <add>, %331, %cst_150 [1] : vector<16x32xf32> to vector<16xf32>
    %337 = vector.shape_cast %336 : vector<16xf32> to vector<16x1xf32>
    %cst_151 = arith.constant 3.200000e+01 : f32
    %338 = vector.broadcast %cst_151 : f32 to vector<16x1xf32>
    %339 = arith.divf %337, %338 : vector<16x1xf32>
    %340 = vector.broadcast %339 : vector<16x1xf32> to vector<16x32xf32>
    %341 = arith.subf %331, %340 : vector<16x32xf32>
    %342 = arith.mulf %341, %341 : vector<16x32xf32>
    %cst_152 = arith.constant dense<0.000000e+00> : vector<16xf32>
    %343 = vector.multi_reduction <add>, %342, %cst_152 [1] : vector<16x32xf32> to vector<16xf32>
    %344 = vector.shape_cast %343 : vector<16xf32> to vector<16x1xf32>
    %cst_153 = arith.constant 3.200000e+01 : f32
    %345 = vector.broadcast %cst_153 : f32 to vector<16x1xf32>
    %346 = arith.divf %344, %345 : vector<16x1xf32>
    %cst_154 = arith.constant 9.99999974E-6 : f32
    %347 = vector.broadcast %cst_154 : f32 to vector<16x1xf32>
    %348 = arith.addf %346, %347 : vector<16x1xf32>
    %349 = math.rsqrt %348 : vector<16x1xf32>
    %350 = vector.broadcast %349 : vector<16x1xf32> to vector<16x32xf32>
    %351 = arith.mulf %341, %350 : vector<16x32xf32>
    %352 = vector.broadcast %333 : vector<1x32xf32> to vector<16x32xf32>
    %353 = arith.mulf %351, %352 : vector<16x32xf32>
    %354 = vector.broadcast %335 : vector<1x32xf32> to vector<16x32xf32>
    %355 = arith.addf %353, %354 : vector<16x32xf32>
    %356 = vector.shape_cast %355 : vector<16x32xf32> to vector<2x8x32xf32>
    %c0_155 = arith.constant 0 : index
    %c0_156 = arith.constant 0 : index
    %c0_157 = arith.constant 0 : index
    %357 = vector.load %arg16[%c0_155, %c0_156, %c0_157] : memref<2x8x32xf32, #tpu.memory_space<vmem>>, vector<2x8x32xf32>
    tpu.vector_store %arg16[%c0_155, %c0_156, %c0_157], %356 {strides = array<i32>} : memref<2x8x32xf32, #tpu.memory_space<vmem>>, vector<2x8x32xf32>,
    %c0_158 = arith.constant 0 : index
    %c0_159 = arith.constant 0 : index
    %c0_160 = arith.constant 0 : index
    %358 = vector.load %arg3[%c0_158, %c0_159, %c0_160] : memref<2x8x1xf32, #tpu.memory_space<vmem>>, vector<2x8x1xf32>
    %359 = vector.broadcast %358 : vector<2x8x1xf32> to vector<2x8x32xf32>
    %360 = arith.mulf %356, %359 : vector<2x8x32xf32>
    %cst_161 = arith.constant dense<0.000000e+00> : vector<2x32xf32>
    %361 = vector.multi_reduction <add>, %360, %cst_161 [1] : vector<2x8x32xf32> to vector<2x32xf32>
    %cst_162 = arith.constant dense<0.000000e+00> : vector<2x1xf32>
    %362 = vector.multi_reduction <add>, %358, %cst_162 [1] : vector<2x8x1xf32> to vector<2x1xf32>
    %cst_163 = arith.constant 9.99999971E-10 : f32
    %363 = vector.broadcast %cst_163 : f32 to vector<2x1xf32>
    %364 = arith.maximumf %362, %363 : vector<2x1xf32>
    %365 = tpu.reciprocal %364 {approx = true} : vector<2x1xf32> -> vector<2x1xf32>
    %366 = vector.broadcast %365 : vector<2x1xf32> to vector<2x32xf32>
    %367 = arith.mulf %361, %366 : vector<2x32xf32>
    %c0_164 = arith.constant 0 : index
    %c0_165 = arith.constant 0 : index
    %368 = vector.load %arg17[%c0_164, %c0_165] : memref<2x32xf32, #tpu.memory_space<vmem>>, vector<2x32xf32>
    tpu.vector_store %arg17[%c0_164, %c0_165], %367 {strides = array<i32>} : memref<2x32xf32, #tpu.memory_space<vmem>>, vector<2x32xf32>,
    return
  }
  func.func @transform_0(%arg0: i32) -> (i32, i32, i32) {
    %c0_i32 = arith.constant 0 : i32
    %c0_i32_0 = arith.constant 0 : i32
    %c0_i32_1 = arith.constant 0 : i32
    return %arg0, %c0_i32, %c0_i32_0 : i32, i32, i32
  }
  func.func @transform_1(%arg0: i32) -> (i32, i32) {
    %c0_i32 = arith.constant 0 : i32
    %c0_i32_0 = arith.constant 0 : i32
    %c0_i32_1 = arith.constant 0 : i32
    return %c0_i32, %c0_i32_0 : i32, i32
  }
  func.func @transform_2(%arg0: i32) -> (i32, i32, i32) {
    %c0_i32 = arith.constant 0 : i32
    %c0_i32_0 = arith.constant 0 : i32
    %c0_i32_1 = arith.constant 0 : i32
    return %arg0, %c0_i32, %c0_i32_0 : i32, i32, i32
  }
  func.func @transform_3(%arg0: i32) -> (i32, i32, i32) {
    %c0_i32 = arith.constant 0 : i32
    %c0_i32_0 = arith.constant 0 : i32
    %c0_i32_1 = arith.constant 0 : i32
    %c0_i32_2 = arith.constant 0 : i32
    return %c0_i32, %c0_i32_0, %c0_i32_1 : i32, i32, i32
  }
  func.func @transform_4(%arg0: i32) -> (i32, i32, i32) {
    %c0_i32 = arith.constant 0 : i32
    %c0_i32_0 = arith.constant 0 : i32
    %c0_i32_1 = arith.constant 0 : i32
    %c0_i32_2 = arith.constant 0 : i32
    return %c0_i32, %c0_i32_0, %c0_i32_1 : i32, i32, i32
  }
  func.func @transform_5(%arg0: i32) -> (i32, i32, i32) {
    %c0_i32 = arith.constant 0 : i32
    %c0_i32_0 = arith.constant 0 : i32
    %c0_i32_1 = arith.constant 0 : i32
    %c0_i32_2 = arith.constant 0 : i32
    return %c0_i32, %c0_i32_0, %c0_i32_1 : i32, i32, i32
  }
  func.func @transform_6(%arg0: i32) -> (i32, i32, i32) {
    %c0_i32 = arith.constant 0 : i32
    %c0_i32_0 = arith.constant 0 : i32
    %c0_i32_1 = arith.constant 0 : i32
    %c0_i32_2 = arith.constant 0 : i32
    return %c0_i32, %c0_i32_0, %c0_i32_1 : i32, i32, i32
  }
  func.func @transform_7(%arg0: i32) -> (i32, i32, i32) {
    %c0_i32 = arith.constant 0 : i32
    %c0_i32_0 = arith.constant 0 : i32
    %c0_i32_1 = arith.constant 0 : i32
    %c0_i32_2 = arith.constant 0 : i32
    return %c0_i32, %c0_i32_0, %c0_i32_1 : i32, i32, i32
  }
  func.func @transform_8(%arg0: i32) -> (i32, i32, i32) {
    %c0_i32 = arith.constant 0 : i32
    %c0_i32_0 = arith.constant 0 : i32
    %c0_i32_1 = arith.constant 0 : i32
    %c0_i32_2 = arith.constant 0 : i32
    return %c0_i32, %c0_i32_0, %c0_i32_1 : i32, i32, i32
  }
  func.func @transform_9(%arg0: i32) -> (i32, i32, i32) {
    %c0_i32 = arith.constant 0 : i32
    %c0_i32_0 = arith.constant 0 : i32
    %c0_i32_1 = arith.constant 0 : i32
    %c0_i32_2 = arith.constant 0 : i32
    return %c0_i32, %c0_i32_0, %c0_i32_1 : i32, i32, i32
  }
  func.func @transform_10(%arg0: i32) -> (i32, i32, i32) {
    %c0_i32 = arith.constant 0 : i32
    %c0_i32_0 = arith.constant 0 : i32
    %c0_i32_1 = arith.constant 0 : i32
    %c0_i32_2 = arith.constant 0 : i32
    return %c0_i32, %c0_i32_0, %c0_i32_1 : i32, i32, i32
  }
  func.func @transform_11(%arg0: i32) -> (i32, i32, i32) {
    %c0_i32 = arith.constant 0 : i32
    %c0_i32_0 = arith.constant 0 : i32
    %c0_i32_1 = arith.constant 0 : i32
    %c0_i32_2 = arith.constant 0 : i32
    return %c0_i32, %c0_i32_0, %c0_i32_1 : i32, i32, i32
  }
  func.func @transform_12(%arg0: i32) -> (i32, i32, i32) {
    %c0_i32 = arith.constant 0 : i32
    %c0_i32_0 = arith.constant 0 : i32
    %c0_i32_1 = arith.constant 0 : i32
    %c0_i32_2 = arith.constant 0 : i32
    return %c0_i32, %c0_i32_0, %c0_i32_1 : i32, i32, i32
  }
  func.func @transform_13(%arg0: i32) -> (i32, i32, i32) {
    %c0_i32 = arith.constant 0 : i32
    %c0_i32_0 = arith.constant 0 : i32
    %c0_i32_1 = arith.constant 0 : i32
    %c0_i32_2 = arith.constant 0 : i32
    return %c0_i32, %c0_i32_0, %c0_i32_1 : i32, i32, i32
  }
  func.func @transform_14(%arg0: i32) -> (i32, i32, i32) {
    %c0_i32 = arith.constant 0 : i32
    %c0_i32_0 = arith.constant 0 : i32
    %c0_i32_1 = arith.constant 0 : i32
    %c0_i32_2 = arith.constant 0 : i32
    return %c0_i32, %c0_i32_0, %c0_i32_1 : i32, i32, i32
  }
  func.func @transform_15(%arg0: i32) -> (i32, i32, i32) {
    %c0_i32 = arith.constant 0 : i32
    %c0_i32_0 = arith.constant 0 : i32
    %c0_i32_1 = arith.constant 0 : i32
    return %arg0, %c0_i32, %c0_i32_0 : i32, i32, i32
  }
  func.func @transform_16(%arg0: i32) -> (i32, i32) {
    %c0_i32 = arith.constant 0 : i32
    %c0_i32_0 = arith.constant 0 : i32
    return %arg0, %c0_i32 : i32, i32
  }
}

</mosaic_0001>

<llo_original>
// kernel: tpu_custom_call.1
$region0: #{tpu_custom_call.1}
  #allocation0 [shape = 'u32[]', space=smem, size = 0x4, offset = 0x4, fixed_abs, tag = 'smem constant byte address 0x4 - core index']
  #allocation1 [shape = 'u32[144,128]{1,0:T(1,128)}', space=vmem, size = 0x12000, scoped, tag = 'internal scratch']
  %s0 = inlined_call_operand.vmem [shape: f32[2,8,32], index: 0, kind: input, shape index: {}]
  %s1 = inlined_call_operand.vmem [shape: f32[64,32], index: 1, kind: input, shape index: {}]
  %s2 = inlined_call_operand.vmem [shape: f32[2,8,1], index: 2, kind: input, shape index: {}]
  %s3 = inlined_call_operand.vmem [shape: f32[2,32,96], index: 3, kind: input, shape index: {}]
  %s4 = inlined_call_operand.vmem [shape: f32[2,1,96], index: 4, kind: input, shape index: {}]
  %s5 = inlined_call_operand.vmem [shape: f32[2,32,32], index: 5, kind: input, shape index: {}]
  %s6 = inlined_call_operand.vmem [shape: f32[2,1,32], index: 6, kind: input, shape index: {}]
  %s7 = inlined_call_operand.vmem [shape: f32[2,1,32], index: 7, kind: input, shape index: {}]
  %s8 = inlined_call_operand.vmem [shape: f32[2,1,32], index: 8, kind: input, shape index: {}]
  %s9 = inlined_call_operand.vmem [shape: f32[2,32,64], index: 9, kind: input, shape index: {}]
  %s10 = inlined_call_operand.vmem [shape: f32[2,1,64], index: 10, kind: input, shape index: {}]
  %s11 = inlined_call_operand.vmem [shape: f32[2,64,32], index: 11, kind: input, shape index: {}]
  %s12 = inlined_call_operand.vmem [shape: f32[2,1,32], index: 12, kind: input, shape index: {}]
  %s13 = inlined_call_operand.vmem [shape: f32[2,1,32], index: 13, kind: input, shape index: {}]
  %s14 = inlined_call_operand.vmem [shape: f32[2,1,32], index: 14, kind: input, shape index: {}]
  %s15 = inlined_call_operand.hbm [shape: f32[2,8,32], index: 15, kind: output, shape index: {0}]
  %s16 = inlined_call_operand.hbm [shape: f32[2,32], index: 16, kind: output, shape index: {1}]
  %17 = xla_tuple %s15, %s16
  %s18 = sld [smem:[#allocation0]]
  $region78: #{tpu_custom_call.1} parent=0
    _
  %s20 = ssub.s32 1, %s18
  %s21 = scalar_select 0, %s20, %s18
  $region1: #{tpu_custom_call.1} parent=0
    #allocation2 [shape = 'u8[8192]{0}', space=vmem, size = 0x2000, scoped, tag = 'output window, operand 0, single buffered']
    #allocation3 [shape = 's32[1]{0}', space=sflag, size = 0x4, scoped, tag = 'scoped memory for tpu_custom_call.1']
    #allocation4 [shape = 'u8[1024]{0}', space=vmem, size = 0x400, scoped, tag = 'output window, operand 1, single buffered']
    #allocation5 [shape = 's32[1]{0}', space=sflag, size = 0x4, scoped, tag = 'scoped memory for tpu_custom_call.1']
    %22 = vsyncpa [#allocation3], 0
    %23 = vsyncpa [#allocation5], 0
    // Predicated region
    $region2: #{tpu_custom_call.1} parent=1 // pred_check
      _
    $region3: #{tpu_custom_call.1} parent=1 // pred_check_branch
      %25 = sbr.rel (0) target = $region5
    $region4: #{tpu_custom_call.1} parent=1 // pred_region
      _
    $region5: #{tpu_custom_call.1} parent=1 // pred_fallthru
      _
    // Predicated region
    $region6: #{tpu_custom_call.1} parent=1 // pred_check
      _
    $region7: #{tpu_custom_call.1} parent=1 // pred_check_branch
      %27 = sbr.rel (0) target = $region9
    $region8: #{tpu_custom_call.1} parent=1 // pred_region
      _
    $region9: #{tpu_custom_call.1} parent=1 // pred_fallthru
      _
    // Predicated region
    $region10: #{tpu_custom_call.1} parent=1 // pred_check
      _
    $region11: #{tpu_custom_call.1} parent=1 // pred_check_branch
      %29 = sbr.rel (0) target = $region13
    $region12: #{tpu_custom_call.1} parent=1 // pred_region
      _
    $region13: #{tpu_custom_call.1} parent=1 // pred_fallthru
      _
    // Predicated region
    $region14: #{tpu_custom_call.1} parent=1 // pred_check
      _
    $region15: #{tpu_custom_call.1} parent=1 // pred_check_branch
      %31 = sbr.rel (0) target = $region17
    $region16: #{tpu_custom_call.1} parent=1 // pred_region
      _
    $region17: #{tpu_custom_call.1} parent=1 // pred_fallthru
      _
    // Predicated region
    $region18: #{tpu_custom_call.1} parent=1 // pred_check
      _
    $region19: #{tpu_custom_call.1} parent=1 // pred_check_branch
      %33 = sbr.rel (0) target = $region21
    $region20: #{tpu_custom_call.1} parent=1 // pred_region
      _
    $region21: #{tpu_custom_call.1} parent=1 // pred_fallthru
      _
    // Predicated region
    $region22: #{tpu_custom_call.1} parent=1 // pred_check
      _
    $region23: #{tpu_custom_call.1} parent=1 // pred_check_branch
      %35 = sbr.rel (0) target = $region25
    $region24: #{tpu_custom_call.1} parent=1 // pred_region
      _
    $region25: #{tpu_custom_call.1} parent=1 // pred_fallthru
      _
    // Predicated region
    $region26: #{tpu_custom_call.1} parent=1 // pred_check
      _
    $region27: #{tpu_custom_call.1} parent=1 // pred_check_branch
      %37 = sbr.rel (0) target = $region29
    $region28: #{tpu_custom_call.1} parent=1 // pred_region
      _
    $region29: #{tpu_custom_call.1} parent=1 // pred_fallthru
      _
    // Predicated region
    $region30: #{tpu_custom_call.1} parent=1 // pred_check
      _
    $region31: #{tpu_custom_call.1} parent=1 // pred_check_branch
      %39 = sbr.rel (0) target = $region33
    $region32: #{tpu_custom_call.1} parent=1 // pred_region
      _
    $region33: #{tpu_custom_call.1} parent=1 // pred_fallthru
      _
    // Predicated region
    $region34: #{tpu_custom_call.1} parent=1 // pred_check
      _
    $region35: #{tpu_custom_call.1} parent=1 // pred_check_branch
      %41 = sbr.rel (0) target = $region37
    $region36: #{tpu_custom_call.1} parent=1 // pred_region
      _
    $region37: #{tpu_custom_call.1} parent=1 // pred_fallthru
      _
    // Predicated region
    $region38: #{tpu_custom_call.1} parent=1 // pred_check
      _
    $region39: #{tpu_custom_call.1} parent=1 // pred_check_branch
      %43 = sbr.rel (0) target = $region41
    $region40: #{tpu_custom_call.1} parent=1 // pred_region
      _
    $region41: #{tpu_custom_call.1} parent=1 // pred_fallthru
      _
    // Predicated region
    $region42: #{tpu_custom_call.1} parent=1 // pred_check
      _
    $region43: #{tpu_custom_call.1} parent=1 // pred_check_branch
      %45 = sbr.rel (0) target = $region45
    $region44: #{tpu_custom_call.1} parent=1 // pred_region
      _
    $region45: #{tpu_custom_call.1} parent=1 // pred_fallthru
      _
    // Predicated region
    $region46: #{tpu_custom_call.1} parent=1 // pred_check
      _
    $region47: #{tpu_custom_call.1} parent=1 // pred_check_branch
      %47 = sbr.rel (0) target = $region49
    $region48: #{tpu_custom_call.1} parent=1 // pred_region
      _
    $region49: #{tpu_custom_call.1} parent=1 // pred_fallthru
      _
    // Predicated region
    $region50: #{tpu_custom_call.1} parent=1 // pred_check
      _
    $region51: #{tpu_custom_call.1} parent=1 // pred_check_branch
      %49 = sbr.rel (0) target = $region53
    $region52: #{tpu_custom_call.1} parent=1 // pred_region
      _
    $region53: #{tpu_custom_call.1} parent=1 // pred_fallthru
      _
    // Predicated region
    $region54: #{tpu_custom_call.1} parent=1 // pred_check
      _
    $region55: #{tpu_custom_call.1} parent=1 // pred_check_branch
      %51 = sbr.rel (0) target = $region57
    $region56: #{tpu_custom_call.1} parent=1 // pred_region
      _
    $region57: #{tpu_custom_call.1} parent=1 // pred_fallthru
      _
    // Predicated region
    $region58: #{tpu_custom_call.1} parent=1 // pred_check
      _
    $region59: #{tpu_custom_call.1} parent=1 // pred_check_branch
      %53 = sbr.rel (0) target = $region61
    $region60: #{tpu_custom_call.1} parent=1 // pred_region
      _
    $region61: #{tpu_custom_call.1} parent=1 // pred_fallthru
      _
    %v54 = vld [vmem:[%s0] sm:$0xff]
    %v55 = vld [vmem:[%s0 + $0x8] sm:$0xff]
    %v56 = vld [vmem:[%s1] sm:$0xff]
    %v57 = vmul.f32 %v56, 0.17677669
    %v58 = vadd.f32 %v54, %v57
    %v59 = vadd.f32 %v55, %v57
    %v60 = vld [vmem:[%s3] sm:$0xff]
    %v61 = vld [vmem:[%s3 + $0x8] sm:$0xff]
    %v62 = vld [vmem:[%s3 + $0x10] sm:$0xff]
    %v63 = vld [vmem:[%s3 + $0x18] sm:$0xff]
    %v64 = vld [vmem:[%s4] sm:$0x1]
    %v65 = vld [vmem:[%s5] sm:$0xff]
    %v66 = vld [vmem:[%s5 + $0x8] sm:$0xff]
    %v67 = vld [vmem:[%s5 + $0x10] sm:$0xff]
    %v68 = vld [vmem:[%s5 + $0x18] sm:$0xff]
    %v69 = vld [vmem:[%s6] sm:$0x1]
    %v71 = vlaneseq
    %v72 = vshrl.u32 %v71, 7
    %v73 = vsub.s32 0, %v72
    %v74 = vrot.slane %v64, %v73
    %vm76 = vcmask 261120
    %v78 = vsel %vm76, %v58, 0
    %v81 = vsel %vm76, %v59, 0
    %83 = vmatprep.subr.mxu0 0.0
    %84 = vmatpush1.msra.mxu0 0.0
    %85 = vmatprep.subr.mxu0 0.0
    %86 = vmatpush1.msra.mxu0 0.0
    %87 = vmatprep.subr.mxu0 0.0
    %88 = vmatpush1.msra.mxu0 0.0
    %89 = vmatprep.subr.mxu0 0.0
    %90 = vmatpush1.msra.mxu0 0.0
    %91 = vmatprep.subr.mxu0 0.0
    %92 = vmatpush1.msra.mxu0 0.0
    %93 = vmatprep.subr.mxu0 0.0
    %94 = vmatpush1.msra.mxu0 0.0
    %95 = vmatprep.subr.mxu0 0.0
    %96 = vmatpush1.msra.mxu0 0.0
    %97 = vmatprep.subr.mxu0 0.0
    %98 = vmatpush1.msra.mxu0 0.0
    %99 = vmatprep.subr.mxu0 0.0
    %100 = vmatpush1.msra.mxu0 0.0
    %101 = vmatprep.subr.mxu0 0.0
    %102 = vmatpush1.msra.mxu0 0.0
    %103 = vmatprep.subr.mxu0 0.0
    %104 = vmatpush1.msra.mxu0 0.0
    %105 = vmatprep.subr.mxu0 0.0
    %106 = vmatpush1.msra.mxu0 0.0
    %107 = vmatprep.subr.mxu0 0.0
    %108 = vmatpush1.msra.mxu0 %v63
    %109 = vmatprep.subr.mxu0 0.0
    %110 = vmatpush1.msra.mxu0 %v62
    %111 = vmatprep.subr.mxu0 0.0
    %112 = vmatpush1.msra.mxu0 %v61
    %113 = vmatprep.subr.mxu0 0.0
    %114 = vmatpush1.msra.mxu0 %v60
    %115 = vmatprep.subr.mxu0 0.0
    %116 = vmatpush2.msra.mxu0 0.0
    %117 = vmatprep.subr.mxu0 0.0
    %118 = vmatpush2.msra.mxu0 0.0
    %119 = vmatprep.subr.mxu0 0.0
    %120 = vmatpush2.msra.mxu0 0.0
    %121 = vmatprep.subr.mxu0 0.0
    %122 = vmatpush2.msra.mxu0 0.0
    %123 = vmatprep.subr.mxu0 0.0
    %124 = vmatpush2.msra.mxu0 0.0
    %125 = vmatprep.subr.mxu0 0.0
    %126 = vmatpush2.msra.mxu0 0.0
    %127 = vmatprep.subr.mxu0 0.0
    %128 = vmatpush2.msra.mxu0 0.0
    %129 = vmatprep.subr.mxu0 0.0
    %130 = vmatpush2.msra.mxu0 0.0
    %131 = vmatprep.subr.mxu0 0.0
    %132 = vmatpush2.msra.mxu0 0.0
    %133 = vmatprep.subr.mxu0 0.0
    %134 = vmatpush2.msra.mxu0 0.0
    %135 = vmatprep.subr.mxu0 0.0
    %136 = vmatpush2.msra.mxu0 0.0
    %137 = vmatprep.subr.mxu0 0.0
    %138 = vmatpush2.msra.mxu0 0.0
    %139 = vmatprep.subr.mxu0 0.0
    %140 = vmatpush2.msra.mxu0 0.0
    %141 = vmatprep.subr.mxu0 0.0
    %142 = vmatpush2.msra.mxu0 0.0
    %143 = vmatprep.subr.mxu0 0.0
    %144 = vmatpush2.msra.mxu0 0.0
    %145 = vmatprep.subr.mxu0 0.0
    %146 = vmatpush2.msra.mxu0 0.0
    %147 = vmatprep.mubr.f32.mxu0 0.0
    %148 = vmatmul.mubr.f32.gmra.mxu0 %v78
    %v149 = vpop.f32.mrf.mxu0
    %v150 = vadd.f32 %v74, %v149
    %v151 = vpop.f32.mrf.mxu0
    %152 = vmatprep.mubr.f32.mxu0 0.0
    %153 = vmatmul.mubr.f32.gmra.mxu0 %v81
    %v154 = vpop.f32.mrf.mxu0
    %v155 = vadd.f32 %v74, %v154
    %v156 = vpop.f32.mrf.mxu0
    %157 = vdwg.mxu0
    %159 = vrot.lane.b32.xlu0 %v150, 96
    %v160 = vpop.permute.xlu0 %159
    %vm161 = vcmask 64512
    %v162 = vsel %vm161, %v150, 0
    %v164 = vsel %vm161, %v160, 0
    %166 = vmatprep.subr.mxu0 0.0
    %167 = vmatpush1.xpose.msra.mxu0 0.0
    %168 = vmatprep.subr.mxu0 0.0
    %169 = vmatpush1.xpose.msra.mxu0 0.0
    %170 = vmatprep.subr.mxu0 0.0
    %171 = vmatpush1.xpose.msra.mxu0 0.0
    %172 = vmatprep.subr.mxu0 0.0
    %173 = vmatpush1.xpose.msra.mxu0 0.0
    %174 = vmatprep.subr.mxu0 0.0
    %175 = vmatpush1.xpose.msra.mxu0 0.0
    %176 = vmatprep.subr.mxu0 0.0
    %177 = vmatpush1.xpose.msra.mxu0 0.0
    %178 = vmatprep.subr.mxu0 0.0
    %179 = vmatpush1.xpose.msra.mxu0 0.0
    %180 = vmatprep.subr.mxu0 0.0
    %181 = vmatpush1.xpose.msra.mxu0 0.0
    %182 = vmatprep.subr.mxu0 0.0
    %183 = vmatpush1.xpose.msra.mxu0 0.0
    %184 = vmatprep.subr.mxu0 0.0
    %185 = vmatpush1.xpose.msra.mxu0 0.0
    %186 = vmatprep.subr.mxu0 0.0
    %187 = vmatpush1.xpose.msra.mxu0 0.0
    %188 = vmatprep.subr.mxu0 0.0
    %189 = vmatpush1.xpose.msra.mxu0 0.0
    %190 = vmatprep.subr.mxu0 0.0
    %191 = vmatpush1.xpose.msra.mxu0 0.0
    %192 = vmatprep.subr.mxu0 0.0
    %193 = vmatpush1.xpose.msra.mxu0 0.0
    %194 = vmatprep.subr.mxu0 0.0
    %195 = vmatpush1.xpose.msra.mxu0 0.0
    %196 = vmatprep.subr.mxu0 0.0
    %197 = vmatpush1.xpose.msra.mxu0 %v164
    %198 = vmatprep.subr.mxu0 0.0
    %199 = vmatpush2.xpose.msra.mxu0 0.0
    %200 = vmatprep.subr.mxu0 0.0
    %201 = vmatpush2.xpose.msra.mxu0 0.0
    %202 = vmatprep.subr.mxu0 0.0
    %203 = vmatpush2.xpose.msra.mxu0 0.0
    %204 = vmatprep.subr.mxu0 0.0
    %205 = vmatpush2.xpose.msra.mxu0 0.0
    %206 = vmatprep.subr.mxu0 0.0
    %207 = vmatpush2.xpose.msra.mxu0 0.0
    %208 = vmatprep.subr.mxu0 0.0
    %209 = vmatpush2.xpose.msra.mxu0 0.0
    %210 = vmatprep.subr.mxu0 0.0
    %211 = vmatpush2.xpose.msra.mxu0 0.0
    %212 = vmatprep.subr.mxu0 0.0
    %213 = vmatpush2.xpose.msra.mxu0 0.0
    %214 = vmatprep.subr.mxu0 0.0
    %215 = vmatpush2.xpose.msra.mxu0 0.0
    %216 = vmatprep.subr.mxu0 0.0
    %217 = vmatpush2.xpose.msra.mxu0 0.0
    %218 = vmatprep.subr.mxu0 0.0
    %219 = vmatpush2.xpose.msra.mxu0 0.0
    %220 = vmatprep.subr.mxu0 0.0
    %221 = vmatpush2.xpose.msra.mxu0 0.0
    %222 = vmatprep.subr.mxu0 0.0
    %223 = vmatpush2.xpose.msra.mxu0 0.0
    %224 = vmatprep.subr.mxu0 0.0
    %225 = vmatpush2.xpose.msra.mxu0 0.0
    %226 = vmatprep.subr.mxu0 0.0
    %227 = vmatpush2.xpose.msra.mxu0 0.0
    %228 = vmatprep.subr.mxu0 0.0
    %229 = vmatpush2.xpose.msra.mxu0 0.0
    %230 = vmatprep.mubr.f32.mxu0 0.0
    %231 = vmatmul.mubr.f32.gmra.mxu0 %v162
    %v232 = vpop.f32.mrf.mxu0
    %v233 = vadd.f32 0.0, %v232
    %v234 = vpop.f32.mrf.mxu0
    %235 = vdwg.mxu0
    %237 = vrot.lane.b32.xlu0 %v155, 96
    %v238 = vpop.permute.xlu0 %237
    %v239 = vsel %vm161, %v155, 0
    %v241 = vsel %vm161, %v238, 0
    %243 = vmatprep.subr.mxu0 0.0
    %244 = vmatpush1.xpose.msra.mxu0 0.0
    %245 = vmatprep.subr.mxu0 0.0
    %246 = vmatpush1.xpose.msra.mxu0 0.0
    %247 = vmatprep.subr.mxu0 0.0
    %248 = vmatpush1.xpose.msra.mxu0 0.0
    %249 = vmatprep.subr.mxu0 0.0
    %250 = vmatpush1.xpose.msra.mxu0 0.0
    %251 = vmatprep.subr.mxu0 0.0
    %252 = vmatpush1.xpose.msra.mxu0 0.0
    %253 = vmatprep.subr.mxu0 0.0
    %254 = vmatpush1.xpose.msra.mxu0 0.0
    %255 = vmatprep.subr.mxu0 0.0
    %256 = vmatpush1.xpose.msra.mxu0 0.0
    %257 = vmatprep.subr.mxu0 0.0
    %258 = vmatpush1.xpose.msra.mxu0 0.0
    %259 = vmatprep.subr.mxu0 0.0
    %260 = vmatpush1.xpose.msra.mxu0 0.0
    %261 = vmatprep.subr.mxu0 0.0
    %262 = vmatpush1.xpose.msra.mxu0 0.0
    %263 = vmatprep.subr.mxu0 0.0
    %264 = vmatpush1.xpose.msra.mxu0 0.0
    %265 = vmatprep.subr.mxu0 0.0
    %266 = vmatpush1.xpose.msra.mxu0 0.0
    %267 = vmatprep.subr.mxu0 0.0
    %268 = vmatpush1.xpose.msra.mxu0 0.0
    %269 = vmatprep.subr.mxu0 0.0
    %270 = vmatpush1.xpose.msra.mxu0 0.0
    %271 = vmatprep.subr.mxu0 0.0
    %272 = vmatpush1.xpose.msra.mxu0 0.0
    %273 = vmatprep.subr.mxu0 0.0
    %274 = vmatpush1.xpose.msra.mxu0 %v241
    %275 = vmatprep.subr.mxu0 0.0
    %276 = vmatpush2.xpose.msra.mxu0 0.0
    %277 = vmatprep.subr.mxu0 0.0
    %278 = vmatpush2.xpose.msra.mxu0 0.0
    %279 = vmatprep.subr.mxu0 0.0
    %280 = vmatpush2.xpose.msra.mxu0 0.0
    %281 = vmatprep.subr.mxu0 0.0
    %282 = vmatpush2.xpose.msra.mxu0 0.0
    %283 = vmatprep.subr.mxu0 0.0
    %284 = vmatpush2.xpose.msra.mxu0 0.0
    %285 = vmatprep.subr.mxu0 0.0
    %286 = vmatpush2.xpose.msra.mxu0 0.0
    %287 = vmatprep.subr.mxu0 0.0
    %288 = vmatpush2.xpose.msra.mxu0 0.0
    %289 = vmatprep.subr.mxu0 0.0
    %290 = vmatpush2.xpose.msra.mxu0 0.0
    %291 = vmatprep.subr.mxu0 0.0
    %292 = vmatpush2.xpose.msra.mxu0 0.0
    %293 = vmatprep.subr.mxu0 0.0
    %294 = vmatpush2.xpose.msra.mxu0 0.0
    %295 = vmatprep.subr.mxu0 0.0
    %296 = vmatpush2.xpose.msra.mxu0 0.0
    %297 = vmatprep.subr.mxu0 0.0
    %298 = vmatpush2.xpose.msra.mxu0 0.0
    %299 = vmatprep.subr.mxu0 0.0
    %300 = vmatpush2.xpose.msra.mxu0 0.0
    %301 = vmatprep.subr.mxu0 0.0
    %302 = vmatpush2.xpose.msra.mxu0 0.0
    %303 = vmatprep.subr.mxu0 0.0
    %304 = vmatpush2.xpose.msra.mxu0 0.0
    %305 = vmatprep.subr.mxu0 0.0
    %306 = vmatpush2.xpose.msra.mxu0 0.0
    %307 = vmatprep.mubr.f32.mxu0 0.0
    %308 = vmatmul.mubr.f32.gmra.mxu0 %v239
    %v309 = vpop.f32.mrf.mxu0
    %v310 = vadd.f32 0.0, %v309
    %v311 = vpop.f32.mrf.mxu0
    %312 = vdwg.mxu0
    %v313 = vmul.f32 %v233, 0.35355338
    %v314 = vmul.f32 %v310, 0.35355338
    %v315 = vsel %vm161, %v313, -inf
    %316 = vmax.xlane.f32.xlu0 %v315
    %v317 = vpop.xlane.xlu0 %316
    %v318 = vsel %vm161, %v314, -inf
    %319 = vmax.xlane.f32.xlu0 %v318
    %v320 = vpop.xlane.xlu0 %319
    %v321 = vsub.f32 %v313, %v317
    %v322 = vsub.f32 %v314, %v320
    %v323 = vmul.f32 %v321, 1.442695
    %v324 = vpow.pop %v323
    %v325 = vmul.f32 %v322, 1.442695
    %v326 = vpow.pop %v325
    %v327 = vsel %vm161, %v324, 0.0
    %328 = vadd.xlane.f32.xlu0 %v327
    %v329 = vpop.xlane.xlu0 %328
    %v330 = vsel %vm161, %v326, 0.0
    %331 = vadd.xlane.f32.xlu0 %v330
    %v332 = vpop.xlane.xlu0 %331
    %v333 = vrcp.pop %v329
    %v334 = vrcp.pop %v332
    %v335 = vmul.f32 %v324, %v333
    %v336 = vmul.f32 %v326, %v334
    %337 = vrot.lane.b32.xlu0 %v150, 64
    %v338 = vpop.permute.xlu0 %337
    %v341 = vsel %vm161, %v335, 0
    %343 = vmatprep.subr.mxu0 0.0
    %344 = vmatpush1.msra.mxu0 0.0
    %345 = vmatprep.subr.mxu0 0.0
    %346 = vmatpush1.msra.mxu0 0.0
    %347 = vmatprep.subr.mxu0 0.0
    %348 = vmatpush1.msra.mxu0 0.0
    %349 = vmatprep.subr.mxu0 0.0
    %350 = vmatpush1.msra.mxu0 0.0
    %351 = vmatprep.subr.mxu0 0.0
    %352 = vmatpush1.msra.mxu0 0.0
    %353 = vmatprep.subr.mxu0 0.0
    %354 = vmatpush1.msra.mxu0 0.0
    %355 = vmatprep.subr.mxu0 0.0
    %356 = vmatpush1.msra.mxu0 0.0
    %357 = vmatprep.subr.mxu0 0.0
    %358 = vmatpush1.msra.mxu0 0.0
    %359 = vmatprep.subr.mxu0 0.0
    %360 = vmatpush1.msra.mxu0 0.0
    %361 = vmatprep.subr.mxu0 0.0
    %362 = vmatpush1.msra.mxu0 0.0
    %363 = vmatprep.subr.mxu0 0.0
    %364 = vmatpush1.msra.mxu0 0.0
    %365 = vmatprep.subr.mxu0 0.0
    %366 = vmatpush1.msra.mxu0 0.0
    %367 = vmatprep.subr.mxu0 0.0
    %368 = vmatpush1.msra.mxu0 0.0
    %369 = vmatprep.subr.mxu0 0.0
    %370 = vmatpush1.msra.mxu0 0.0
    %371 = vmatprep.subr.mxu0 0.0
    %372 = vmatpush1.msra.mxu0 0.0
    %373 = vmatprep.subr.mxu0 0.0
    %374 = vmatpush1.msra.mxu0 %v338
    %375 = vmatprep.subr.mxu0 0.0
    %376 = vmatpush2.msra.mxu0 0.0
    %377 = vmatprep.subr.mxu0 0.0
    %378 = vmatpush2.msra.mxu0 0.0
    %379 = vmatprep.subr.mxu0 0.0
    %380 = vmatpush2.msra.mxu0 0.0
    %381 = vmatprep.subr.mxu0 0.0
    %382 = vmatpush2.msra.mxu0 0.0
    %383 = vmatprep.subr.mxu0 0.0
    %384 = vmatpush2.msra.mxu0 0.0
    %385 = vmatprep.subr.mxu0 0.0
    %386 = vmatpush2.msra.mxu0 0.0
    %387 = vmatprep.subr.mxu0 0.0
    %388 = vmatpush2.msra.mxu0 0.0
    %389 = vmatprep.subr.mxu0 0.0
    %390 = vmatpush2.msra.mxu0 0.0
    %391 = vmatprep.subr.mxu0 0.0
    %392 = vmatpush2.msra.mxu0 0.0
    %393 = vmatprep.subr.mxu0 0.0
    %394 = vmatpush2.msra.mxu0 0.0
    %395 = vmatprep.subr.mxu0 0.0
    %396 = vmatpush2.msra.mxu0 0.0
    %397 = vmatprep.subr.mxu0 0.0
    %398 = vmatpush2.msra.mxu0 0.0
    %399 = vmatprep.subr.mxu0 0.0
    %400 = vmatpush2.msra.mxu0 0.0
    %401 = vmatprep.subr.mxu0 0.0
    %402 = vmatpush2.msra.mxu0 0.0
    %403 = vmatprep.subr.mxu0 0.0
    %404 = vmatpush2.msra.mxu0 0.0
    %405 = vmatprep.subr.mxu0 0.0
    %406 = vmatpush2.msra.mxu0 0.0
    %407 = vmatprep.mubr.f32.mxu0 0.0
    %408 = vmatmul.mubr.f32.gmra.mxu0 %v341
    %v409 = vpop.f32.mrf.mxu0
    %v410 = vadd.f32 0.0, %v409
    %v411 = vpop.f32.mrf.mxu0
    %412 = vdwg.mxu0
    %413 = vrot.lane.b32.xlu0 %v155, 64
    %v414 = vpop.permute.xlu0 %413
    %v417 = vsel %vm161, %v336, 0
    %419 = vmatprep.subr.mxu0 0.0
    %420 = vmatpush1.msra.mxu0 0.0
    %421 = vmatprep.subr.mxu0 0.0
    %422 = vmatpush1.msra.mxu0 0.0
    %423 = vmatprep.subr.mxu0 0.0
    %424 = vmatpush1.msra.mxu0 0.0
    %425 = vmatprep.subr.mxu0 0.0
    %426 = vmatpush1.msra.mxu0 0.0
    %427 = vmatprep.subr.mxu0 0.0
    %428 = vmatpush1.msra.mxu0 0.0
    %429 = vmatprep.subr.mxu0 0.0
    %430 = vmatpush1.msra.mxu0 0.0
    %431 = vmatprep.subr.mxu0 0.0
    %432 = vmatpush1.msra.mxu0 0.0
    %433 = vmatprep.subr.mxu0 0.0
    %434 = vmatpush1.msra.mxu0 0.0
    %435 = vmatprep.subr.mxu0 0.0
    %436 = vmatpush1.msra.mxu0 0.0
    %437 = vmatprep.subr.mxu0 0.0
    %438 = vmatpush1.msra.mxu0 0.0
    %439 = vmatprep.subr.mxu0 0.0
    %440 = vmatpush1.msra.mxu0 0.0
    %441 = vmatprep.subr.mxu0 0.0
    %442 = vmatpush1.msra.mxu0 0.0
    %443 = vmatprep.subr.mxu0 0.0
    %444 = vmatpush1.msra.mxu0 0.0
    %445 = vmatprep.subr.mxu0 0.0
    %446 = vmatpush1.msra.mxu0 0.0
    %447 = vmatprep.subr.mxu0 0.0
    %448 = vmatpush1.msra.mxu0 0.0
    %449 = vmatprep.subr.mxu0 0.0
    %450 = vmatpush1.msra.mxu0 %v414
    %451 = vmatprep.subr.mxu0 0.0
    %452 = vmatpush2.msra.mxu0 0.0
    %453 = vmatprep.subr.mxu0 0.0
    %454 = vmatpush2.msra.mxu0 0.0
    %455 = vmatprep.subr.mxu0 0.0
    %456 = vmatpush2.msra.mxu0 0.0
    %457 = vmatprep.subr.mxu0 0.0
    %458 = vmatpush2.msra.mxu0 0.0
    %459 = vmatprep.subr.mxu0 0.0
    %460 = vmatpush2.msra.mxu0 0.0
    %461 = vmatprep.subr.mxu0 0.0
    %462 = vmatpush2.msra.mxu0 0.0
    %463 = vmatprep.subr.mxu0 0.0
    %464 = vmatpush2.msra.mxu0 0.0
    %465 = vmatprep.subr.mxu0 0.0
    %466 = vmatpush2.msra.mxu0 0.0
    %467 = vmatprep.subr.mxu0 0.0
    %468 = vmatpush2.msra.mxu0 0.0
    %469 = vmatprep.subr.mxu0 0.0
    %470 = vmatpush2.msra.mxu0 0.0
    %471 = vmatprep.subr.mxu0 0.0
    %472 = vmatpush2.msra.mxu0 0.0
    %473 = vmatprep.subr.mxu0 0.0
    %474 = vmatpush2.msra.mxu0 0.0
    %475 = vmatprep.subr.mxu0 0.0
    %476 = vmatpush2.msra.mxu0 0.0
    %477 = vmatprep.subr.mxu0 0.0
    %478 = vmatpush2.msra.mxu0 0.0
    %479 = vmatprep.subr.mxu0 0.0
    %480 = vmatpush2.msra.mxu0 0.0
    %481 = vmatprep.subr.mxu0 0.0
    %482 = vmatpush2.msra.mxu0 0.0
    %483 = vmatprep.mubr.f32.mxu0 0.0
    %484 = vmatmul.mubr.f32.gmra.mxu0 %v417
    %v485 = vpop.f32.mrf.mxu0
    %v486 = vadd.f32 0.0, %v485
    %v487 = vpop.f32.mrf.mxu0
    %488 = vdwg.mxu0
    %489 = vrot.lane.b32.xlu0 %v150, 120
    %v490 = vpop.permute.xlu0 %489
    %491 = vrot.lane.b32.xlu0 %v150, 88
    %v492 = vpop.permute.xlu0 %491
    %v493 = vsel %vm161, %v490, 0
    %v495 = vsel %vm161, %v492, 0
    %497 = vmatprep.subr.mxu0 0.0
    %498 = vmatpush1.xpose.msra.mxu0 0.0
    %499 = vmatprep.subr.mxu0 0.0
    %500 = vmatpush1.xpose.msra.mxu0 0.0
    %501 = vmatprep.subr.mxu0 0.0
    %502 = vmatpush1.xpose.msra.mxu0 0.0
    %503 = vmatprep.subr.mxu0 0.0
    %504 = vmatpush1.xpose.msra.mxu0 0.0
    %505 = vmatprep.subr.mxu0 0.0
    %506 = vmatpush1.xpose.msra.mxu0 0.0
    %507 = vmatprep.subr.mxu0 0.0
    %508 = vmatpush1.xpose.msra.mxu0 0.0
    %509 = vmatprep.subr.mxu0 0.0
    %510 = vmatpush1.xpose.msra.mxu0 0.0
    %511 = vmatprep.subr.mxu0 0.0
    %512 = vmatpush1.xpose.msra.mxu0 0.0
    %513 = vmatprep.subr.mxu0 0.0
    %514 = vmatpush1.xpose.msra.mxu0 0.0
    %515 = vmatprep.subr.mxu0 0.0
    %516 = vmatpush1.xpose.msra.mxu0 0.0
    %517 = vmatprep.subr.mxu0 0.0
    %518 = vmatpush1.xpose.msra.mxu0 0.0
    %519 = vmatprep.subr.mxu0 0.0
    %520 = vmatpush1.xpose.msra.mxu0 0.0
    %521 = vmatprep.subr.mxu0 0.0
    %522 = vmatpush1.xpose.msra.mxu0 0.0
    %523 = vmatprep.subr.mxu0 0.0
    %524 = vmatpush1.xpose.msra.mxu0 0.0
    %525 = vmatprep.subr.mxu0 0.0
    %526 = vmatpush1.xpose.msra.mxu0 0.0
    %527 = vmatprep.subr.mxu0 0.0
    %528 = vmatpush1.xpose.msra.mxu0 %v495
    %529 = vmatprep.subr.mxu0 0.0
    %530 = vmatpush2.xpose.msra.mxu0 0.0
    %531 = vmatprep.subr.mxu0 0.0
    %532 = vmatpush2.xpose.msra.mxu0 0.0
    %533 = vmatprep.subr.mxu0 0.0
    %534 = vmatpush2.xpose.msra.mxu0 0.0
    %535 = vmatprep.subr.mxu0 0.0
    %536 = vmatpush2.xpose.msra.mxu0 0.0
    %537 = vmatprep.subr.mxu0 0.0
    %538 = vmatpush2.xpose.msra.mxu0 0.0
    %539 = vmatprep.subr.mxu0 0.0
    %540 = vmatpush2.xpose.msra.mxu0 0.0
    %541 = vmatprep.subr.mxu0 0.0
    %542 = vmatpush2.xpose.msra.mxu0 0.0
    %543 = vmatprep.subr.mxu0 0.0
    %544 = vmatpush2.xpose.msra.mxu0 0.0
    %545 = vmatprep.subr.mxu0 0.0
    %546 = vmatpush2.xpose.msra.mxu0 0.0
    %547 = vmatprep.subr.mxu0 0.0
    %548 = vmatpush2.xpose.msra.mxu0 0.0
    %549 = vmatprep.subr.mxu0 0.0
    %550 = vmatpush2.xpose.msra.mxu0 0.0
    %551 = vmatprep.subr.mxu0 0.0
    %552 = vmatpush2.xpose.msra.mxu0 0.0
    %553 = vmatprep.subr.mxu0 0.0
    %554 = vmatpush2.xpose.msra.mxu0 0.0
    %555 = vmatprep.subr.mxu0 0.0
    %556 = vmatpush2.xpose.msra.mxu0 0.0
    %557 = vmatprep.subr.mxu0 0.0
    %558 = vmatpush2.xpose.msra.mxu0 0.0
    %559 = vmatprep.subr.mxu0 0.0
    %560 = vmatpush2.xpose.msra.mxu0 0.0
    %561 = vmatprep.mubr.f32.mxu0 0.0
    %562 = vmatmul.mubr.f32.gmra.mxu0 %v493
    %v563 = vpop.f32.mrf.mxu0
    %v564 = vadd.f32 0.0, %v563
    %v565 = vpop.f32.mrf.mxu0
    %566 = vdwg.mxu0
    %567 = vrot.lane.b32.xlu0 %v155, 120
    %v568 = vpop.permute.xlu0 %567
    %569 = vrot.lane.b32.xlu0 %v155, 88
    %v570 = vpop.permute.xlu0 %569
    %v571 = vsel %vm161, %v568, 0
    %v573 = vsel %vm161, %v570, 0
    %575 = vmatprep.subr.mxu0 0.0
    %576 = vmatpush1.xpose.msra.mxu0 0.0
    %577 = vmatprep.subr.mxu0 0.0
    %578 = vmatpush1.xpose.msra.mxu0 0.0
    %579 = vmatprep.subr.mxu0 0.0
    %580 = vmatpush1.xpose.msra.mxu0 0.0
    %581 = vmatprep.subr.mxu0 0.0
    %582 = vmatpush1.xpose.msra.mxu0 0.0
    %583 = vmatprep.subr.mxu0 0.0
    %584 = vmatpush1.xpose.msra.mxu0 0.0
    %585 = vmatprep.subr.mxu0 0.0
    %586 = vmatpush1.xpose.msra.mxu0 0.0
    %587 = vmatprep.subr.mxu0 0.0
    %588 = vmatpush1.xpose.msra.mxu0 0.0
    %589 = vmatprep.subr.mxu0 0.0
    %590 = vmatpush1.xpose.msra.mxu0 0.0
    %591 = vmatprep.subr.mxu0 0.0
    %592 = vmatpush1.xpose.msra.mxu0 0.0
    %593 = vmatprep.subr.mxu0 0.0
    %594 = vmatpush1.xpose.msra.mxu0 0.0
    %595 = vmatprep.subr.mxu0 0.0
    %596 = vmatpush1.xpose.msra.mxu0 0.0
    %597 = vmatprep.subr.mxu0 0.0
    %598 = vmatpush1.xpose.msra.mxu0 0.0
    %599 = vmatprep.subr.mxu0 0.0
    %600 = vmatpush1.xpose.msra.mxu0 0.0
    %601 = vmatprep.subr.mxu0 0.0
    %602 = vmatpush1.xpose.msra.mxu0 0.0
    %603 = vmatprep.subr.mxu0 0.0
    %604 = vmatpush1.xpose.msra.mxu0 0.0
    %605 = vmatprep.subr.mxu0 0.0
    %606 = vmatpush1.xpose.msra.mxu0 %v573
    %607 = vmatprep.subr.mxu0 0.0
    %608 = vmatpush2.xpose.msra.mxu0 0.0
    %609 = vmatprep.subr.mxu0 0.0
    %610 = vmatpush2.xpose.msra.mxu0 0.0
    %611 = vmatprep.subr.mxu0 0.0
    %612 = vmatpush2.xpose.msra.mxu0 0.0
    %613 = vmatprep.subr.mxu0 0.0
    %614 = vmatpush2.xpose.msra.mxu0 0.0
    %615 = vmatprep.subr.mxu0 0.0
    %616 = vmatpush2.xpose.msra.mxu0 0.0
    %617 = vmatprep.subr.mxu0 0.0
    %618 = vmatpush2.xpose.msra.mxu0 0.0
    %619 = vmatprep.subr.mxu0 0.0
    %620 = vmatpush2.xpose.msra.mxu0 0.0
    %621 = vmatprep.subr.mxu0 0.0
    %622 = vmatpush2.xpose.msra.mxu0 0.0
    %623 = vmatprep.subr.mxu0 0.0
    %624 = vmatpush2.xpose.msra.mxu0 0.0
    %625 = vmatprep.subr.mxu0 0.0
    %626 = vmatpush2.xpose.msra.mxu0 0.0
    %627 = vmatprep.subr.mxu0 0.0
    %628 = vmatpush2.xpose.msra.mxu0 0.0
    %629 = vmatprep.subr.mxu0 0.0
    %630 = vmatpush2.xpose.msra.mxu0 0.0
    %631 = vmatprep.subr.mxu0 0.0
    %632 = vmatpush2.xpose.msra.mxu0 0.0
    %633 = vmatprep.subr.mxu0 0.0
    %634 = vmatpush2.xpose.msra.mxu0 0.0
    %635 = vmatprep.subr.mxu0 0.0
    %636 = vmatpush2.xpose.msra.mxu0 0.0
    %637 = vmatprep.subr.mxu0 0.0
    %638 = vmatpush2.xpose.msra.mxu0 0.0
    %639 = vmatprep.mubr.f32.mxu0 0.0
    %640 = vmatmul.mubr.f32.gmra.mxu0 %v571
    %v641 = vpop.f32.mrf.mxu0
    %v642 = vadd.f32 0.0, %v641
    %v643 = vpop.f32.mrf.mxu0
    %644 = vdwg.mxu0
    %v645 = vmul.f32 %v564, 0.35355338
    %v646 = vmul.f32 %v642, 0.35355338
    %v647 = vsel %vm161, %v645, -inf
    %648 = vmax.xlane.f32.xlu0 %v647
    %v649 = vpop.xlane.xlu0 %648
    %v650 = vsel %vm161, %v646, -inf
    %651 = vmax.xlane.f32.xlu0 %v650
    %v652 = vpop.xlane.xlu0 %651
    %v653 = vsub.f32 %v645, %v649
    %v654 = vsub.f32 %v646, %v652
    %v655 = vmul.f32 %v653, 1.442695
    %v656 = vpow.pop %v655
    %v657 = vmul.f32 %v654, 1.442695
    %v658 = vpow.pop %v657
    %v659 = vsel %vm161, %v656, 0.0
    %660 = vadd.xlane.f32.xlu0 %v659
    %v661 = vpop.xlane.xlu0 %660
    %v662 = vsel %vm161, %v658, 0.0
    %663 = vadd.xlane.f32.xlu0 %v662
    %v664 = vpop.xlane.xlu0 %663
    %v665 = vrcp.pop %v661
    %v666 = vrcp.pop %v664
    %v667 = vmul.f32 %v656, %v665
    %v668 = vmul.f32 %v658, %v666
    %669 = vrot.lane.b32.xlu0 %v150, 56
    %v670 = vpop.permute.xlu0 %669
    %v673 = vsel %vm161, %v667, 0
    %675 = vmatprep.subr.mxu0 0.0
    %676 = vmatpush1.msra.mxu0 0.0
    %677 = vmatprep.subr.mxu0 0.0
    %678 = vmatpush1.msra.mxu0 0.0
    %679 = vmatprep.subr.mxu0 0.0
    %680 = vmatpush1.msra.mxu0 0.0
    %681 = vmatprep.subr.mxu0 0.0
    %682 = vmatpush1.msra.mxu0 0.0
    %683 = vmatprep.subr.mxu0 0.0
    %684 = vmatpush1.msra.mxu0 0.0
    %685 = vmatprep.subr.mxu0 0.0
    %686 = vmatpush1.msra.mxu0 0.0
    %687 = vmatprep.subr.mxu0 0.0
    %688 = vmatpush1.msra.mxu0 0.0
    %689 = vmatprep.subr.mxu0 0.0
    %690 = vmatpush1.msra.mxu0 0.0
    %691 = vmatprep.subr.mxu0 0.0
    %692 = vmatpush1.msra.mxu0 0.0
    %693 = vmatprep.subr.mxu0 0.0
    %694 = vmatpush1.msra.mxu0 0.0
    %695 = vmatprep.subr.mxu0 0.0
    %696 = vmatpush1.msra.mxu0 0.0
    %697 = vmatprep.subr.mxu0 0.0
    %698 = vmatpush1.msra.mxu0 0.0
    %699 = vmatprep.subr.mxu0 0.0
    %700 = vmatpush1.msra.mxu0 0.0
    %701 = vmatprep.subr.mxu0 0.0
    %702 = vmatpush1.msra.mxu0 0.0
    %703 = vmatprep.subr.mxu0 0.0
    %704 = vmatpush1.msra.mxu0 0.0
    %705 = vmatprep.subr.mxu0 0.0
    %706 = vmatpush1.msra.mxu0 %v670
    %707 = vmatprep.subr.mxu0 0.0
    %708 = vmatpush2.msra.mxu0 0.0
    %709 = vmatprep.subr.mxu0 0.0
    %710 = vmatpush2.msra.mxu0 0.0
    %711 = vmatprep.subr.mxu0 0.0
    %712 = vmatpush2.msra.mxu0 0.0
    %713 = vmatprep.subr.mxu0 0.0
    %714 = vmatpush2.msra.mxu0 0.0
    %715 = vmatprep.subr.mxu0 0.0
    %716 = vmatpush2.msra.mxu0 0.0
    %717 = vmatprep.subr.mxu0 0.0
    %718 = vmatpush2.msra.mxu0 0.0
    %719 = vmatprep.subr.mxu0 0.0
    %720 = vmatpush2.msra.mxu0 0.0
    %721 = vmatprep.subr.mxu0 0.0
    %722 = vmatpush2.msra.mxu0 0.0
    %723 = vmatprep.subr.mxu0 0.0
    %724 = vmatpush2.msra.mxu0 0.0
    %725 = vmatprep.subr.mxu0 0.0
    %726 = vmatpush2.msra.mxu0 0.0
    %727 = vmatprep.subr.mxu0 0.0
    %728 = vmatpush2.msra.mxu0 0.0
    %729 = vmatprep.subr.mxu0 0.0
    %730 = vmatpush2.msra.mxu0 0.0
    %731 = vmatprep.subr.mxu0 0.0
    %732 = vmatpush2.msra.mxu0 0.0
    %733 = vmatprep.subr.mxu0 0.0
    %734 = vmatpush2.msra.mxu0 0.0
    %735 = vmatprep.subr.mxu0 0.0
    %736 = vmatpush2.msra.mxu0 0.0
    %737 = vmatprep.subr.mxu0 0.0
    %738 = vmatpush2.msra.mxu0 0.0
    %739 = vmatprep.mubr.f32.mxu0 0.0
    %740 = vmatmul.mubr.f32.gmra.mxu0 %v673
    %v741 = vpop.f32.mrf.mxu0
    %v742 = vadd.f32 0.0, %v741
    %v743 = vpop.f32.mrf.mxu0
    %744 = vdwg.mxu0
    %745 = vrot.lane.b32.xlu0 %v155, 56
    %v746 = vpop.permute.xlu0 %745
    %v749 = vsel %vm161, %v668, 0
    %751 = vmatprep.subr.mxu0 0.0
    %752 = vmatpush1.msra.mxu0 0.0
    %753 = vmatprep.subr.mxu0 0.0
    %754 = vmatpush1.msra.mxu0 0.0
    %755 = vmatprep.subr.mxu0 0.0
    %756 = vmatpush1.msra.mxu0 0.0
    %757 = vmatprep.subr.mxu0 0.0
    %758 = vmatpush1.msra.mxu0 0.0
    %759 = vmatprep.subr.mxu0 0.0
    %760 = vmatpush1.msra.mxu0 0.0
    %761 = vmatprep.subr.mxu0 0.0
    %762 = vmatpush1.msra.mxu0 0.0
    %763 = vmatprep.subr.mxu0 0.0
    %764 = vmatpush1.msra.mxu0 0.0
    %765 = vmatprep.subr.mxu0 0.0
    %766 = vmatpush1.msra.mxu0 0.0
    %767 = vmatprep.subr.mxu0 0.0
    %768 = vmatpush1.msra.mxu0 0.0
    %769 = vmatprep.subr.mxu0 0.0
    %770 = vmatpush1.msra.mxu0 0.0
    %771 = vmatprep.subr.mxu0 0.0
    %772 = vmatpush1.msra.mxu0 0.0
    %773 = vmatprep.subr.mxu0 0.0
    %774 = vmatpush1.msra.mxu0 0.0
    %775 = vmatprep.subr.mxu0 0.0
    %776 = vmatpush1.msra.mxu0 0.0
    %777 = vmatprep.subr.mxu0 0.0
    %778 = vmatpush1.msra.mxu0 0.0
    %779 = vmatprep.subr.mxu0 0.0
    %780 = vmatpush1.msra.mxu0 0.0
    %781 = vmatprep.subr.mxu0 0.0
    %782 = vmatpush1.msra.mxu0 %v746
    %783 = vmatprep.subr.mxu0 0.0
    %784 = vmatpush2.msra.mxu0 0.0
    %785 = vmatprep.subr.mxu0 0.0
    %786 = vmatpush2.msra.mxu0 0.0
    %787 = vmatprep.subr.mxu0 0.0
    %788 = vmatpush2.msra.mxu0 0.0
    %789 = vmatprep.subr.mxu0 0.0
    %790 = vmatpush2.msra.mxu0 0.0
    %791 = vmatprep.subr.mxu0 0.0
    %792 = vmatpush2.msra.mxu0 0.0
    %793 = vmatprep.subr.mxu0 0.0
    %794 = vmatpush2.msra.mxu0 0.0
    %795 = vmatprep.subr.mxu0 0.0
    %796 = vmatpush2.msra.mxu0 0.0
    %797 = vmatprep.subr.mxu0 0.0
    %798 = vmatpush2.msra.mxu0 0.0
    %799 = vmatprep.subr.mxu0 0.0
    %800 = vmatpush2.msra.mxu0 0.0
    %801 = vmatprep.subr.mxu0 0.0
    %802 = vmatpush2.msra.mxu0 0.0
    %803 = vmatprep.subr.mxu0 0.0
    %804 = vmatpush2.msra.mxu0 0.0
    %805 = vmatprep.subr.mxu0 0.0
    %806 = vmatpush2.msra.mxu0 0.0
    %807 = vmatprep.subr.mxu0 0.0
    %808 = vmatpush2.msra.mxu0 0.0
    %809 = vmatprep.subr.mxu0 0.0
    %810 = vmatpush2.msra.mxu0 0.0
    %811 = vmatprep.subr.mxu0 0.0
    %812 = vmatpush2.msra.mxu0 0.0
    %813 = vmatprep.subr.mxu0 0.0
    %814 = vmatpush2.msra.mxu0 0.0
    %815 = vmatprep.mubr.f32.mxu0 0.0
    %816 = vmatmul.mubr.f32.gmra.mxu0 %v749
    %v817 = vpop.f32.mrf.mxu0
    %v818 = vadd.f32 0.0, %v817
    %v819 = vpop.f32.mrf.mxu0
    %820 = vdwg.mxu0
    %v822 = vsel %vm161, %v742, 0
    %v825 = vsel %vm161, %v818, 0
    %827 = vmatprep.subr.mxu0 0.0
    %828 = vmatpush1.msra.mxu0 0.0
    %829 = vmatprep.subr.mxu0 0.0
    %830 = vmatpush1.msra.mxu0 0.0
    %831 = vmatprep.subr.mxu0 0.0
    %832 = vmatpush1.msra.mxu0 0.0
    %833 = vmatprep.subr.mxu0 0.0
    %834 = vmatpush1.msra.mxu0 0.0
    %835 = vmatprep.subr.mxu0 0.0
    %836 = vmatpush1.msra.mxu0 0.0
    %837 = vmatprep.subr.mxu0 0.0
    %838 = vmatpush1.msra.mxu0 0.0
    %839 = vmatprep.subr.mxu0 0.0
    %840 = vmatpush1.msra.mxu0 0.0
    %841 = vmatprep.subr.mxu0 0.0
    %842 = vmatpush1.msra.mxu0 0.0
    %843 = vmatprep.subr.mxu0 0.0
    %844 = vmatpush1.msra.mxu0 0.0
    %845 = vmatprep.subr.mxu0 0.0
    %846 = vmatpush1.msra.mxu0 0.0
    %847 = vmatprep.subr.mxu0 0.0
    %848 = vmatpush1.msra.mxu0 0.0
    %849 = vmatprep.subr.mxu0 0.0
    %850 = vmatpush1.msra.mxu0 0.0
    %851 = vmatprep.subr.mxu0 0.0
    %852 = vmatpush1.msra.mxu0 0.0
    %853 = vmatprep.subr.mxu0 0.0
    %854 = vmatpush1.msra.mxu0 0.0
    %855 = vmatprep.subr.mxu0 0.0
    %856 = vmatpush1.msra.mxu0 0.0
    %857 = vmatprep.subr.mxu0 0.0
    %858 = vmatpush1.msra.mxu0 %v66
    %859 = vmatprep.subr.mxu0 0.0
    %860 = vmatpush2.msra.mxu0 0.0
    %861 = vmatprep.subr.mxu0 0.0
    %862 = vmatpush2.msra.mxu0 0.0
    %863 = vmatprep.subr.mxu0 0.0
    %864 = vmatpush2.msra.mxu0 0.0
    %865 = vmatprep.subr.mxu0 0.0
    %866 = vmatpush2.msra.mxu0 0.0
    %867 = vmatprep.subr.mxu0 0.0
    %868 = vmatpush2.msra.mxu0 0.0
    %869 = vmatprep.subr.mxu0 0.0
    %870 = vmatpush2.msra.mxu0 0.0
    %871 = vmatprep.subr.mxu0 0.0
    %872 = vmatpush2.msra.mxu0 0.0
    %873 = vmatprep.subr.mxu0 0.0
    %874 = vmatpush2.msra.mxu0 0.0
    %875 = vmatprep.subr.mxu0 0.0
    %876 = vmatpush2.msra.mxu0 0.0
    %877 = vmatprep.subr.mxu0 0.0
    %878 = vmatpush2.msra.mxu0 0.0
    %879 = vmatprep.subr.mxu0 0.0
    %880 = vmatpush2.msra.mxu0 0.0
    %881 = vmatprep.subr.mxu0 0.0
    %882 = vmatpush2.msra.mxu0 0.0
    %883 = vmatprep.subr.mxu0 0.0
    %884 = vmatpush2.msra.mxu0 0.0
    %885 = vmatprep.subr.mxu0 0.0
    %886 = vmatpush2.msra.mxu0 0.0
    %887 = vmatprep.subr.mxu0 0.0
    %888 = vmatpush2.msra.mxu0 0.0
    %889 = vmatprep.subr.mxu0 0.0
    %890 = vmatpush2.msra.mxu0 0.0
    %891 = vmatprep.mubr.f32.mxu0 0.0
    %892 = vmatmul.mubr.f32.gmra.mxu0 %v822
    %v893 = vpop.f32.mrf.mxu0
    %v894 = vadd.f32 0.0, %v893
    %v895 = vpop.f32.mrf.mxu0
    %896 = vmatprep.mubr.f32.mxu0 0.0
    %897 = vmatmul.mubr.f32.gmra.mxu0 %v825
    %v898 = vpop.f32.mrf.mxu0
    %v899 = vadd.f32 0.0, %v898
    %v900 = vpop.f32.mrf.mxu0
    %901 = vdwg.mxu0
    %v903 = vsel %vm161, %v410, 0
    %v906 = vsel %vm161, %v486, 0
    %908 = vmatprep.subr.mxu0 0.0
    %909 = vmatpush1.msra.mxu0 0.0
    %910 = vmatprep.subr.mxu0 0.0
    %911 = vmatpush1.msra.mxu0 0.0
    %912 = vmatprep.subr.mxu0 0.0
    %913 = vmatpush1.msra.mxu0 0.0
    %914 = vmatprep.subr.mxu0 0.0
    %915 = vmatpush1.msra.mxu0 0.0
    %916 = vmatprep.subr.mxu0 0.0
    %917 = vmatpush1.msra.mxu0 0.0
    %918 = vmatprep.subr.mxu0 0.0
    %919 = vmatpush1.msra.mxu0 0.0
    %920 = vmatprep.subr.mxu0 0.0
    %921 = vmatpush1.msra.mxu0 0.0
    %922 = vmatprep.subr.mxu0 0.0
    %923 = vmatpush1.msra.mxu0 0.0
    %924 = vmatprep.subr.mxu0 0.0
    %925 = vmatpush1.msra.mxu0 0.0
    %926 = vmatprep.subr.mxu0 0.0
    %927 = vmatpush1.msra.mxu0 0.0
    %928 = vmatprep.subr.mxu0 0.0
    %929 = vmatpush1.msra.mxu0 0.0
    %930 = vmatprep.subr.mxu0 0.0
    %931 = vmatpush1.msra.mxu0 0.0
    %932 = vmatprep.subr.mxu0 0.0
    %933 = vmatpush1.msra.mxu0 0.0
    %934 = vmatprep.subr.mxu0 0.0
    %935 = vmatpush1.msra.mxu0 0.0
    %936 = vmatprep.subr.mxu0 0.0
    %937 = vmatpush1.msra.mxu0 0.0
    %938 = vmatprep.subr.mxu0 0.0
    %939 = vmatpush1.msra.mxu0 %v65
    %940 = vmatprep.subr.mxu0 0.0
    %941 = vmatpush2.msra.mxu0 0.0
    %942 = vmatprep.subr.mxu0 0.0
    %943 = vmatpush2.msra.mxu0 0.0
    %944 = vmatprep.subr.mxu0 0.0
    %945 = vmatpush2.msra.mxu0 0.0
    %946 = vmatprep.subr.mxu0 0.0
    %947 = vmatpush2.msra.mxu0 0.0
    %948 = vmatprep.subr.mxu0 0.0
    %949 = vmatpush2.msra.mxu0 0.0
    %950 = vmatprep.subr.mxu0 0.0
    %951 = vmatpush2.msra.mxu0 0.0
    %952 = vmatprep.subr.mxu0 0.0
    %953 = vmatpush2.msra.mxu0 0.0
    %954 = vmatprep.subr.mxu0 0.0
    %955 = vmatpush2.msra.mxu0 0.0
    %956 = vmatprep.subr.mxu0 0.0
    %957 = vmatpush2.msra.mxu0 0.0
    %958 = vmatprep.subr.mxu0 0.0
    %959 = vmatpush2.msra.mxu0 0.0
    %960 = vmatprep.subr.mxu0 0.0
    %961 = vmatpush2.msra.mxu0 0.0
    %962 = vmatprep.subr.mxu0 0.0
    %963 = vmatpush2.msra.mxu0 0.0
    %964 = vmatprep.subr.mxu0 0.0
    %965 = vmatpush2.msra.mxu0 0.0
    %966 = vmatprep.subr.mxu0 0.0
    %967 = vmatpush2.msra.mxu0 0.0
    %968 = vmatprep.subr.mxu0 0.0
    %969 = vmatpush2.msra.mxu0 0.0
    %970 = vmatprep.subr.mxu0 0.0
    %971 = vmatpush2.msra.mxu0 0.0
    %972 = vmatprep.mubr.f32.mxu0 0.0
    %973 = vmatmul.mubr.f32.gmra.mxu0 %v903
    %v974 = vpop.f32.mrf.mxu0
    %v975 = vadd.f32 %v894, %v974
    %v976 = vpop.f32.mrf.mxu0
    %977 = vmatprep.mubr.f32.mxu0 0.0
    %978 = vmatmul.mubr.f32.gmra.mxu0 %v906
    %v979 = vpop.f32.mrf.mxu0
    %v980 = vadd.f32 %v899, %v979
    %v981 = vpop.f32.mrf.mxu0
    %982 = vdwg.mxu0
    %983 = vrot.lane.b32.xlu0 %v150, 112
    %v984 = vpop.permute.xlu0 %983
    %985 = vrot.lane.b32.xlu0 %v150, 80
    %v986 = vpop.permute.xlu0 %985
    %v987 = vsel %vm161, %v984, 0
    %v989 = vsel %vm161, %v986, 0
    %991 = vmatprep.subr.mxu0 0.0
    %992 = vmatpush1.xpose.msra.mxu0 0.0
    %993 = vmatprep.subr.mxu0 0.0
    %994 = vmatpush1.xpose.msra.mxu0 0.0
    %995 = vmatprep.subr.mxu0 0.0
    %996 = vmatpush1.xpose.msra.mxu0 0.0
    %997 = vmatprep.subr.mxu0 0.0
    %998 = vmatpush1.xpose.msra.mxu0 0.0
    %999 = vmatprep.subr.mxu0 0.0
    %1000 = vmatpush1.xpose.msra.mxu0 0.0
    %1001 = vmatprep.subr.mxu0 0.0
    %1002 = vmatpush1.xpose.msra.mxu0 0.0
    %1003 = vmatprep.subr.mxu0 0.0
    %1004 = vmatpush1.xpose.msra.mxu0 0.0
    %1005 = vmatprep.subr.mxu0 0.0
    %1006 = vmatpush1.xpose.msra.mxu0 0.0
    %1007 = vmatprep.subr.mxu0 0.0
    %1008 = vmatpush1.xpose.msra.mxu0 0.0
    %1009 = vmatprep.subr.mxu0 0.0
    %1010 = vmatpush1.xpose.msra.mxu0 0.0
    %1011 = vmatprep.subr.mxu0 0.0
    %1012 = vmatpush1.xpose.msra.mxu0 0.0
    %1013 = vmatprep.subr.mxu0 0.0
    %1014 = vmatpush1.xpose.msra.mxu0 0.0
    %1015 = vmatprep.subr.mxu0 0.0
    %1016 = vmatpush1.xpose.msra.mxu0 0.0
    %1017 = vmatprep.subr.mxu0 0.0
    %1018 = vmatpush1.xpose.msra.mxu0 0.0
    %1019 = vmatprep.subr.mxu0 0.0
    %1020 = vmatpush1.xpose.msra.mxu0 0.0
    %1021 = vmatprep.subr.mxu0 0.0
    %1022 = vmatpush1.xpose.msra.mxu0 %v989
    %1023 = vmatprep.subr.mxu0 0.0
    %1024 = vmatpush2.xpose.msra.mxu0 0.0
    %1025 = vmatprep.subr.mxu0 0.0
    %1026 = vmatpush2.xpose.msra.mxu0 0.0
    %1027 = vmatprep.subr.mxu0 0.0
    %1028 = vmatpush2.xpose.msra.mxu0 0.0
    %1029 = vmatprep.subr.mxu0 0.0
    %1030 = vmatpush2.xpose.msra.mxu0 0.0
    %1031 = vmatprep.subr.mxu0 0.0
    %1032 = vmatpush2.xpose.msra.mxu0 0.0
    %1033 = vmatprep.subr.mxu0 0.0
    %1034 = vmatpush2.xpose.msra.mxu0 0.0
    %1035 = vmatprep.subr.mxu0 0.0
    %1036 = vmatpush2.xpose.msra.mxu0 0.0
    %1037 = vmatprep.subr.mxu0 0.0
    %1038 = vmatpush2.xpose.msra.mxu0 0.0
    %1039 = vmatprep.subr.mxu0 0.0
    %1040 = vmatpush2.xpose.msra.mxu0 0.0
    %1041 = vmatprep.subr.mxu0 0.0
    %1042 = vmatpush2.xpose.msra.mxu0 0.0
    %1043 = vmatprep.subr.mxu0 0.0
    %1044 = vmatpush2.xpose.msra.mxu0 0.0
    %1045 = vmatprep.subr.mxu0 0.0
    %1046 = vmatpush2.xpose.msra.mxu0 0.0
    %1047 = vmatprep.subr.mxu0 0.0
    %1048 = vmatpush2.xpose.msra.mxu0 0.0
    %1049 = vmatprep.subr.mxu0 0.0
    %1050 = vmatpush2.xpose.msra.mxu0 0.0
    %1051 = vmatprep.subr.mxu0 0.0
    %1052 = vmatpush2.xpose.msra.mxu0 0.0
    %1053 = vmatprep.subr.mxu0 0.0
    %1054 = vmatpush2.xpose.msra.mxu0 0.0
    %1055 = vmatprep.mubr.f32.mxu0 0.0
    %1056 = vmatmul.mubr.f32.gmra.mxu0 %v987
    %v1057 = vpop.f32.mrf.mxu0
    %v1058 = vadd.f32 0.0, %v1057
    %v1059 = vpop.f32.mrf.mxu0
    %1060 = vdwg.mxu0
    %1061 = vrot.lane.b32.xlu0 %v155, 112
    %v1062 = vpop.permute.xlu0 %1061
    %1063 = vrot.lane.b32.xlu0 %v155, 80
    %v1064 = vpop.permute.xlu0 %1063
    %v1065 = vsel %vm161, %v1062, 0
    %v1067 = vsel %vm161, %v1064, 0
    %1069 = vmatprep.subr.mxu0 0.0
    %1070 = vmatpush1.xpose.msra.mxu0 0.0
    %1071 = vmatprep.subr.mxu0 0.0
    %1072 = vmatpush1.xpose.msra.mxu0 0.0
    %1073 = vmatprep.subr.mxu0 0.0
    %1074 = vmatpush1.xpose.msra.mxu0 0.0
    %1075 = vmatprep.subr.mxu0 0.0
    %1076 = vmatpush1.xpose.msra.mxu0 0.0
    %1077 = vmatprep.subr.mxu0 0.0
    %1078 = vmatpush1.xpose.msra.mxu0 0.0
    %1079 = vmatprep.subr.mxu0 0.0
    %1080 = vmatpush1.xpose.msra.mxu0 0.0
    %1081 = vmatprep.subr.mxu0 0.0
    %1082 = vmatpush1.xpose.msra.mxu0 0.0
    %1083 = vmatprep.subr.mxu0 0.0
    %1084 = vmatpush1.xpose.msra.mxu0 0.0
    %1085 = vmatprep.subr.mxu0 0.0
    %1086 = vmatpush1.xpose.msra.mxu0 0.0
    %1087 = vmatprep.subr.mxu0 0.0
    %1088 = vmatpush1.xpose.msra.mxu0 0.0
    %1089 = vmatprep.subr.mxu0 0.0
    %1090 = vmatpush1.xpose.msra.mxu0 0.0
    %1091 = vmatprep.subr.mxu0 0.0
    %1092 = vmatpush1.xpose.msra.mxu0 0.0
    %1093 = vmatprep.subr.mxu0 0.0
    %1094 = vmatpush1.xpose.msra.mxu0 0.0
    %1095 = vmatprep.subr.mxu0 0.0
    %1096 = vmatpush1.xpose.msra.mxu0 0.0
    %1097 = vmatprep.subr.mxu0 0.0
    %1098 = vmatpush1.xpose.msra.mxu0 0.0
    %1099 = vmatprep.subr.mxu0 0.0
    %1100 = vmatpush1.xpose.msra.mxu0 %v1067
    %1101 = vmatprep.subr.mxu0 0.0
    %1102 = vmatpush2.xpose.msra.mxu0 0.0
    %1103 = vmatprep.subr.mxu0 0.0
    %1104 = vmatpush2.xpose.msra.mxu0 0.0
    %1105 = vmatprep.subr.mxu0 0.0
    %1106 = vmatpush2.xpose.msra.mxu0 0.0
    %1107 = vmatprep.subr.mxu0 0.0
    %1108 = vmatpush2.xpose.msra.mxu0 0.0
    %1109 = vmatprep.subr.mxu0 0.0
    %1110 = vmatpush2.xpose.msra.mxu0 0.0
    %1111 = vmatprep.subr.mxu0 0.0
    %1112 = vmatpush2.xpose.msra.mxu0 0.0
    %1113 = vmatprep.subr.mxu0 0.0
    %1114 = vmatpush2.xpose.msra.mxu0 0.0
    %1115 = vmatprep.subr.mxu0 0.0
    %1116 = vmatpush2.xpose.msra.mxu0 0.0
    %1117 = vmatprep.subr.mxu0 0.0
    %1118 = vmatpush2.xpose.msra.mxu0 0.0
    %1119 = vmatprep.subr.mxu0 0.0
    %1120 = vmatpush2.xpose.msra.mxu0 0.0
    %1121 = vmatprep.subr.mxu0 0.0
    %1122 = vmatpush2.xpose.msra.mxu0 0.0
    %1123 = vmatprep.subr.mxu0 0.0
    %1124 = vmatpush2.xpose.msra.mxu0 0.0
    %1125 = vmatprep.subr.mxu0 0.0
    %1126 = vmatpush2.xpose.msra.mxu0 0.0
    %1127 = vmatprep.subr.mxu0 0.0
    %1128 = vmatpush2.xpose.msra.mxu0 0.0
    %1129 = vmatprep.subr.mxu0 0.0
    %1130 = vmatpush2.xpose.msra.mxu0 0.0
    %1131 = vmatprep.subr.mxu0 0.0
    %1132 = vmatpush2.xpose.msra.mxu0 0.0
    %1133 = vmatprep.mubr.f32.mxu0 0.0
    %1134 = vmatmul.mubr.f32.gmra.mxu0 %v1065
    %v1135 = vpop.f32.mrf.mxu0
    %v1136 = vadd.f32 0.0, %v1135
    %v1137 = vpop.f32.mrf.mxu0
    %1138 = vdwg.mxu0
    %v1139 = vmul.f32 %v1058, 0.35355338
    %v1140 = vmul.f32 %v1136, 0.35355338
    %v1141 = vsel %vm161, %v1139, -inf
    %1142 = vmax.xlane.f32.xlu0 %v1141
    %v1143 = vpop.xlane.xlu0 %1142
    %v1144 = vsel %vm161, %v1140, -inf
    %1145 = vmax.xlane.f32.xlu0 %v1144
    %v1146 = vpop.xlane.xlu0 %1145
    %v1147 = vsub.f32 %v1139, %v1143
    %v1148 = vsub.f32 %v1140, %v1146
    %v1149 = vmul.f32 %v1147, 1.442695
    %v1150 = vpow.pop %v1149
    %v1151 = vmul.f32 %v1148, 1.442695
    %v1152 = vpow.pop %v1151
    %v1153 = vsel %vm161, %v1150, 0.0
    %1154 = vadd.xlane.f32.xlu0 %v1153
    %v1155 = vpop.xlane.xlu0 %1154
    %v1156 = vsel %vm161, %v1152, 0.0
    %1157 = vadd.xlane.f32.xlu0 %v1156
    %v1158 = vpop.xlane.xlu0 %1157
    %v1159 = vrcp.pop %v1155
    %v1160 = vrcp.pop %v1158
    %v1161 = vmul.f32 %v1150, %v1159
    %v1162 = vmul.f32 %v1152, %v1160
    %1163 = vrot.lane.b32.xlu0 %v150, 48
    %v1164 = vpop.permute.xlu0 %1163
    %v1167 = vsel %vm161, %v1161, 0
    %1169 = vmatprep.subr.mxu0 0.0
    %1170 = vmatpush1.msra.mxu0 0.0
    %1171 = vmatprep.subr.mxu0 0.0
    %1172 = vmatpush1.msra.mxu0 0.0
    %1173 = vmatprep.subr.mxu0 0.0
    %1174 = vmatpush1.msra.mxu0 0.0
    %1175 = vmatprep.subr.mxu0 0.0
    %1176 = vmatpush1.msra.mxu0 0.0
    %1177 = vmatprep.subr.mxu0 0.0
    %1178 = vmatpush1.msra.mxu0 0.0
    %1179 = vmatprep.subr.mxu0 0.0
    %1180 = vmatpush1.msra.mxu0 0.0
    %1181 = vmatprep.subr.mxu0 0.0
    %1182 = vmatpush1.msra.mxu0 0.0
    %1183 = vmatprep.subr.mxu0 0.0
    %1184 = vmatpush1.msra.mxu0 0.0
    %1185 = vmatprep.subr.mxu0 0.0
    %1186 = vmatpush1.msra.mxu0 0.0
    %1187 = vmatprep.subr.mxu0 0.0
    %1188 = vmatpush1.msra.mxu0 0.0
    %1189 = vmatprep.subr.mxu0 0.0
    %1190 = vmatpush1.msra.mxu0 0.0
    %1191 = vmatprep.subr.mxu0 0.0
    %1192 = vmatpush1.msra.mxu0 0.0
    %1193 = vmatprep.subr.mxu0 0.0
    %1194 = vmatpush1.msra.mxu0 0.0
    %1195 = vmatprep.subr.mxu0 0.0
    %1196 = vmatpush1.msra.mxu0 0.0
    %1197 = vmatprep.subr.mxu0 0.0
    %1198 = vmatpush1.msra.mxu0 0.0
    %1199 = vmatprep.subr.mxu0 0.0
    %1200 = vmatpush1.msra.mxu0 %v1164
    %1201 = vmatprep.subr.mxu0 0.0
    %1202 = vmatpush2.msra.mxu0 0.0
    %1203 = vmatprep.subr.mxu0 0.0
    %1204 = vmatpush2.msra.mxu0 0.0
    %1205 = vmatprep.subr.mxu0 0.0
    %1206 = vmatpush2.msra.mxu0 0.0
    %1207 = vmatprep.subr.mxu0 0.0
    %1208 = vmatpush2.msra.mxu0 0.0
    %1209 = vmatprep.subr.mxu0 0.0
    %1210 = vmatpush2.msra.mxu0 0.0
    %1211 = vmatprep.subr.mxu0 0.0
    %1212 = vmatpush2.msra.mxu0 0.0
    %1213 = vmatprep.subr.mxu0 0.0
    %1214 = vmatpush2.msra.mxu0 0.0
    %1215 = vmatprep.subr.mxu0 0.0
    %1216 = vmatpush2.msra.mxu0 0.0
    %1217 = vmatprep.subr.mxu0 0.0
    %1218 = vmatpush2.msra.mxu0 0.0
    %1219 = vmatprep.subr.mxu0 0.0
    %1220 = vmatpush2.msra.mxu0 0.0
    %1221 = vmatprep.subr.mxu0 0.0
    %1222 = vmatpush2.msra.mxu0 0.0
    %1223 = vmatprep.subr.mxu0 0.0
    %1224 = vmatpush2.msra.mxu0 0.0
    %1225 = vmatprep.subr.mxu0 0.0
    %1226 = vmatpush2.msra.mxu0 0.0
    %1227 = vmatprep.subr.mxu0 0.0
    %1228 = vmatpush2.msra.mxu0 0.0
    %1229 = vmatprep.subr.mxu0 0.0
    %1230 = vmatpush2.msra.mxu0 0.0
    %1231 = vmatprep.subr.mxu0 0.0
    %1232 = vmatpush2.msra.mxu0 0.0
    %1233 = vmatprep.mubr.f32.mxu0 0.0
    %1234 = vmatmul.mubr.f32.gmra.mxu0 %v1167
    %v1235 = vpop.f32.mrf.mxu0
    %v1236 = vadd.f32 0.0, %v1235
    %v1237 = vpop.f32.mrf.mxu0
    %1238 = vdwg.mxu0
    %1239 = vrot.lane.b32.xlu0 %v155, 48
    %v1240 = vpop.permute.xlu0 %1239
    %v1243 = vsel %vm161, %v1162, 0
    %1245 = vmatprep.subr.mxu0 0.0
    %1246 = vmatpush1.msra.mxu0 0.0
    %1247 = vmatprep.subr.mxu0 0.0
    %1248 = vmatpush1.msra.mxu0 0.0
    %1249 = vmatprep.subr.mxu0 0.0
    %1250 = vmatpush1.msra.mxu0 0.0
    %1251 = vmatprep.subr.mxu0 0.0
    %1252 = vmatpush1.msra.mxu0 0.0
    %1253 = vmatprep.subr.mxu0 0.0
    %1254 = vmatpush1.msra.mxu0 0.0
    %1255 = vmatprep.subr.mxu0 0.0
    %1256 = vmatpush1.msra.mxu0 0.0
    %1257 = vmatprep.subr.mxu0 0.0
    %1258 = vmatpush1.msra.mxu0 0.0
    %1259 = vmatprep.subr.mxu0 0.0
    %1260 = vmatpush1.msra.mxu0 0.0
    %1261 = vmatprep.subr.mxu0 0.0
    %1262 = vmatpush1.msra.mxu0 0.0
    %1263 = vmatprep.subr.mxu0 0.0
    %1264 = vmatpush1.msra.mxu0 0.0
    %1265 = vmatprep.subr.mxu0 0.0
    %1266 = vmatpush1.msra.mxu0 0.0
    %1267 = vmatprep.subr.mxu0 0.0
    %1268 = vmatpush1.msra.mxu0 0.0
    %1269 = vmatprep.subr.mxu0 0.0
    %1270 = vmatpush1.msra.mxu0 0.0
    %1271 = vmatprep.subr.mxu0 0.0
    %1272 = vmatpush1.msra.mxu0 0.0
    %1273 = vmatprep.subr.mxu0 0.0
    %1274 = vmatpush1.msra.mxu0 0.0
    %1275 = vmatprep.subr.mxu0 0.0
    %1276 = vmatpush1.msra.mxu0 %v1240
    %1277 = vmatprep.subr.mxu0 0.0
    %1278 = vmatpush2.msra.mxu0 0.0
    %1279 = vmatprep.subr.mxu0 0.0
    %1280 = vmatpush2.msra.mxu0 0.0
    %1281 = vmatprep.subr.mxu0 0.0
    %1282 = vmatpush2.msra.mxu0 0.0
    %1283 = vmatprep.subr.mxu0 0.0
    %1284 = vmatpush2.msra.mxu0 0.0
    %1285 = vmatprep.subr.mxu0 0.0
    %1286 = vmatpush2.msra.mxu0 0.0
    %1287 = vmatprep.subr.mxu0 0.0
    %1288 = vmatpush2.msra.mxu0 0.0
    %1289 = vmatprep.subr.mxu0 0.0
    %1290 = vmatpush2.msra.mxu0 0.0
    %1291 = vmatprep.subr.mxu0 0.0
    %1292 = vmatpush2.msra.mxu0 0.0
    %1293 = vmatprep.subr.mxu0 0.0
    %1294 = vmatpush2.msra.mxu0 0.0
    %1295 = vmatprep.subr.mxu0 0.0
    %1296 = vmatpush2.msra.mxu0 0.0
    %1297 = vmatprep.subr.mxu0 0.0
    %1298 = vmatpush2.msra.mxu0 0.0
    %1299 = vmatprep.subr.mxu0 0.0
    %1300 = vmatpush2.msra.mxu0 0.0
    %1301 = vmatprep.subr.mxu0 0.0
    %1302 = vmatpush2.msra.mxu0 0.0
    %1303 = vmatprep.subr.mxu0 0.0
    %1304 = vmatpush2.msra.mxu0 0.0
    %1305 = vmatprep.subr.mxu0 0.0
    %1306 = vmatpush2.msra.mxu0 0.0
    %1307 = vmatprep.subr.mxu0 0.0
    %1308 = vmatpush2.msra.mxu0 0.0
    %1309 = vmatprep.mubr.f32.mxu0 0.0
    %1310 = vmatmul.mubr.f32.gmra.mxu0 %v1243
    %v1311 = vpop.f32.mrf.mxu0
    %v1312 = vadd.f32 0.0, %v1311
    %v1313 = vpop.f32.mrf.mxu0
    %1314 = vdwg.mxu0
    %v1316 = vsel %vm161, %v1236, 0
    %v1319 = vsel %vm161, %v1312, 0
    %1321 = vmatprep.subr.mxu0 0.0
    %1322 = vmatpush1.msra.mxu0 0.0
    %1323 = vmatprep.subr.mxu0 0.0
    %1324 = vmatpush1.msra.mxu0 0.0
    %1325 = vmatprep.subr.mxu0 0.0
    %1326 = vmatpush1.msra.mxu0 0.0
    %1327 = vmatprep.subr.mxu0 0.0
    %1328 = vmatpush1.msra.mxu0 0.0
    %1329 = vmatprep.subr.mxu0 0.0
    %1330 = vmatpush1.msra.mxu0 0.0
    %1331 = vmatprep.subr.mxu0 0.0
    %1332 = vmatpush1.msra.mxu0 0.0
    %1333 = vmatprep.subr.mxu0 0.0
    %1334 = vmatpush1.msra.mxu0 0.0
    %1335 = vmatprep.subr.mxu0 0.0
    %1336 = vmatpush1.msra.mxu0 0.0
    %1337 = vmatprep.subr.mxu0 0.0
    %1338 = vmatpush1.msra.mxu0 0.0
    %1339 = vmatprep.subr.mxu0 0.0
    %1340 = vmatpush1.msra.mxu0 0.0
    %1341 = vmatprep.subr.mxu0 0.0
    %1342 = vmatpush1.msra.mxu0 0.0
    %1343 = vmatprep.subr.mxu0 0.0
    %1344 = vmatpush1.msra.mxu0 0.0
    %1345 = vmatprep.subr.mxu0 0.0
    %1346 = vmatpush1.msra.mxu0 0.0
    %1347 = vmatprep.subr.mxu0 0.0
    %1348 = vmatpush1.msra.mxu0 0.0
    %1349 = vmatprep.subr.mxu0 0.0
    %1350 = vmatpush1.msra.mxu0 0.0
    %1351 = vmatprep.subr.mxu0 0.0
    %1352 = vmatpush1.msra.mxu0 %v67
    %1353 = vmatprep.subr.mxu0 0.0
    %1354 = vmatpush2.msra.mxu0 0.0
    %1355 = vmatprep.subr.mxu0 0.0
    %1356 = vmatpush2.msra.mxu0 0.0
    %1357 = vmatprep.subr.mxu0 0.0
    %1358 = vmatpush2.msra.mxu0 0.0
    %1359 = vmatprep.subr.mxu0 0.0
    %1360 = vmatpush2.msra.mxu0 0.0
    %1361 = vmatprep.subr.mxu0 0.0
    %1362 = vmatpush2.msra.mxu0 0.0
    %1363 = vmatprep.subr.mxu0 0.0
    %1364 = vmatpush2.msra.mxu0 0.0
    %1365 = vmatprep.subr.mxu0 0.0
    %1366 = vmatpush2.msra.mxu0 0.0
    %1367 = vmatprep.subr.mxu0 0.0
    %1368 = vmatpush2.msra.mxu0 0.0
    %1369 = vmatprep.subr.mxu0 0.0
    %1370 = vmatpush2.msra.mxu0 0.0
    %1371 = vmatprep.subr.mxu0 0.0
    %1372 = vmatpush2.msra.mxu0 0.0
    %1373 = vmatprep.subr.mxu0 0.0
    %1374 = vmatpush2.msra.mxu0 0.0
    %1375 = vmatprep.subr.mxu0 0.0
    %1376 = vmatpush2.msra.mxu0 0.0
    %1377 = vmatprep.subr.mxu0 0.0
    %1378 = vmatpush2.msra.mxu0 0.0
    %1379 = vmatprep.subr.mxu0 0.0
    %1380 = vmatpush2.msra.mxu0 0.0
    %1381 = vmatprep.subr.mxu0 0.0
    %1382 = vmatpush2.msra.mxu0 0.0
    %1383 = vmatprep.subr.mxu0 0.0
    %1384 = vmatpush2.msra.mxu0 0.0
    %1385 = vmatprep.mubr.f32.mxu0 0.0
    %1386 = vmatmul.mubr.f32.gmra.mxu0 %v1316
    %v1387 = vpop.f32.mrf.mxu0
    %v1388 = vadd.f32 0.0, %v1387
    %v1389 = vpop.f32.mrf.mxu0
    %1390 = vmatprep.mubr.f32.mxu0 0.0
    %1391 = vmatmul.mubr.f32.gmra.mxu0 %v1319
    %v1392 = vpop.f32.mrf.mxu0
    %v1393 = vadd.f32 0.0, %v1392
    %v1394 = vpop.f32.mrf.mxu0
    %1395 = vdwg.mxu0
    %v1396 = vadd.f32 %v975, %v1388
    %v1397 = vadd.f32 %v980, %v1393
    %1398 = vrot.lane.b32.xlu0 %v150, 104
    %v1399 = vpop.permute.xlu0 %1398
    %1400 = vrot.lane.b32.xlu0 %v150, 72
    %v1401 = vpop.permute.xlu0 %1400
    %v1402 = vsel %vm161, %v1399, 0
    %v1404 = vsel %vm161, %v1401, 0
    %1406 = vmatprep.subr.mxu0 0.0
    %1407 = vmatpush1.xpose.msra.mxu0 0.0
    %1408 = vmatprep.subr.mxu0 0.0
    %1409 = vmatpush1.xpose.msra.mxu0 0.0
    %1410 = vmatprep.subr.mxu0 0.0
    %1411 = vmatpush1.xpose.msra.mxu0 0.0
    %1412 = vmatprep.subr.mxu0 0.0
    %1413 = vmatpush1.xpose.msra.mxu0 0.0
    %1414 = vmatprep.subr.mxu0 0.0
    %1415 = vmatpush1.xpose.msra.mxu0 0.0
    %1416 = vmatprep.subr.mxu0 0.0
    %1417 = vmatpush1.xpose.msra.mxu0 0.0
    %1418 = vmatprep.subr.mxu0 0.0
    %1419 = vmatpush1.xpose.msra.mxu0 0.0
    %1420 = vmatprep.subr.mxu0 0.0
    %1421 = vmatpush1.xpose.msra.mxu0 0.0
    %1422 = vmatprep.subr.mxu0 0.0
    %1423 = vmatpush1.xpose.msra.mxu0 0.0
    %1424 = vmatprep.subr.mxu0 0.0
    %1425 = vmatpush1.xpose.msra.mxu0 0.0
    %1426 = vmatprep.subr.mxu0 0.0
    %1427 = vmatpush1.xpose.msra.mxu0 0.0
    %1428 = vmatprep.subr.mxu0 0.0
    %1429 = vmatpush1.xpose.msra.mxu0 0.0
    %1430 = vmatprep.subr.mxu0 0.0
    %1431 = vmatpush1.xpose.msra.mxu0 0.0
    %1432 = vmatprep.subr.mxu0 0.0
    %1433 = vmatpush1.xpose.msra.mxu0 0.0
    %1434 = vmatprep.subr.mxu0 0.0
    %1435 = vmatpush1.xpose.msra.mxu0 0.0
    %1436 = vmatprep.subr.mxu0 0.0
    %1437 = vmatpush1.xpose.msra.mxu0 %v1404
    %1438 = vmatprep.subr.mxu0 0.0
    %1439 = vmatpush2.xpose.msra.mxu0 0.0
    %1440 = vmatprep.subr.mxu0 0.0
    %1441 = vmatpush2.xpose.msra.mxu0 0.0
    %1442 = vmatprep.subr.mxu0 0.0
    %1443 = vmatpush2.xpose.msra.mxu0 0.0
    %1444 = vmatprep.subr.mxu0 0.0
    %1445 = vmatpush2.xpose.msra.mxu0 0.0
    %1446 = vmatprep.subr.mxu0 0.0
    %1447 = vmatpush2.xpose.msra.mxu0 0.0
    %1448 = vmatprep.subr.mxu0 0.0
    %1449 = vmatpush2.xpose.msra.mxu0 0.0
    %1450 = vmatprep.subr.mxu0 0.0
    %1451 = vmatpush2.xpose.msra.mxu0 0.0
    %1452 = vmatprep.subr.mxu0 0.0
    %1453 = vmatpush2.xpose.msra.mxu0 0.0
    %1454 = vmatprep.subr.mxu0 0.0
    %1455 = vmatpush2.xpose.msra.mxu0 0.0
    %1456 = vmatprep.subr.mxu0 0.0
    %1457 = vmatpush2.xpose.msra.mxu0 0.0
    %1458 = vmatprep.subr.mxu0 0.0
    %1459 = vmatpush2.xpose.msra.mxu0 0.0
    %1460 = vmatprep.subr.mxu0 0.0
    %1461 = vmatpush2.xpose.msra.mxu0 0.0
    %1462 = vmatprep.subr.mxu0 0.0
    %1463 = vmatpush2.xpose.msra.mxu0 0.0
    %1464 = vmatprep.subr.mxu0 0.0
    %1465 = vmatpush2.xpose.msra.mxu0 0.0
    %1466 = vmatprep.subr.mxu0 0.0
    %1467 = vmatpush2.xpose.msra.mxu0 0.0
    %1468 = vmatprep.subr.mxu0 0.0
    %1469 = vmatpush2.xpose.msra.mxu0 0.0
    %1470 = vmatprep.mubr.f32.mxu0 0.0
    %1471 = vmatmul.mubr.f32.gmra.mxu0 %v1402
    %v1472 = vpop.f32.mrf.mxu0
    %v1473 = vadd.f32 0.0, %v1472
    %v1474 = vpop.f32.mrf.mxu0
    %1475 = vdwg.mxu0
    %1476 = vrot.lane.b32.xlu0 %v155, 104
    %v1477 = vpop.permute.xlu0 %1476
    %1478 = vrot.lane.b32.xlu0 %v155, 72
    %v1479 = vpop.permute.xlu0 %1478
    %v1480 = vsel %vm161, %v1477, 0
    %v1482 = vsel %vm161, %v1479, 0
    %1484 = vmatprep.subr.mxu0 0.0
    %1485 = vmatpush1.xpose.msra.mxu0 0.0
    %1486 = vmatprep.subr.mxu0 0.0
    %1487 = vmatpush1.xpose.msra.mxu0 0.0
    %1488 = vmatprep.subr.mxu0 0.0
    %1489 = vmatpush1.xpose.msra.mxu0 0.0
    %1490 = vmatprep.subr.mxu0 0.0
    %1491 = vmatpush1.xpose.msra.mxu0 0.0
    %1492 = vmatprep.subr.mxu0 0.0
    %1493 = vmatpush1.xpose.msra.mxu0 0.0
    %1494 = vmatprep.subr.mxu0 0.0
    %1495 = vmatpush1.xpose.msra.mxu0 0.0
    %1496 = vmatprep.subr.mxu0 0.0
    %1497 = vmatpush1.xpose.msra.mxu0 0.0
    %1498 = vmatprep.subr.mxu0 0.0
    %1499 = vmatpush1.xpose.msra.mxu0 0.0
    %1500 = vmatprep.subr.mxu0 0.0
    %1501 = vmatpush1.xpose.msra.mxu0 0.0
    %1502 = vmatprep.subr.mxu0 0.0
    %1503 = vmatpush1.xpose.msra.mxu0 0.0
    %1504 = vmatprep.subr.mxu0 0.0
    %1505 = vmatpush1.xpose.msra.mxu0 0.0
    %1506 = vmatprep.subr.mxu0 0.0
    %1507 = vmatpush1.xpose.msra.mxu0 0.0
    %1508 = vmatprep.subr.mxu0 0.0
    %1509 = vmatpush1.xpose.msra.mxu0 0.0
    %1510 = vmatprep.subr.mxu0 0.0
    %1511 = vmatpush1.xpose.msra.mxu0 0.0
    %1512 = vmatprep.subr.mxu0 0.0
    %1513 = vmatpush1.xpose.msra.mxu0 0.0
    %1514 = vmatprep.subr.mxu0 0.0
    %1515 = vmatpush1.xpose.msra.mxu0 %v1482
    %1516 = vmatprep.subr.mxu0 0.0
    %1517 = vmatpush2.xpose.msra.mxu0 0.0
    %1518 = vmatprep.subr.mxu0 0.0
    %1519 = vmatpush2.xpose.msra.mxu0 0.0
    %1520 = vmatprep.subr.mxu0 0.0
    %1521 = vmatpush2.xpose.msra.mxu0 0.0
    %1522 = vmatprep.subr.mxu0 0.0
    %1523 = vmatpush2.xpose.msra.mxu0 0.0
    %1524 = vmatprep.subr.mxu0 0.0
    %1525 = vmatpush2.xpose.msra.mxu0 0.0
    %1526 = vmatprep.subr.mxu0 0.0
    %1527 = vmatpush2.xpose.msra.mxu0 0.0
    %1528 = vmatprep.subr.mxu0 0.0
    %1529 = vmatpush2.xpose.msra.mxu0 0.0
    %1530 = vmatprep.subr.mxu0 0.0
    %1531 = vmatpush2.xpose.msra.mxu0 0.0
    %1532 = vmatprep.subr.mxu0 0.0
    %1533 = vmatpush2.xpose.msra.mxu0 0.0
    %1534 = vmatprep.subr.mxu0 0.0
    %1535 = vmatpush2.xpose.msra.mxu0 0.0
    %1536 = vmatprep.subr.mxu0 0.0
    %1537 = vmatpush2.xpose.msra.mxu0 0.0
    %1538 = vmatprep.subr.mxu0 0.0
    %1539 = vmatpush2.xpose.msra.mxu0 0.0
    %1540 = vmatprep.subr.mxu0 0.0
    %1541 = vmatpush2.xpose.msra.mxu0 0.0
    %1542 = vmatprep.subr.mxu0 0.0
    %1543 = vmatpush2.xpose.msra.mxu0 0.0
    %1544 = vmatprep.subr.mxu0 0.0
    %1545 = vmatpush2.xpose.msra.mxu0 0.0
    %1546 = vmatprep.subr.mxu0 0.0
    %1547 = vmatpush2.xpose.msra.mxu0 0.0
    %1548 = vmatprep.mubr.f32.mxu0 0.0
    %1549 = vmatmul.mubr.f32.gmra.mxu0 %v1480
    %v1550 = vpop.f32.mrf.mxu0
    %v1551 = vadd.f32 0.0, %v1550
    %v1552 = vpop.f32.mrf.mxu0
    %1553 = vdwg.mxu0
    %v1554 = vmul.f32 %v1473, 0.35355338
    %v1555 = vmul.f32 %v1551, 0.35355338
    %v1556 = vsel %vm161, %v1554, -inf
    %1557 = vmax.xlane.f32.xlu0 %v1556
    %v1558 = vpop.xlane.xlu0 %1557
    %v1559 = vsel %vm161, %v1555, -inf
    %1560 = vmax.xlane.f32.xlu0 %v1559
    %v1561 = vpop.xlane.xlu0 %1560
    %v1562 = vsub.f32 %v1554, %v1558
    %v1563 = vsub.f32 %v1555, %v1561
    %v1564 = vmul.f32 %v1562, 1.442695
    %v1565 = vpow.pop %v1564
    %v1566 = vmul.f32 %v1563, 1.442695
    %v1567 = vpow.pop %v1566
    %v1568 = vsel %vm161, %v1565, 0.0
    %1569 = vadd.xlane.f32.xlu0 %v1568
    %v1570 = vpop.xlane.xlu0 %1569
    %v1571 = vsel %vm161, %v1567, 0.0
    %1572 = vadd.xlane.f32.xlu0 %v1571
    %v1573 = vpop.xlane.xlu0 %1572
    %v1574 = vrcp.pop %v1570
    %v1575 = vrcp.pop %v1573
    %v1576 = vmul.f32 %v1565, %v1574
    %v1577 = vmul.f32 %v1567, %v1575
    %1578 = vrot.lane.b32.xlu0 %v150, 40
    %v1579 = vpop.permute.xlu0 %1578
    %v1582 = vsel %vm161, %v1576, 0
    %1584 = vmatprep.subr.mxu0 0.0
    %1585 = vmatpush1.msra.mxu0 0.0
    %1586 = vmatprep.subr.mxu0 0.0
    %1587 = vmatpush1.msra.mxu0 0.0
    %1588 = vmatprep.subr.mxu0 0.0
    %1589 = vmatpush1.msra.mxu0 0.0
    %1590 = vmatprep.subr.mxu0 0.0
    %1591 = vmatpush1.msra.mxu0 0.0
    %1592 = vmatprep.subr.mxu0 0.0
    %1593 = vmatpush1.msra.mxu0 0.0
    %1594 = vmatprep.subr.mxu0 0.0
    %1595 = vmatpush1.msra.mxu0 0.0
    %1596 = vmatprep.subr.mxu0 0.0
    %1597 = vmatpush1.msra.mxu0 0.0
    %1598 = vmatprep.subr.mxu0 0.0
    %1599 = vmatpush1.msra.mxu0 0.0
    %1600 = vmatprep.subr.mxu0 0.0
    %1601 = vmatpush1.msra.mxu0 0.0
    %1602 = vmatprep.subr.mxu0 0.0
    %1603 = vmatpush1.msra.mxu0 0.0
    %1604 = vmatprep.subr.mxu0 0.0
    %1605 = vmatpush1.msra.mxu0 0.0
    %1606 = vmatprep.subr.mxu0 0.0
    %1607 = vmatpush1.msra.mxu0 0.0
    %1608 = vmatprep.subr.mxu0 0.0
    %1609 = vmatpush1.msra.mxu0 0.0
    %1610 = vmatprep.subr.mxu0 0.0
    %1611 = vmatpush1.msra.mxu0 0.0
    %1612 = vmatprep.subr.mxu0 0.0
    %1613 = vmatpush1.msra.mxu0 0.0
    %1614 = vmatprep.subr.mxu0 0.0
    %1615 = vmatpush1.msra.mxu0 %v1579
    %1616 = vmatprep.subr.mxu0 0.0
    %1617 = vmatpush2.msra.mxu0 0.0
    %1618 = vmatprep.subr.mxu0 0.0
    %1619 = vmatpush2.msra.mxu0 0.0
    %1620 = vmatprep.subr.mxu0 0.0
    %1621 = vmatpush2.msra.mxu0 0.0
    %1622 = vmatprep.subr.mxu0 0.0
    %1623 = vmatpush2.msra.mxu0 0.0
    %1624 = vmatprep.subr.mxu0 0.0
    %1625 = vmatpush2.msra.mxu0 0.0
    %1626 = vmatprep.subr.mxu0 0.0
    %1627 = vmatpush2.msra.mxu0 0.0
    %1628 = vmatprep.subr.mxu0 0.0
    %1629 = vmatpush2.msra.mxu0 0.0
    %1630 = vmatprep.subr.mxu0 0.0
    %1631 = vmatpush2.msra.mxu0 0.0
    %1632 = vmatprep.subr.mxu0 0.0
    %1633 = vmatpush2.msra.mxu0 0.0
    %1634 = vmatprep.subr.mxu0 0.0
    %1635 = vmatpush2.msra.mxu0 0.0
    %1636 = vmatprep.subr.mxu0 0.0
    %1637 = vmatpush2.msra.mxu0 0.0
    %1638 = vmatprep.subr.mxu0 0.0
    %1639 = vmatpush2.msra.mxu0 0.0
    %1640 = vmatprep.subr.mxu0 0.0
    %1641 = vmatpush2.msra.mxu0 0.0
    %1642 = vmatprep.subr.mxu0 0.0
    %1643 = vmatpush2.msra.mxu0 0.0
    %1644 = vmatprep.subr.mxu0 0.0
    %1645 = vmatpush2.msra.mxu0 0.0
    %1646 = vmatprep.subr.mxu0 0.0
    %1647 = vmatpush2.msra.mxu0 0.0
    %1648 = vmatprep.mubr.f32.mxu0 0.0
    %1649 = vmatmul.mubr.f32.gmra.mxu0 %v1582
    %v1650 = vpop.f32.mrf.mxu0
    %v1651 = vadd.f32 0.0, %v1650
    %v1652 = vpop.f32.mrf.mxu0
    %1653 = vdwg.mxu0
    %1654 = vrot.lane.b32.xlu0 %v155, 40
    %v1655 = vpop.permute.xlu0 %1654
    %v1658 = vsel %vm161, %v1577, 0
    %1660 = vmatprep.subr.mxu0 0.0
    %1661 = vmatpush1.msra.mxu0 0.0
    %1662 = vmatprep.subr.mxu0 0.0
    %1663 = vmatpush1.msra.mxu0 0.0
    %1664 = vmatprep.subr.mxu0 0.0
    %1665 = vmatpush1.msra.mxu0 0.0
    %1666 = vmatprep.subr.mxu0 0.0
    %1667 = vmatpush1.msra.mxu0 0.0
    %1668 = vmatprep.subr.mxu0 0.0
    %1669 = vmatpush1.msra.mxu0 0.0
    %1670 = vmatprep.subr.mxu0 0.0
    %1671 = vmatpush1.msra.mxu0 0.0
    %1672 = vmatprep.subr.mxu0 0.0
    %1673 = vmatpush1.msra.mxu0 0.0
    %1674 = vmatprep.subr.mxu0 0.0
    %1675 = vmatpush1.msra.mxu0 0.0
    %1676 = vmatprep.subr.mxu0 0.0
    %1677 = vmatpush1.msra.mxu0 0.0
    %1678 = vmatprep.subr.mxu0 0.0
    %1679 = vmatpush1.msra.mxu0 0.0
    %1680 = vmatprep.subr.mxu0 0.0
    %1681 = vmatpush1.msra.mxu0 0.0
    %1682 = vmatprep.subr.mxu0 0.0
    %1683 = vmatpush1.msra.mxu0 0.0
    %1684 = vmatprep.subr.mxu0 0.0
    %1685 = vmatpush1.msra.mxu0 0.0
    %1686 = vmatprep.subr.mxu0 0.0
    %1687 = vmatpush1.msra.mxu0 0.0
    %1688 = vmatprep.subr.mxu0 0.0
    %1689 = vmatpush1.msra.mxu0 0.0
    %1690 = vmatprep.subr.mxu0 0.0
    %1691 = vmatpush1.msra.mxu0 %v1655
    %1692 = vmatprep.subr.mxu0 0.0
    %1693 = vmatpush2.msra.mxu0 0.0
    %1694 = vmatprep.subr.mxu0 0.0
    %1695 = vmatpush2.msra.mxu0 0.0
    %1696 = vmatprep.subr.mxu0 0.0
    %1697 = vmatpush2.msra.mxu0 0.0
    %1698 = vmatprep.subr.mxu0 0.0
    %1699 = vmatpush2.msra.mxu0 0.0
    %1700 = vmatprep.subr.mxu0 0.0
    %1701 = vmatpush2.msra.mxu0 0.0
    %1702 = vmatprep.subr.mxu0 0.0
    %1703 = vmatpush2.msra.mxu0 0.0
    %1704 = vmatprep.subr.mxu0 0.0
    %1705 = vmatpush2.msra.mxu0 0.0
    %1706 = vmatprep.subr.mxu0 0.0
    %1707 = vmatpush2.msra.mxu0 0.0
    %1708 = vmatprep.subr.mxu0 0.0
    %1709 = vmatpush2.msra.mxu0 0.0
    %1710 = vmatprep.subr.mxu0 0.0
    %1711 = vmatpush2.msra.mxu0 0.0
    %1712 = vmatprep.subr.mxu0 0.0
    %1713 = vmatpush2.msra.mxu0 0.0
    %1714 = vmatprep.subr.mxu0 0.0
    %1715 = vmatpush2.msra.mxu0 0.0
    %1716 = vmatprep.subr.mxu0 0.0
    %1717 = vmatpush2.msra.mxu0 0.0
    %1718 = vmatprep.subr.mxu0 0.0
    %1719 = vmatpush2.msra.mxu0 0.0
    %1720 = vmatprep.subr.mxu0 0.0
    %1721 = vmatpush2.msra.mxu0 0.0
    %1722 = vmatprep.subr.mxu0 0.0
    %1723 = vmatpush2.msra.mxu0 0.0
    %1724 = vmatprep.mubr.f32.mxu0 0.0
    %1725 = vmatmul.mubr.f32.gmra.mxu0 %v1658
    %v1726 = vpop.f32.mrf.mxu0
    %v1727 = vadd.f32 0.0, %v1726
    %v1728 = vpop.f32.mrf.mxu0
    %1729 = vdwg.mxu0
    %v1731 = vsel %vm161, %v1651, 0
    %v1734 = vsel %vm161, %v1727, 0
    %1736 = vmatprep.subr.mxu0 0.0
    %1737 = vmatpush1.msra.mxu0 0.0
    %1738 = vmatprep.subr.mxu0 0.0
    %1739 = vmatpush1.msra.mxu0 0.0
    %1740 = vmatprep.subr.mxu0 0.0
    %1741 = vmatpush1.msra.mxu0 0.0
    %1742 = vmatprep.subr.mxu0 0.0
    %1743 = vmatpush1.msra.mxu0 0.0
    %1744 = vmatprep.subr.mxu0 0.0
    %1745 = vmatpush1.msra.mxu0 0.0
    %1746 = vmatprep.subr.mxu0 0.0
    %1747 = vmatpush1.msra.mxu0 0.0
    %1748 = vmatprep.subr.mxu0 0.0
    %1749 = vmatpush1.msra.mxu0 0.0
    %1750 = vmatprep.subr.mxu0 0.0
    %1751 = vmatpush1.msra.mxu0 0.0
    %1752 = vmatprep.subr.mxu0 0.0
    %1753 = vmatpush1.msra.mxu0 0.0
    %1754 = vmatprep.subr.mxu0 0.0
    %1755 = vmatpush1.msra.mxu0 0.0
    %1756 = vmatprep.subr.mxu0 0.0
    %1757 = vmatpush1.msra.mxu0 0.0
    %1758 = vmatprep.subr.mxu0 0.0
    %1759 = vmatpush1.msra.mxu0 0.0
    %1760 = vmatprep.subr.mxu0 0.0
    %1761 = vmatpush1.msra.mxu0 0.0
    %1762 = vmatprep.subr.mxu0 0.0
    %1763 = vmatpush1.msra.mxu0 0.0
    %1764 = vmatprep.subr.mxu0 0.0
    %1765 = vmatpush1.msra.mxu0 0.0
    %1766 = vmatprep.subr.mxu0 0.0
    %1767 = vmatpush1.msra.mxu0 %v68
    %1768 = vmatprep.subr.mxu0 0.0
    %1769 = vmatpush2.msra.mxu0 0.0
    %1770 = vmatprep.subr.mxu0 0.0
    %1771 = vmatpush2.msra.mxu0 0.0
    %1772 = vmatprep.subr.mxu0 0.0
    %1773 = vmatpush2.msra.mxu0 0.0
    %1774 = vmatprep.subr.mxu0 0.0
    %1775 = vmatpush2.msra.mxu0 0.0
    %1776 = vmatprep.subr.mxu0 0.0
    %1777 = vmatpush2.msra.mxu0 0.0
    %1778 = vmatprep.subr.mxu0 0.0
    %1779 = vmatpush2.msra.mxu0 0.0
    %1780 = vmatprep.subr.mxu0 0.0
    %1781 = vmatpush2.msra.mxu0 0.0
    %1782 = vmatprep.subr.mxu0 0.0
    %1783 = vmatpush2.msra.mxu0 0.0
    %1784 = vmatprep.subr.mxu0 0.0
    %1785 = vmatpush2.msra.mxu0 0.0
    %1786 = vmatprep.subr.mxu0 0.0
    %1787 = vmatpush2.msra.mxu0 0.0
    %1788 = vmatprep.subr.mxu0 0.0
    %1789 = vmatpush2.msra.mxu0 0.0
    %1790 = vmatprep.subr.mxu0 0.0
    %1791 = vmatpush2.msra.mxu0 0.0
    %1792 = vmatprep.subr.mxu0 0.0
    %1793 = vmatpush2.msra.mxu0 0.0
    %1794 = vmatprep.subr.mxu0 0.0
    %1795 = vmatpush2.msra.mxu0 0.0
    %1796 = vmatprep.subr.mxu0 0.0
    %1797 = vmatpush2.msra.mxu0 0.0
    %1798 = vmatprep.subr.mxu0 0.0
    %1799 = vmatpush2.msra.mxu0 0.0
    %1800 = vmatprep.mubr.f32.mxu0 0.0
    %1801 = vmatmul.mubr.f32.gmra.mxu0 %v1731
    %v1802 = vpop.f32.mrf.mxu0
    %v1803 = vadd.f32 0.0, %v1802
    %v1804 = vpop.f32.mrf.mxu0
    %1805 = vmatprep.mubr.f32.mxu0 0.0
    %1806 = vmatmul.mubr.f32.gmra.mxu0 %v1734
    %v1807 = vpop.f32.mrf.mxu0
    %v1808 = vadd.f32 0.0, %v1807
    %v1809 = vpop.f32.mrf.mxu0
    %1810 = vdwg.mxu0
    %v1811 = vadd.f32 %v1396, %v1803
    %v1812 = vadd.f32 %v1397, %v1808
    %v1814 = vlaneseq
    %v1815 = vshrl.u32 %v1814, 7
    %v1816 = vsub.s32 0, %v1815
    %v1817 = vrot.slane %v69, %v1816
    %v1819 = vadd.f32 %v1811, %v1817
    %v1820 = vadd.f32 %v1812, %v1817
    %v1821 = vadd.f32 %v1819, %v58
    %v1822 = vadd.f32 %v1820, %v59
    %v1823 = vld [vmem:[%s7] sm:$0x1]
    %v1824 = vld [vmem:[%s8] sm:$0x1]
    %v1825 = vsel %vm76, %v1821, 0.0
    %1826 = vadd.xlane.f32.xlu0 %v1825
    %v1827 = vpop.xlane.xlu0 %1826
    %v1828 = vsel %vm76, %v1822, 0.0
    %1829 = vadd.xlane.f32.xlu0 %v1828
    %v1830 = vpop.xlane.xlu0 %1829
    %v1831 = vrcp.pop 32.0
    %v1832 = vmul.f32 %v1827, %v1831
    %v1833 = vmul.f32 %v1830, %v1831
    %v1834 = vsub.f32 %v1821, %v1832
    %v1835 = vsub.f32 %v1822, %v1833
    %v1836 = vmul.f32 %v1834, %v1834
    %v1837 = vmul.f32 %v1835, %v1835
    %v1838 = vsel %vm76, %v1836, 0.0
    %1839 = vadd.xlane.f32.xlu0 %v1838
    %v1840 = vpop.xlane.xlu0 %1839
    %v1841 = vsel %vm76, %v1837, 0.0
    %1842 = vadd.xlane.f32.xlu0 %v1841
    %v1843 = vpop.xlane.xlu0 %1842
    %v1844 = vmul.f32 %v1840, %v1831
    %v1845 = vmul.f32 %v1843, %v1831
    %v1846 = vadd.f32 %v1844, 1e-05
    %v1847 = vadd.f32 %v1845, 1e-05
    %v1848 = vrsqrt.pop %v1846
    %v1849 = vrsqrt.pop %v1847
    %v1850 = vmul.f32 %v1834, %v1848
    %v1851 = vmul.f32 %v1835, %v1849
    %v1853 = vlaneseq
    %v1854 = vshrl.u32 %v1853, 7
    %v1855 = vsub.s32 0, %v1854
    %v1856 = vrot.slane %v1823, %v1855
    %v1858 = vmul.f32 %v1850, %v1856
    %v1859 = vmul.f32 %v1851, %v1856
    %v1861 = vlaneseq
    %v1862 = vshrl.u32 %v1861, 7
    %v1863 = vsub.s32 0, %v1862
    %v1864 = vrot.slane %v1824, %v1863
    %v1866 = vadd.f32 %v1858, %v1864
    %v1867 = vadd.f32 %v1859, %v1864
    %v1868 = vld [vmem:[%s9] sm:$0xff]
    %v1869 = vld [vmem:[%s9 + $0x8] sm:$0xff]
    %v1870 = vld [vmem:[%s9 + $0x10] sm:$0xff]
    %v1871 = vld [vmem:[%s9 + $0x18] sm:$0xff]
    %v1872 = vld [vmem:[%s10] sm:$0x1]
    %v1874 = vlaneseq
    %v1875 = vshrl.u32 %v1874, 7
    %v1876 = vsub.s32 0, %v1875
    %v1877 = vrot.slane %v1872, %v1876
    %v1880 = vsel %vm76, %v1866, 0
    %v1883 = vsel %vm76, %v1867, 0
    %1885 = vmatprep.subr.mxu0 0.0
    %1886 = vmatpush1.msra.mxu0 0.0
    %1887 = vmatprep.subr.mxu0 0.0
    %1888 = vmatpush1.msra.mxu0 0.0
    %1889 = vmatprep.subr.mxu0 0.0
    %1890 = vmatpush1.msra.mxu0 0.0
    %1891 = vmatprep.subr.mxu0 0.0
    %1892 = vmatpush1.msra.mxu0 0.0
    %1893 = vmatprep.subr.mxu0 0.0
    %1894 = vmatpush1.msra.mxu0 0.0
    %1895 = vmatprep.subr.mxu0 0.0
    %1896 = vmatpush1.msra.mxu0 0.0
    %1897 = vmatprep.subr.mxu0 0.0
    %1898 = vmatpush1.msra.mxu0 0.0
    %1899 = vmatprep.subr.mxu0 0.0
    %1900 = vmatpush1.msra.mxu0 0.0
    %1901 = vmatprep.subr.mxu0 0.0
    %1902 = vmatpush1.msra.mxu0 0.0
    %1903 = vmatprep.subr.mxu0 0.0
    %1904 = vmatpush1.msra.mxu0 0.0
    %1905 = vmatprep.subr.mxu0 0.0
    %1906 = vmatpush1.msra.mxu0 0.0
    %1907 = vmatprep.subr.mxu0 0.0
    %1908 = vmatpush1.msra.mxu0 0.0
    %1909 = vmatprep.subr.mxu0 0.0
    %1910 = vmatpush1.msra.mxu0 %v1871
    %1911 = vmatprep.subr.mxu0 0.0
    %1912 = vmatpush1.msra.mxu0 %v1870
    %1913 = vmatprep.subr.mxu0 0.0
    %1914 = vmatpush1.msra.mxu0 %v1869
    %1915 = vmatprep.subr.mxu0 0.0
    %1916 = vmatpush1.msra.mxu0 %v1868
    %1917 = vmatprep.subr.mxu0 0.0
    %1918 = vmatpush2.msra.mxu0 0.0
    %1919 = vmatprep.subr.mxu0 0.0
    %1920 = vmatpush2.msra.mxu0 0.0
    %1921 = vmatprep.subr.mxu0 0.0
    %1922 = vmatpush2.msra.mxu0 0.0
    %1923 = vmatprep.subr.mxu0 0.0
    %1924 = vmatpush2.msra.mxu0 0.0
    %1925 = vmatprep.subr.mxu0 0.0
    %1926 = vmatpush2.msra.mxu0 0.0
    %1927 = vmatprep.subr.mxu0 0.0
    %1928 = vmatpush2.msra.mxu0 0.0
    %1929 = vmatprep.subr.mxu0 0.0
    %1930 = vmatpush2.msra.mxu0 0.0
    %1931 = vmatprep.subr.mxu0 0.0
    %1932 = vmatpush2.msra.mxu0 0.0
    %1933 = vmatprep.subr.mxu0 0.0
    %1934 = vmatpush2.msra.mxu0 0.0
    %1935 = vmatprep.subr.mxu0 0.0
    %1936 = vmatpush2.msra.mxu0 0.0
    %1937 = vmatprep.subr.mxu0 0.0
    %1938 = vmatpush2.msra.mxu0 0.0
    %1939 = vmatprep.subr.mxu0 0.0
    %1940 = vmatpush2.msra.mxu0 0.0
    %1941 = vmatprep.subr.mxu0 0.0
    %1942 = vmatpush2.msra.mxu0 0.0
    %1943 = vmatprep.subr.mxu0 0.0
    %1944 = vmatpush2.msra.mxu0 0.0
    %1945 = vmatprep.subr.mxu0 0.0
    %1946 = vmatpush2.msra.mxu0 0.0
    %1947 = vmatprep.subr.mxu0 0.0
    %1948 = vmatpush2.msra.mxu0 0.0
    %1949 = vmatprep.mubr.f32.mxu0 0.0
    %1950 = vmatmul.mubr.f32.gmra.mxu0 %v1880
    %v1951 = vpop.f32.mrf.mxu0
    %v1952 = vadd.f32 %v1877, %v1951
    %v1953 = vpop.f32.mrf.mxu0
    %1954 = vmatprep.mubr.f32.mxu0 0.0
    %1955 = vmatmul.mubr.f32.gmra.mxu0 %v1883
    %v1956 = vpop.f32.mrf.mxu0
    %v1957 = vadd.f32 %v1877, %v1956
    %v1958 = vpop.f32.mrf.mxu0
    %1959 = vdwg.mxu0
    %v1960 = vmul.f32 %v1952, 0.5
    %v1961 = vmul.f32 %v1957, 0.5
    %v1962 = vmul.f32 %v1952, 0.70710677
    %v1963 = vmul.f32 %v1957, 0.70710677
    %v1964 = verf.f32.pop %v1962
    %v1965 = verf.f32.pop %v1963
    %v1966 = vadd.f32 %v1964, 1.0
    %v1967 = vadd.f32 %v1965, 1.0
    %v1968 = vmul.f32 %v1960, %v1966
    %v1969 = vmul.f32 %v1961, %v1967
    %v1970 = vld [vmem:[%s11] sm:$0xff]
    %v1971 = vld [vmem:[%s11 + $0x8] sm:$0xff]
    %v1972 = vld [vmem:[%s11 + $0x10] sm:$0xff]
    %v1973 = vld [vmem:[%s11 + $0x18] sm:$0xff]
    %v1974 = vld [vmem:[%s11 + $0x20] sm:$0xff]
    %v1975 = vld [vmem:[%s11 + $0x28] sm:$0xff]
    %v1976 = vld [vmem:[%s11 + $0x30] sm:$0xff]
    %v1977 = vld [vmem:[%s11 + $0x38] sm:$0xff]
    %v1978 = vld [vmem:[%s12] sm:$0x1]
    %v1980 = vlaneseq
    %v1981 = vshrl.u32 %v1980, 7
    %v1982 = vsub.s32 0, %v1981
    %v1983 = vrot.slane %v1978, %v1982
    %vm1985 = vcmask 523264
    %v1987 = vsel %vm1985, %v1968, 0
    %v1990 = vsel %vm1985, %v1969, 0
    %1992 = vmatprep.subr.mxu0 0.0
    %1993 = vmatpush1.msra.mxu0 0.0
    %1994 = vmatprep.subr.mxu0 0.0
    %1995 = vmatpush1.msra.mxu0 0.0
    %1996 = vmatprep.subr.mxu0 0.0
    %1997 = vmatpush1.msra.mxu0 0.0
    %1998 = vmatprep.subr.mxu0 0.0
    %1999 = vmatpush1.msra.mxu0 0.0
    %2000 = vmatprep.subr.mxu0 0.0
    %2001 = vmatpush1.msra.mxu0 0.0
    %2002 = vmatprep.subr.mxu0 0.0
    %2003 = vmatpush1.msra.mxu0 0.0
    %2004 = vmatprep.subr.mxu0 0.0
    %2005 = vmatpush1.msra.mxu0 0.0
    %2006 = vmatprep.subr.mxu0 0.0
    %2007 = vmatpush1.msra.mxu0 0.0
    %2008 = vmatprep.subr.mxu0 0.0
    %2009 = vmatpush1.msra.mxu0 %v1977
    %2010 = vmatprep.subr.mxu0 0.0
    %2011 = vmatpush1.msra.mxu0 %v1976
    %2012 = vmatprep.subr.mxu0 0.0
    %2013 = vmatpush1.msra.mxu0 %v1975
    %2014 = vmatprep.subr.mxu0 0.0
    %2015 = vmatpush1.msra.mxu0 %v1974
    %2016 = vmatprep.subr.mxu0 0.0
    %2017 = vmatpush1.msra.mxu0 %v1973
    %2018 = vmatprep.subr.mxu0 0.0
    %2019 = vmatpush1.msra.mxu0 %v1972
    %2020 = vmatprep.subr.mxu0 0.0
    %2021 = vmatpush1.msra.mxu0 %v1971
    %2022 = vmatprep.subr.mxu0 0.0
    %2023 = vmatpush1.msra.mxu0 %v1970
    %2024 = vmatprep.subr.mxu0 0.0
    %2025 = vmatpush2.msra.mxu0 0.0
    %2026 = vmatprep.subr.mxu0 0.0
    %2027 = vmatpush2.msra.mxu0 0.0
    %2028 = vmatprep.subr.mxu0 0.0
    %2029 = vmatpush2.msra.mxu0 0.0
    %2030 = vmatprep.subr.mxu0 0.0
    %2031 = vmatpush2.msra.mxu0 0.0
    %2032 = vmatprep.subr.mxu0 0.0
    %2033 = vmatpush2.msra.mxu0 0.0
    %2034 = vmatprep.subr.mxu0 0.0
    %2035 = vmatpush2.msra.mxu0 0.0
    %2036 = vmatprep.subr.mxu0 0.0
    %2037 = vmatpush2.msra.mxu0 0.0
    %2038 = vmatprep.subr.mxu0 0.0
    %2039 = vmatpush2.msra.mxu0 0.0
    %2040 = vmatprep.subr.mxu0 0.0
    %2041 = vmatpush2.msra.mxu0 0.0
    %2042 = vmatprep.subr.mxu0 0.0
    %2043 = vmatpush2.msra.mxu0 0.0
    %2044 = vmatprep.subr.mxu0 0.0
    %2045 = vmatpush2.msra.mxu0 0.0
    %2046 = vmatprep.subr.mxu0 0.0
    %2047 = vmatpush2.msra.mxu0 0.0
    %2048 = vmatprep.subr.mxu0 0.0
    %2049 = vmatpush2.msra.mxu0 0.0
    %2050 = vmatprep.subr.mxu0 0.0
    %2051 = vmatpush2.msra.mxu0 0.0
    %2052 = vmatprep.subr.mxu0 0.0
    %2053 = vmatpush2.msra.mxu0 0.0
    %2054 = vmatprep.subr.mxu0 0.0
    %2055 = vmatpush2.msra.mxu0 0.0
    %2056 = vmatprep.mubr.f32.mxu0 0.0
    %2057 = vmatmul.mubr.f32.gmra.mxu0 %v1987
    %v2058 = vpop.f32.mrf.mxu0
    %v2059 = vadd.f32 %v1983, %v2058
    %v2060 = vpop.f32.mrf.mxu0
    %2061 = vmatprep.mubr.f32.mxu0 0.0
    %2062 = vmatmul.mubr.f32.gmra.mxu0 %v1990
    %v2063 = vpop.f32.mrf.mxu0
    %v2064 = vadd.f32 %v1983, %v2063
    %v2065 = vpop.f32.mrf.mxu0
    %2066 = vdwg.mxu0
    %v2067 = vadd.f32 %v2059, %v1866
    %v2068 = vadd.f32 %v2064, %v1867
    %v2069 = vld [vmem:[%s13] sm:$0x1]
    %v2070 = vld [vmem:[%s14] sm:$0x1]
    %v2071 = vsel %vm76, %v2067, 0.0
    %2072 = vadd.xlane.f32.xlu0 %v2071
    %v2073 = vpop.xlane.xlu0 %2072
    %v2074 = vsel %vm76, %v2068, 0.0
    %2075 = vadd.xlane.f32.xlu0 %v2074
    %v2076 = vpop.xlane.xlu0 %2075
    %v2077 = vmul.f32 %v2073, %v1831
    %v2078 = vmul.f32 %v2076, %v1831
    %v2079 = vsub.f32 %v2067, %v2077
    %v2080 = vsub.f32 %v2068, %v2078
    %v2081 = vmul.f32 %v2079, %v2079
    %v2082 = vmul.f32 %v2080, %v2080
    %v2083 = vsel %vm76, %v2081, 0.0
    %2084 = vadd.xlane.f32.xlu0 %v2083
    %v2085 = vpop.xlane.xlu0 %2084
    %v2086 = vsel %vm76, %v2082, 0.0
    %2087 = vadd.xlane.f32.xlu0 %v2086
    %v2088 = vpop.xlane.xlu0 %2087
    %v2089 = vmul.f32 %v2085, %v1831
    %v2090 = vmul.f32 %v2088, %v1831
    %v2091 = vadd.f32 %v2089, 1e-05
    %v2092 = vadd.f32 %v2090, 1e-05
    %v2093 = vrsqrt.pop %v2091
    %v2094 = vrsqrt.pop %v2092
    %v2095 = vmul.f32 %v2079, %v2093
    %v2096 = vmul.f32 %v2080, %v2094
    %v2098 = vlaneseq
    %v2099 = vshrl.u32 %v2098, 7
    %v2100 = vsub.s32 0, %v2099
    %v2101 = vrot.slane %v2069, %v2100
    %v2103 = vmul.f32 %v2095, %v2101
    %v2104 = vmul.f32 %v2096, %v2101
    %v2106 = vlaneseq
    %v2107 = vshrl.u32 %v2106, 7
    %v2108 = vsub.s32 0, %v2107
    %v2109 = vrot.slane %v2070, %v2108
    %v2111 = vadd.f32 %v2103, %v2109
    %v2112 = vadd.f32 %v2104, %v2109
    %s2113 = scalar_lea.vmem %s3, 32
    %v2114 = vld [vmem:[%s2113] sm:$0xff]
    %v2115 = vld [vmem:[%s2113 + $0x8] sm:$0xff]
    %v2116 = vld [vmem:[%s2113 + $0x10] sm:$0xff]
    %v2117 = vld [vmem:[%s2113 + $0x18] sm:$0xff]
    %s2118 = scalar_lea.vmem %s4, 1
    %v2119 = vld [vmem:[%s2118] sm:$0x1]
    %s2120 = scalar_lea.vmem %s5, 32
    %v2121 = vld [vmem:[%s2120] sm:$0xff]
    %v2122 = vld [vmem:[%s2120 + $0x8] sm:$0xff]
    %v2123 = vld [vmem:[%s2120 + $0x10] sm:$0xff]
    %v2124 = vld [vmem:[%s2120 + $0x18] sm:$0xff]
    %s2125 = scalar_lea.vmem %s6, 1
    %v2126 = vld [vmem:[%s2125] sm:$0x1]
    %v2128 = vlaneseq
    %v2129 = vshrl.u32 %v2128, 7
    %v2130 = vsub.s32 0, %v2129
    %v2131 = vrot.slane %v2119, %v2130
    %v2134 = vsel %vm76, %v2111, 0
    %v2137 = vsel %vm76, %v2112, 0
    %2139 = vmatprep.subr.mxu0 0.0
    %2140 = vmatpush1.msra.mxu0 0.0
    %2141 = vmatprep.subr.mxu0 0.0
    %2142 = vmatpush1.msra.mxu0 0.0
    %2143 = vmatprep.subr.mxu0 0.0
    %2144 = vmatpush1.msra.mxu0 0.0
    %2145 = vmatprep.subr.mxu0 0.0
    %2146 = vmatpush1.msra.mxu0 0.0
    %2147 = vmatprep.subr.mxu0 0.0
    %2148 = vmatpush1.msra.mxu0 0.0
    %2149 = vmatprep.subr.mxu0 0.0
    %2150 = vmatpush1.msra.mxu0 0.0
    %2151 = vmatprep.subr.mxu0 0.0
    %2152 = vmatpush1.msra.mxu0 0.0
    %2153 = vmatprep.subr.mxu0 0.0
    %2154 = vmatpush1.msra.mxu0 0.0
    %2155 = vmatprep.subr.mxu0 0.0
    %2156 = vmatpush1.msra.mxu0 0.0
    %2157 = vmatprep.subr.mxu0 0.0
    %2158 = vmatpush1.msra.mxu0 0.0
    %2159 = vmatprep.subr.mxu0 0.0
    %2160 = vmatpush1.msra.mxu0 0.0
    %2161 = vmatprep.subr.mxu0 0.0
    %2162 = vmatpush1.msra.mxu0 0.0
    %2163 = vmatprep.subr.mxu0 0.0
    %2164 = vmatpush1.msra.mxu0 %v2117
    %2165 = vmatprep.subr.mxu0 0.0
    %2166 = vmatpush1.msra.mxu0 %v2116
    %2167 = vmatprep.subr.mxu0 0.0
    %2168 = vmatpush1.msra.mxu0 %v2115
    %2169 = vmatprep.subr.mxu0 0.0
    %2170 = vmatpush1.msra.mxu0 %v2114
    %2171 = vmatprep.subr.mxu0 0.0
    %2172 = vmatpush2.msra.mxu0 0.0
    %2173 = vmatprep.subr.mxu0 0.0
    %2174 = vmatpush2.msra.mxu0 0.0
    %2175 = vmatprep.subr.mxu0 0.0
    %2176 = vmatpush2.msra.mxu0 0.0
    %2177 = vmatprep.subr.mxu0 0.0
    %2178 = vmatpush2.msra.mxu0 0.0
    %2179 = vmatprep.subr.mxu0 0.0
    %2180 = vmatpush2.msra.mxu0 0.0
    %2181 = vmatprep.subr.mxu0 0.0
    %2182 = vmatpush2.msra.mxu0 0.0
    %2183 = vmatprep.subr.mxu0 0.0
    %2184 = vmatpush2.msra.mxu0 0.0
    %2185 = vmatprep.subr.mxu0 0.0
    %2186 = vmatpush2.msra.mxu0 0.0
    %2187 = vmatprep.subr.mxu0 0.0
    %2188 = vmatpush2.msra.mxu0 0.0
    %2189 = vmatprep.subr.mxu0 0.0
    %2190 = vmatpush2.msra.mxu0 0.0
    %2191 = vmatprep.subr.mxu0 0.0
    %2192 = vmatpush2.msra.mxu0 0.0
    %2193 = vmatprep.subr.mxu0 0.0
    %2194 = vmatpush2.msra.mxu0 0.0
    %2195 = vmatprep.subr.mxu0 0.0
    %2196 = vmatpush2.msra.mxu0 0.0
    %2197 = vmatprep.subr.mxu0 0.0
    %2198 = vmatpush2.msra.mxu0 0.0
    %2199 = vmatprep.subr.mxu0 0.0
    %2200 = vmatpush2.msra.mxu0 0.0
    %2201 = vmatprep.subr.mxu0 0.0
    %2202 = vmatpush2.msra.mxu0 0.0
    %2203 = vmatprep.mubr.f32.mxu0 0.0
    %2204 = vmatmul.mubr.f32.gmra.mxu0 %v2134
    %v2205 = vpop.f32.mrf.mxu0
    %v2206 = vadd.f32 %v2131, %v2205
    %v2207 = vpop.f32.mrf.mxu0
    %2208 = vmatprep.mubr.f32.mxu0 0.0
    %2209 = vmatmul.mubr.f32.gmra.mxu0 %v2137
    %v2210 = vpop.f32.mrf.mxu0
    %v2211 = vadd.f32 %v2131, %v2210
    %v2212 = vpop.f32.mrf.mxu0
    %2213 = vdwg.mxu0
    %2215 = vrot.lane.b32.xlu0 %v2206, 96
    %v2216 = vpop.permute.xlu0 %2215
    %v2217 = vsel %vm161, %v2206, 0
    %v2219 = vsel %vm161, %v2216, 0
    %2221 = vmatprep.subr.mxu0 0.0
    %2222 = vmatpush1.xpose.msra.mxu0 0.0
    %2223 = vmatprep.subr.mxu0 0.0
    %2224 = vmatpush1.xpose.msra.mxu0 0.0
    %2225 = vmatprep.subr.mxu0 0.0
    %2226 = vmatpush1.xpose.msra.mxu0 0.0
    %2227 = vmatprep.subr.mxu0 0.0
    %2228 = vmatpush1.xpose.msra.mxu0 0.0
    %2229 = vmatprep.subr.mxu0 0.0
    %2230 = vmatpush1.xpose.msra.mxu0 0.0
    %2231 = vmatprep.subr.mxu0 0.0
    %2232 = vmatpush1.xpose.msra.mxu0 0.0
    %2233 = vmatprep.subr.mxu0 0.0
    %2234 = vmatpush1.xpose.msra.mxu0 0.0
    %2235 = vmatprep.subr.mxu0 0.0
    %2236 = vmatpush1.xpose.msra.mxu0 0.0
    %2237 = vmatprep.subr.mxu0 0.0
    %2238 = vmatpush1.xpose.msra.mxu0 0.0
    %2239 = vmatprep.subr.mxu0 0.0
    %2240 = vmatpush1.xpose.msra.mxu0 0.0
    %2241 = vmatprep.subr.mxu0 0.0
    %2242 = vmatpush1.xpose.msra.mxu0 0.0
    %2243 = vmatprep.subr.mxu0 0.0
    %2244 = vmatpush1.xpose.msra.mxu0 0.0
    %2245 = vmatprep.subr.mxu0 0.0
    %2246 = vmatpush1.xpose.msra.mxu0 0.0
    %2247 = vmatprep.subr.mxu0 0.0
    %2248 = vmatpush1.xpose.msra.mxu0 0.0
    %2249 = vmatprep.subr.mxu0 0.0
    %2250 = vmatpush1.xpose.msra.mxu0 0.0
    %2251 = vmatprep.subr.mxu0 0.0
    %2252 = vmatpush1.xpose.msra.mxu0 %v2219
    %2253 = vmatprep.subr.mxu0 0.0
    %2254 = vmatpush2.xpose.msra.mxu0 0.0
    %2255 = vmatprep.subr.mxu0 0.0
    %2256 = vmatpush2.xpose.msra.mxu0 0.0
    %2257 = vmatprep.subr.mxu0 0.0
    %2258 = vmatpush2.xpose.msra.mxu0 0.0
    %2259 = vmatprep.subr.mxu0 0.0
    %2260 = vmatpush2.xpose.msra.mxu0 0.0
    %2261 = vmatprep.subr.mxu0 0.0
    %2262 = vmatpush2.xpose.msra.mxu0 0.0
    %2263 = vmatprep.subr.mxu0 0.0
    %2264 = vmatpush2.xpose.msra.mxu0 0.0
    %2265 = vmatprep.subr.mxu0 0.0
    %2266 = vmatpush2.xpose.msra.mxu0 0.0
    %2267 = vmatprep.subr.mxu0 0.0
    %2268 = vmatpush2.xpose.msra.mxu0 0.0
    %2269 = vmatprep.subr.mxu0 0.0
    %2270 = vmatpush2.xpose.msra.mxu0 0.0
    %2271 = vmatprep.subr.mxu0 0.0
    %2272 = vmatpush2.xpose.msra.mxu0 0.0
    %2273 = vmatprep.subr.mxu0 0.0
    %2274 = vmatpush2.xpose.msra.mxu0 0.0
    %2275 = vmatprep.subr.mxu0 0.0
    %2276 = vmatpush2.xpose.msra.mxu0 0.0
    %2277 = vmatprep.subr.mxu0 0.0
    %2278 = vmatpush2.xpose.msra.mxu0 0.0
    %2279 = vmatprep.subr.mxu0 0.0
    %2280 = vmatpush2.xpose.msra.mxu0 0.0
    %2281 = vmatprep.subr.mxu0 0.0
    %2282 = vmatpush2.xpose.msra.mxu0 0.0
    %2283 = vmatprep.subr.mxu0 0.0
    %2284 = vmatpush2.xpose.msra.mxu0 0.0
    %2285 = vmatprep.mubr.f32.mxu0 0.0
    %2286 = vmatmul.mubr.f32.gmra.mxu0 %v2217
    %v2287 = vpop.f32.mrf.mxu0
    %v2288 = vadd.f32 0.0, %v2287
    %v2289 = vpop.f32.mrf.mxu0
    %2290 = vdwg.mxu0
    %2292 = vrot.lane.b32.xlu0 %v2211, 96
    %v2293 = vpop.permute.xlu0 %2292
    %v2294 = vsel %vm161, %v2211, 0
    %v2296 = vsel %vm161, %v2293, 0
    %2298 = vmatprep.subr.mxu0 0.0
    %2299 = vmatpush1.xpose.msra.mxu0 0.0
    %2300 = vmatprep.subr.mxu0 0.0
    %2301 = vmatpush1.xpose.msra.mxu0 0.0
    %2302 = vmatprep.subr.mxu0 0.0
    %2303 = vmatpush1.xpose.msra.mxu0 0.0
    %2304 = vmatprep.subr.mxu0 0.0
    %2305 = vmatpush1.xpose.msra.mxu0 0.0
    %2306 = vmatprep.subr.mxu0 0.0
    %2307 = vmatpush1.xpose.msra.mxu0 0.0
    %2308 = vmatprep.subr.mxu0 0.0
    %2309 = vmatpush1.xpose.msra.mxu0 0.0
    %2310 = vmatprep.subr.mxu0 0.0
    %2311 = vmatpush1.xpose.msra.mxu0 0.0
    %2312 = vmatprep.subr.mxu0 0.0
    %2313 = vmatpush1.xpose.msra.mxu0 0.0
    %2314 = vmatprep.subr.mxu0 0.0
    %2315 = vmatpush1.xpose.msra.mxu0 0.0
    %2316 = vmatprep.subr.mxu0 0.0
    %2317 = vmatpush1.xpose.msra.mxu0 0.0
    %2318 = vmatprep.subr.mxu0 0.0
    %2319 = vmatpush1.xpose.msra.mxu0 0.0
    %2320 = vmatprep.subr.mxu0 0.0
    %2321 = vmatpush1.xpose.msra.mxu0 0.0
    %2322 = vmatprep.subr.mxu0 0.0
    %2323 = vmatpush1.xpose.msra.mxu0 0.0
    %2324 = vmatprep.subr.mxu0 0.0
    %2325 = vmatpush1.xpose.msra.mxu0 0.0
    %2326 = vmatprep.subr.mxu0 0.0
    %2327 = vmatpush1.xpose.msra.mxu0 0.0
    %2328 = vmatprep.subr.mxu0 0.0
    %2329 = vmatpush1.xpose.msra.mxu0 %v2296
    %2330 = vmatprep.subr.mxu0 0.0
    %2331 = vmatpush2.xpose.msra.mxu0 0.0
    %2332 = vmatprep.subr.mxu0 0.0
    %2333 = vmatpush2.xpose.msra.mxu0 0.0
    %2334 = vmatprep.subr.mxu0 0.0
    %2335 = vmatpush2.xpose.msra.mxu0 0.0
    %2336 = vmatprep.subr.mxu0 0.0
    %2337 = vmatpush2.xpose.msra.mxu0 0.0
    %2338 = vmatprep.subr.mxu0 0.0
    %2339 = vmatpush2.xpose.msra.mxu0 0.0
    %2340 = vmatprep.subr.mxu0 0.0
    %2341 = vmatpush2.xpose.msra.mxu0 0.0
    %2342 = vmatprep.subr.mxu0 0.0
    %2343 = vmatpush2.xpose.msra.mxu0 0.0
    %2344 = vmatprep.subr.mxu0 0.0
    %2345 = vmatpush2.xpose.msra.mxu0 0.0
    %2346 = vmatprep.subr.mxu0 0.0
    %2347 = vmatpush2.xpose.msra.mxu0 0.0
    %2348 = vmatprep.subr.mxu0 0.0
    %2349 = vmatpush2.xpose.msra.mxu0 0.0
    %2350 = vmatprep.subr.mxu0 0.0
    %2351 = vmatpush2.xpose.msra.mxu0 0.0
    %2352 = vmatprep.subr.mxu0 0.0
    %2353 = vmatpush2.xpose.msra.mxu0 0.0
    %2354 = vmatprep.subr.mxu0 0.0
    %2355 = vmatpush2.xpose.msra.mxu0 0.0
    %2356 = vmatprep.subr.mxu0 0.0
    %2357 = vmatpush2.xpose.msra.mxu0 0.0
    %2358 = vmatprep.subr.mxu0 0.0
    %2359 = vmatpush2.xpose.msra.mxu0 0.0
    %2360 = vmatprep.subr.mxu0 0.0
    %2361 = vmatpush2.xpose.msra.mxu0 0.0
    %2362 = vmatprep.mubr.f32.mxu0 0.0
    %2363 = vmatmul.mubr.f32.gmra.mxu0 %v2294
    %v2364 = vpop.f32.mrf.mxu0
    %v2365 = vadd.f32 0.0, %v2364
    %v2366 = vpop.f32.mrf.mxu0
    %2367 = vdwg.mxu0
    %v2368 = vmul.f32 %v2288, 0.35355338
    %v2369 = vmul.f32 %v2365, 0.35355338
    %v2370 = vsel %vm161, %v2368, -inf
    %2371 = vmax.xlane.f32.xlu0 %v2370
    %v2372 = vpop.xlane.xlu0 %2371
    %v2373 = vsel %vm161, %v2369, -inf
    %2374 = vmax.xlane.f32.xlu0 %v2373
    %v2375 = vpop.xlane.xlu0 %2374
    %v2376 = vsub.f32 %v2368, %v2372
    %v2377 = vsub.f32 %v2369, %v2375
    %v2378 = vmul.f32 %v2376, 1.442695
    %v2379 = vpow.pop %v2378
    %v2380 = vmul.f32 %v2377, 1.442695
    %v2381 = vpow.pop %v2380
    %v2382 = vsel %vm161, %v2379, 0.0
    %2383 = vadd.xlane.f32.xlu0 %v2382
    %v2384 = vpop.xlane.xlu0 %2383
    %v2385 = vsel %vm161, %v2381, 0.0
    %2386 = vadd.xlane.f32.xlu0 %v2385
    %v2387 = vpop.xlane.xlu0 %2386
    %v2388 = vrcp.pop %v2384
    %v2389 = vrcp.pop %v2387
    %v2390 = vmul.f32 %v2379, %v2388
    %v2391 = vmul.f32 %v2381, %v2389
    %2392 = vrot.lane.b32.xlu0 %v2206, 64
    %v2393 = vpop.permute.xlu0 %2392
    %v2396 = vsel %vm161, %v2390, 0
    %2398 = vmatprep.subr.mxu0 0.0
    %2399 = vmatpush1.msra.mxu0 0.0
    %2400 = vmatprep.subr.mxu0 0.0
    %2401 = vmatpush1.msra.mxu0 0.0
    %2402 = vmatprep.subr.mxu0 0.0
    %2403 = vmatpush1.msra.mxu0 0.0
    %2404 = vmatprep.subr.mxu0 0.0
    %2405 = vmatpush1.msra.mxu0 0.0
    %2406 = vmatprep.subr.mxu0 0.0
    %2407 = vmatpush1.msra.mxu0 0.0
    %2408 = vmatprep.subr.mxu0 0.0
    %2409 = vmatpush1.msra.mxu0 0.0
    %2410 = vmatprep.subr.mxu0 0.0
    %2411 = vmatpush1.msra.mxu0 0.0
    %2412 = vmatprep.subr.mxu0 0.0
    %2413 = vmatpush1.msra.mxu0 0.0
    %2414 = vmatprep.subr.mxu0 0.0
    %2415 = vmatpush1.msra.mxu0 0.0
    %2416 = vmatprep.subr.mxu0 0.0
    %2417 = vmatpush1.msra.mxu0 0.0
    %2418 = vmatprep.subr.mxu0 0.0
    %2419 = vmatpush1.msra.mxu0 0.0
    %2420 = vmatprep.subr.mxu0 0.0
    %2421 = vmatpush1.msra.mxu0 0.0
    %2422 = vmatprep.subr.mxu0 0.0
    %2423 = vmatpush1.msra.mxu0 0.0
    %2424 = vmatprep.subr.mxu0 0.0
    %2425 = vmatpush1.msra.mxu0 0.0
    %2426 = vmatprep.subr.mxu0 0.0
    %2427 = vmatpush1.msra.mxu0 0.0
    %2428 = vmatprep.subr.mxu0 0.0
    %2429 = vmatpush1.msra.mxu0 %v2393
    %2430 = vmatprep.subr.mxu0 0.0
    %2431 = vmatpush2.msra.mxu0 0.0
    %2432 = vmatprep.subr.mxu0 0.0
    %2433 = vmatpush2.msra.mxu0 0.0
    %2434 = vmatprep.subr.mxu0 0.0
    %2435 = vmatpush2.msra.mxu0 0.0
    %2436 = vmatprep.subr.mxu0 0.0
    %2437 = vmatpush2.msra.mxu0 0.0
    %2438 = vmatprep.subr.mxu0 0.0
    %2439 = vmatpush2.msra.mxu0 0.0
    %2440 = vmatprep.subr.mxu0 0.0
    %2441 = vmatpush2.msra.mxu0 0.0
    %2442 = vmatprep.subr.mxu0 0.0
    %2443 = vmatpush2.msra.mxu0 0.0
    %2444 = vmatprep.subr.mxu0 0.0
    %2445 = vmatpush2.msra.mxu0 0.0
    %2446 = vmatprep.subr.mxu0 0.0
    %2447 = vmatpush2.msra.mxu0 0.0
    %2448 = vmatprep.subr.mxu0 0.0
    %2449 = vmatpush2.msra.mxu0 0.0
    %2450 = vmatprep.subr.mxu0 0.0
    %2451 = vmatpush2.msra.mxu0 0.0
    %2452 = vmatprep.subr.mxu0 0.0
    %2453 = vmatpush2.msra.mxu0 0.0
    %2454 = vmatprep.subr.mxu0 0.0
    %2455 = vmatpush2.msra.mxu0 0.0
    %2456 = vmatprep.subr.mxu0 0.0
    %2457 = vmatpush2.msra.mxu0 0.0
    %2458 = vmatprep.subr.mxu0 0.0
    %2459 = vmatpush2.msra.mxu0 0.0
    %2460 = vmatprep.subr.mxu0 0.0
    %2461 = vmatpush2.msra.mxu0 0.0
    %2462 = vmatprep.mubr.f32.mxu0 0.0
    %2463 = vmatmul.mubr.f32.gmra.mxu0 %v2396
    %v2464 = vpop.f32.mrf.mxu0
    %v2465 = vadd.f32 0.0, %v2464
    %v2466 = vpop.f32.mrf.mxu0
    %2467 = vdwg.mxu0
    %2468 = vrot.lane.b32.xlu0 %v2211, 64
    %v2469 = vpop.permute.xlu0 %2468
    %v2472 = vsel %vm161, %v2391, 0
    %2474 = vmatprep.subr.mxu0 0.0
    %2475 = vmatpush1.msra.mxu0 0.0
    %2476 = vmatprep.subr.mxu0 0.0
    %2477 = vmatpush1.msra.mxu0 0.0
    %2478 = vmatprep.subr.mxu0 0.0
    %2479 = vmatpush1.msra.mxu0 0.0
    %2480 = vmatprep.subr.mxu0 0.0
    %2481 = vmatpush1.msra.mxu0 0.0
    %2482 = vmatprep.subr.mxu0 0.0
    %2483 = vmatpush1.msra.mxu0 0.0
    %2484 = vmatprep.subr.mxu0 0.0
    %2485 = vmatpush1.msra.mxu0 0.0
    %2486 = vmatprep.subr.mxu0 0.0
    %2487 = vmatpush1.msra.mxu0 0.0
    %2488 = vmatprep.subr.mxu0 0.0
    %2489 = vmatpush1.msra.mxu0 0.0
    %2490 = vmatprep.subr.mxu0 0.0
    %2491 = vmatpush1.msra.mxu0 0.0
    %2492 = vmatprep.subr.mxu0 0.0
    %2493 = vmatpush1.msra.mxu0 0.0
    %2494 = vmatprep.subr.mxu0 0.0
    %2495 = vmatpush1.msra.mxu0 0.0
    %2496 = vmatprep.subr.mxu0 0.0
    %2497 = vmatpush1.msra.mxu0 0.0
    %2498 = vmatprep.subr.mxu0 0.0
    %2499 = vmatpush1.msra.mxu0 0.0
    %2500 = vmatprep.subr.mxu0 0.0
    %2501 = vmatpush1.msra.mxu0 0.0
    %2502 = vmatprep.subr.mxu0 0.0
    %2503 = vmatpush1.msra.mxu0 0.0
    %2504 = vmatprep.subr.mxu0 0.0
    %2505 = vmatpush1.msra.mxu0 %v2469
    %2506 = vmatprep.subr.mxu0 0.0
    %2507 = vmatpush2.msra.mxu0 0.0
    %2508 = vmatprep.subr.mxu0 0.0
    %2509 = vmatpush2.msra.mxu0 0.0
    %2510 = vmatprep.subr.mxu0 0.0
    %2511 = vmatpush2.msra.mxu0 0.0
    %2512 = vmatprep.subr.mxu0 0.0
    %2513 = vmatpush2.msra.mxu0 0.0
    %2514 = vmatprep.subr.mxu0 0.0
    %2515 = vmatpush2.msra.mxu0 0.0
    %2516 = vmatprep.subr.mxu0 0.0
    %2517 = vmatpush2.msra.mxu0 0.0
    %2518 = vmatprep.subr.mxu0 0.0
    %2519 = vmatpush2.msra.mxu0 0.0
    %2520 = vmatprep.subr.mxu0 0.0
    %2521 = vmatpush2.msra.mxu0 0.0
    %2522 = vmatprep.subr.mxu0 0.0
    %2523 = vmatpush2.msra.mxu0 0.0
    %2524 = vmatprep.subr.mxu0 0.0
    %2525 = vmatpush2.msra.mxu0 0.0
    %2526 = vmatprep.subr.mxu0 0.0
    %2527 = vmatpush2.msra.mxu0 0.0
    %2528 = vmatprep.subr.mxu0 0.0
    %2529 = vmatpush2.msra.mxu0 0.0
    %2530 = vmatprep.subr.mxu0 0.0
    %2531 = vmatpush2.msra.mxu0 0.0
    %2532 = vmatprep.subr.mxu0 0.0
    %2533 = vmatpush2.msra.mxu0 0.0
    %2534 = vmatprep.subr.mxu0 0.0
    %2535 = vmatpush2.msra.mxu0 0.0
    %2536 = vmatprep.subr.mxu0 0.0
    %2537 = vmatpush2.msra.mxu0 0.0
    %2538 = vmatprep.mubr.f32.mxu0 0.0
    %2539 = vmatmul.mubr.f32.gmra.mxu0 %v2472
    %v2540 = vpop.f32.mrf.mxu0
    %v2541 = vadd.f32 0.0, %v2540
    %v2542 = vpop.f32.mrf.mxu0
    %2543 = vdwg.mxu0
    %2544 = vrot.lane.b32.xlu0 %v2206, 120
    %v2545 = vpop.permute.xlu0 %2544
    %2546 = vrot.lane.b32.xlu0 %v2206, 88
    %v2547 = vpop.permute.xlu0 %2546
    %v2548 = vsel %vm161, %v2545, 0
    %v2550 = vsel %vm161, %v2547, 0
    %2552 = vmatprep.subr.mxu0 0.0
    %2553 = vmatpush1.xpose.msra.mxu0 0.0
    %2554 = vmatprep.subr.mxu0 0.0
    %2555 = vmatpush1.xpose.msra.mxu0 0.0
    %2556 = vmatprep.subr.mxu0 0.0
    %2557 = vmatpush1.xpose.msra.mxu0 0.0
    %2558 = vmatprep.subr.mxu0 0.0
    %2559 = vmatpush1.xpose.msra.mxu0 0.0
    %2560 = vmatprep.subr.mxu0 0.0
    %2561 = vmatpush1.xpose.msra.mxu0 0.0
    %2562 = vmatprep.subr.mxu0 0.0
    %2563 = vmatpush1.xpose.msra.mxu0 0.0
    %2564 = vmatprep.subr.mxu0 0.0
    %2565 = vmatpush1.xpose.msra.mxu0 0.0
    %2566 = vmatprep.subr.mxu0 0.0
    %2567 = vmatpush1.xpose.msra.mxu0 0.0
    %2568 = vmatprep.subr.mxu0 0.0
    %2569 = vmatpush1.xpose.msra.mxu0 0.0
    %2570 = vmatprep.subr.mxu0 0.0
    %2571 = vmatpush1.xpose.msra.mxu0 0.0
    %2572 = vmatprep.subr.mxu0 0.0
    %2573 = vmatpush1.xpose.msra.mxu0 0.0
    %2574 = vmatprep.subr.mxu0 0.0
    %2575 = vmatpush1.xpose.msra.mxu0 0.0
    %2576 = vmatprep.subr.mxu0 0.0
    %2577 = vmatpush1.xpose.msra.mxu0 0.0
    %2578 = vmatprep.subr.mxu0 0.0
    %2579 = vmatpush1.xpose.msra.mxu0 0.0
    %2580 = vmatprep.subr.mxu0 0.0
    %2581 = vmatpush1.xpose.msra.mxu0 0.0
    %2582 = vmatprep.subr.mxu0 0.0
    %2583 = vmatpush1.xpose.msra.mxu0 %v2550
    %2584 = vmatprep.subr.mxu0 0.0
    %2585 = vmatpush2.xpose.msra.mxu0 0.0
    %2586 = vmatprep.subr.mxu0 0.0
    %2587 = vmatpush2.xpose.msra.mxu0 0.0
    %2588 = vmatprep.subr.mxu0 0.0
    %2589 = vmatpush2.xpose.msra.mxu0 0.0
    %2590 = vmatprep.subr.mxu0 0.0
    %2591 = vmatpush2.xpose.msra.mxu0 0.0
    %2592 = vmatprep.subr.mxu0 0.0
    %2593 = vmatpush2.xpose.msra.mxu0 0.0
    %2594 = vmatprep.subr.mxu0 0.0
    %2595 = vmatpush2.xpose.msra.mxu0 0.0
    %2596 = vmatprep.subr.mxu0 0.0
    %2597 = vmatpush2.xpose.msra.mxu0 0.0
    %2598 = vmatprep.subr.mxu0 0.0
    %2599 = vmatpush2.xpose.msra.mxu0 0.0
    %2600 = vmatprep.subr.mxu0 0.0
    %2601 = vmatpush2.xpose.msra.mxu0 0.0
    %2602 = vmatprep.subr.mxu0 0.0
    %2603 = vmatpush2.xpose.msra.mxu0 0.0
    %2604 = vmatprep.subr.mxu0 0.0
    %2605 = vmatpush2.xpose.msra.mxu0 0.0
    %2606 = vmatprep.subr.mxu0 0.0
    %2607 = vmatpush2.xpose.msra.mxu0 0.0
    %2608 = vmatprep.subr.mxu0 0.0
    %2609 = vmatpush2.xpose.msra.mxu0 0.0
    %2610 = vmatprep.subr.mxu0 0.0
    %2611 = vmatpush2.xpose.msra.mxu0 0.0
    %2612 = vmatprep.subr.mxu0 0.0
    %2613 = vmatpush2.xpose.msra.mxu0 0.0
    %2614 = vmatprep.subr.mxu0 0.0
    %2615 = vmatpush2.xpose.msra.mxu0 0.0
    %2616 = vmatprep.mubr.f32.mxu0 0.0
    %2617 = vmatmul.mubr.f32.gmra.mxu0 %v2548
    %v2618 = vpop.f32.mrf.mxu0
    %v2619 = vadd.f32 0.0, %v2618
    %v2620 = vpop.f32.mrf.mxu0
    %2621 = vdwg.mxu0
    %2622 = vrot.lane.b32.xlu0 %v2211, 120
    %v2623 = vpop.permute.xlu0 %2622
    %2624 = vrot.lane.b32.xlu0 %v2211, 88
    %v2625 = vpop.permute.xlu0 %2624
    %v2626 = vsel %vm161, %v2623, 0
    %v2628 = vsel %vm161, %v2625, 0
    %2630 = vmatprep.subr.mxu0 0.0
    %2631 = vmatpush1.xpose.msra.mxu0 0.0
    %2632 = vmatprep.subr.mxu0 0.0
    %2633 = vmatpush1.xpose.msra.mxu0 0.0
    %2634 = vmatprep.subr.mxu0 0.0
    %2635 = vmatpush1.xpose.msra.mxu0 0.0
    %2636 = vmatprep.subr.mxu0 0.0
    %2637 = vmatpush1.xpose.msra.mxu0 0.0
    %2638 = vmatprep.subr.mxu0 0.0
    %2639 = vmatpush1.xpose.msra.mxu0 0.0
    %2640 = vmatprep.subr.mxu0 0.0
    %2641 = vmatpush1.xpose.msra.mxu0 0.0
    %2642 = vmatprep.subr.mxu0 0.0
    %2643 = vmatpush1.xpose.msra.mxu0 0.0
    %2644 = vmatprep.subr.mxu0 0.0
    %2645 = vmatpush1.xpose.msra.mxu0 0.0
    %2646 = vmatprep.subr.mxu0 0.0
    %2647 = vmatpush1.xpose.msra.mxu0 0.0
    %2648 = vmatprep.subr.mxu0 0.0
    %2649 = vmatpush1.xpose.msra.mxu0 0.0
    %2650 = vmatprep.subr.mxu0 0.0
    %2651 = vmatpush1.xpose.msra.mxu0 0.0
    %2652 = vmatprep.subr.mxu0 0.0
    %2653 = vmatpush1.xpose.msra.mxu0 0.0
    %2654 = vmatprep.subr.mxu0 0.0
    %2655 = vmatpush1.xpose.msra.mxu0 0.0
    %2656 = vmatprep.subr.mxu0 0.0
    %2657 = vmatpush1.xpose.msra.mxu0 0.0
    %2658 = vmatprep.subr.mxu0 0.0
    %2659 = vmatpush1.xpose.msra.mxu0 0.0
    %2660 = vmatprep.subr.mxu0 0.0
    %2661 = vmatpush1.xpose.msra.mxu0 %v2628
    %2662 = vmatprep.subr.mxu0 0.0
    %2663 = vmatpush2.xpose.msra.mxu0 0.0
    %2664 = vmatprep.subr.mxu0 0.0
    %2665 = vmatpush2.xpose.msra.mxu0 0.0
    %2666 = vmatprep.subr.mxu0 0.0
    %2667 = vmatpush2.xpose.msra.mxu0 0.0
    %2668 = vmatprep.subr.mxu0 0.0
    %2669 = vmatpush2.xpose.msra.mxu0 0.0
    %2670 = vmatprep.subr.mxu0 0.0
    %2671 = vmatpush2.xpose.msra.mxu0 0.0
    %2672 = vmatprep.subr.mxu0 0.0
    %2673 = vmatpush2.xpose.msra.mxu0 0.0
    %2674 = vmatprep.subr.mxu0 0.0
    %2675 = vmatpush2.xpose.msra.mxu0 0.0
    %2676 = vmatprep.subr.mxu0 0.0
    %2677 = vmatpush2.xpose.msra.mxu0 0.0
    %2678 = vmatprep.subr.mxu0 0.0
    %2679 = vmatpush2.xpose.msra.mxu0 0.0
    %2680 = vmatprep.subr.mxu0 0.0
    %2681 = vmatpush2.xpose.msra.mxu0 0.0
    %2682 = vmatprep.subr.mxu0 0.0
    %2683 = vmatpush2.xpose.msra.mxu0 0.0
    %2684 = vmatprep.subr.mxu0 0.0
    %2685 = vmatpush2.xpose.msra.mxu0 0.0
    %2686 = vmatprep.subr.mxu0 0.0
    %2687 = vmatpush2.xpose.msra.mxu0 0.0
    %2688 = vmatprep.subr.mxu0 0.0
    %2689 = vmatpush2.xpose.msra.mxu0 0.0
    %2690 = vmatprep.subr.mxu0 0.0
    %2691 = vmatpush2.xpose.msra.mxu0 0.0
    %2692 = vmatprep.subr.mxu0 0.0
    %2693 = vmatpush2.xpose.msra.mxu0 0.0
    %2694 = vmatprep.mubr.f32.mxu0 0.0
    %2695 = vmatmul.mubr.f32.gmra.mxu0 %v2626
    %v2696 = vpop.f32.mrf.mxu0
    %v2697 = vadd.f32 0.0, %v2696
    %v2698 = vpop.f32.mrf.mxu0
    %2699 = vdwg.mxu0
    %v2700 = vmul.f32 %v2619, 0.35355338
    %v2701 = vmul.f32 %v2697, 0.35355338
    %v2702 = vsel %vm161, %v2700, -inf
    %2703 = vmax.xlane.f32.xlu0 %v2702
    %v2704 = vpop.xlane.xlu0 %2703
    %v2705 = vsel %vm161, %v2701, -inf
    %2706 = vmax.xlane.f32.xlu0 %v2705
    %v2707 = vpop.xlane.xlu0 %2706
    %v2708 = vsub.f32 %v2700, %v2704
    %v2709 = vsub.f32 %v2701, %v2707
    %v2710 = vmul.f32 %v2708, 1.442695
    %v2711 = vpow.pop %v2710
    %v2712 = vmul.f32 %v2709, 1.442695
    %v2713 = vpow.pop %v2712
    %v2714 = vsel %vm161, %v2711, 0.0
    %2715 = vadd.xlane.f32.xlu0 %v2714
    %v2716 = vpop.xlane.xlu0 %2715
    %v2717 = vsel %vm161, %v2713, 0.0
    %2718 = vadd.xlane.f32.xlu0 %v2717
    %v2719 = vpop.xlane.xlu0 %2718
    %v2720 = vrcp.pop %v2716
    %v2721 = vrcp.pop %v2719
    %v2722 = vmul.f32 %v2711, %v2720
    %v2723 = vmul.f32 %v2713, %v2721
    %2724 = vrot.lane.b32.xlu0 %v2206, 56
    %v2725 = vpop.permute.xlu0 %2724
    %v2728 = vsel %vm161, %v2722, 0
    %2730 = vmatprep.subr.mxu0 0.0
    %2731 = vmatpush1.msra.mxu0 0.0
    %2732 = vmatprep.subr.mxu0 0.0
    %2733 = vmatpush1.msra.mxu0 0.0
    %2734 = vmatprep.subr.mxu0 0.0
    %2735 = vmatpush1.msra.mxu0 0.0
    %2736 = vmatprep.subr.mxu0 0.0
    %2737 = vmatpush1.msra.mxu0 0.0
    %2738 = vmatprep.subr.mxu0 0.0
    %2739 = vmatpush1.msra.mxu0 0.0
    %2740 = vmatprep.subr.mxu0 0.0
    %2741 = vmatpush1.msra.mxu0 0.0
    %2742 = vmatprep.subr.mxu0 0.0
    %2743 = vmatpush1.msra.mxu0 0.0
    %2744 = vmatprep.subr.mxu0 0.0
    %2745 = vmatpush1.msra.mxu0 0.0
    %2746 = vmatprep.subr.mxu0 0.0
    %2747 = vmatpush1.msra.mxu0 0.0
    %2748 = vmatprep.subr.mxu0 0.0
    %2749 = vmatpush1.msra.mxu0 0.0
    %2750 = vmatprep.subr.mxu0 0.0
    %2751 = vmatpush1.msra.mxu0 0.0
    %2752 = vmatprep.subr.mxu0 0.0
    %2753 = vmatpush1.msra.mxu0 0.0
    %2754 = vmatprep.subr.mxu0 0.0
    %2755 = vmatpush1.msra.mxu0 0.0
    %2756 = vmatprep.subr.mxu0 0.0
    %2757 = vmatpush1.msra.mxu0 0.0
    %2758 = vmatprep.subr.mxu0 0.0
    %2759 = vmatpush1.msra.mxu0 0.0
    %2760 = vmatprep.subr.mxu0 0.0
    %2761 = vmatpush1.msra.mxu0 %v2725
    %2762 = vmatprep.subr.mxu0 0.0
    %2763 = vmatpush2.msra.mxu0 0.0
    %2764 = vmatprep.subr.mxu0 0.0
    %2765 = vmatpush2.msra.mxu0 0.0
    %2766 = vmatprep.subr.mxu0 0.0
    %2767 = vmatpush2.msra.mxu0 0.0
    %2768 = vmatprep.subr.mxu0 0.0
    %2769 = vmatpush2.msra.mxu0 0.0
    %2770 = vmatprep.subr.mxu0 0.0
    %2771 = vmatpush2.msra.mxu0 0.0
    %2772 = vmatprep.subr.mxu0 0.0
    %2773 = vmatpush2.msra.mxu0 0.0
    %2774 = vmatprep.subr.mxu0 0.0
    %2775 = vmatpush2.msra.mxu0 0.0
    %2776 = vmatprep.subr.mxu0 0.0
    %2777 = vmatpush2.msra.mxu0 0.0
    %2778 = vmatprep.subr.mxu0 0.0
    %2779 = vmatpush2.msra.mxu0 0.0
    %2780 = vmatprep.subr.mxu0 0.0
    %2781 = vmatpush2.msra.mxu0 0.0
    %2782 = vmatprep.subr.mxu0 0.0
    %2783 = vmatpush2.msra.mxu0 0.0
    %2784 = vmatprep.subr.mxu0 0.0
    %2785 = vmatpush2.msra.mxu0 0.0
    %2786 = vmatprep.subr.mxu0 0.0
    %2787 = vmatpush2.msra.mxu0 0.0
    %2788 = vmatprep.subr.mxu0 0.0
    %2789 = vmatpush2.msra.mxu0 0.0
    %2790 = vmatprep.subr.mxu0 0.0
    %2791 = vmatpush2.msra.mxu0 0.0
    %2792 = vmatprep.subr.mxu0 0.0
    %2793 = vmatpush2.msra.mxu0 0.0
    %2794 = vmatprep.mubr.f32.mxu0 0.0
    %2795 = vmatmul.mubr.f32.gmra.mxu0 %v2728
    %v2796 = vpop.f32.mrf.mxu0
    %v2797 = vadd.f32 0.0, %v2796
    %v2798 = vpop.f32.mrf.mxu0
    %2799 = vdwg.mxu0
    %2800 = vrot.lane.b32.xlu0 %v2211, 56
    %v2801 = vpop.permute.xlu0 %2800
    %v2804 = vsel %vm161, %v2723, 0
    %2806 = vmatprep.subr.mxu0 0.0
    %2807 = vmatpush1.msra.mxu0 0.0
    %2808 = vmatprep.subr.mxu0 0.0
    %2809 = vmatpush1.msra.mxu0 0.0
    %2810 = vmatprep.subr.mxu0 0.0
    %2811 = vmatpush1.msra.mxu0 0.0
    %2812 = vmatprep.subr.mxu0 0.0
    %2813 = vmatpush1.msra.mxu0 0.0
    %2814 = vmatprep.subr.mxu0 0.0
    %2815 = vmatpush1.msra.mxu0 0.0
    %2816 = vmatprep.subr.mxu0 0.0
    %2817 = vmatpush1.msra.mxu0 0.0
    %2818 = vmatprep.subr.mxu0 0.0
    %2819 = vmatpush1.msra.mxu0 0.0
    %2820 = vmatprep.subr.mxu0 0.0
    %2821 = vmatpush1.msra.mxu0 0.0
    %2822 = vmatprep.subr.mxu0 0.0
    %2823 = vmatpush1.msra.mxu0 0.0
    %2824 = vmatprep.subr.mxu0 0.0
    %2825 = vmatpush1.msra.mxu0 0.0
    %2826 = vmatprep.subr.mxu0 0.0
    %2827 = vmatpush1.msra.mxu0 0.0
    %2828 = vmatprep.subr.mxu0 0.0
    %2829 = vmatpush1.msra.mxu0 0.0
    %2830 = vmatprep.subr.mxu0 0.0
    %2831 = vmatpush1.msra.mxu0 0.0
    %2832 = vmatprep.subr.mxu0 0.0
    %2833 = vmatpush1.msra.mxu0 0.0
    %2834 = vmatprep.subr.mxu0 0.0
    %2835 = vmatpush1.msra.mxu0 0.0
    %2836 = vmatprep.subr.mxu0 0.0
    %2837 = vmatpush1.msra.mxu0 %v2801
    %2838 = vmatprep.subr.mxu0 0.0
    %2839 = vmatpush2.msra.mxu0 0.0
    %2840 = vmatprep.subr.mxu0 0.0
    %2841 = vmatpush2.msra.mxu0 0.0
    %2842 = vmatprep.subr.mxu0 0.0
    %2843 = vmatpush2.msra.mxu0 0.0
    %2844 = vmatprep.subr.mxu0 0.0
    %2845 = vmatpush2.msra.mxu0 0.0
    %2846 = vmatprep.subr.mxu0 0.0
    %2847 = vmatpush2.msra.mxu0 0.0
    %2848 = vmatprep.subr.mxu0 0.0
    %2849 = vmatpush2.msra.mxu0 0.0
    %2850 = vmatprep.subr.mxu0 0.0
    %2851 = vmatpush2.msra.mxu0 0.0
    %2852 = vmatprep.subr.mxu0 0.0
    %2853 = vmatpush2.msra.mxu0 0.0
    %2854 = vmatprep.subr.mxu0 0.0
    %2855 = vmatpush2.msra.mxu0 0.0
    %2856 = vmatprep.subr.mxu0 0.0
    %2857 = vmatpush2.msra.mxu0 0.0
    %2858 = vmatprep.subr.mxu0 0.0
    %2859 = vmatpush2.msra.mxu0 0.0
    %2860 = vmatprep.subr.mxu0 0.0
    %2861 = vmatpush2.msra.mxu0 0.0
    %2862 = vmatprep.subr.mxu0 0.0
    %2863 = vmatpush2.msra.mxu0 0.0
    %2864 = vmatprep.subr.mxu0 0.0
    %2865 = vmatpush2.msra.mxu0 0.0
    %2866 = vmatprep.subr.mxu0 0.0
    %2867 = vmatpush2.msra.mxu0 0.0
    %2868 = vmatprep.subr.mxu0 0.0
    %2869 = vmatpush2.msra.mxu0 0.0
    %2870 = vmatprep.mubr.f32.mxu0 0.0
    %2871 = vmatmul.mubr.f32.gmra.mxu0 %v2804
    %v2872 = vpop.f32.mrf.mxu0
    %v2873 = vadd.f32 0.0, %v2872
    %v2874 = vpop.f32.mrf.mxu0
    %2875 = vdwg.mxu0
    %v2877 = vsel %vm161, %v2797, 0
    %v2880 = vsel %vm161, %v2873, 0
    %2882 = vmatprep.subr.mxu0 0.0
    %2883 = vmatpush1.msra.mxu0 0.0
    %2884 = vmatprep.subr.mxu0 0.0
    %2885 = vmatpush1.msra.mxu0 0.0
    %2886 = vmatprep.subr.mxu0 0.0
    %2887 = vmatpush1.msra.mxu0 0.0
    %2888 = vmatprep.subr.mxu0 0.0
    %2889 = vmatpush1.msra.mxu0 0.0
    %2890 = vmatprep.subr.mxu0 0.0
    %2891 = vmatpush1.msra.mxu0 0.0
    %2892 = vmatprep.subr.mxu0 0.0
    %2893 = vmatpush1.msra.mxu0 0.0
    %2894 = vmatprep.subr.mxu0 0.0
    %2895 = vmatpush1.msra.mxu0 0.0
    %2896 = vmatprep.subr.mxu0 0.0
    %2897 = vmatpush1.msra.mxu0 0.0
    %2898 = vmatprep.subr.mxu0 0.0
    %2899 = vmatpush1.msra.mxu0 0.0
    %2900 = vmatprep.subr.mxu0 0.0
    %2901 = vmatpush1.msra.mxu0 0.0
    %2902 = vmatprep.subr.mxu0 0.0
    %2903 = vmatpush1.msra.mxu0 0.0
    %2904 = vmatprep.subr.mxu0 0.0
    %2905 = vmatpush1.msra.mxu0 0.0
    %2906 = vmatprep.subr.mxu0 0.0
    %2907 = vmatpush1.msra.mxu0 0.0
    %2908 = vmatprep.subr.mxu0 0.0
    %2909 = vmatpush1.msra.mxu0 0.0
    %2910 = vmatprep.subr.mxu0 0.0
    %2911 = vmatpush1.msra.mxu0 0.0
    %2912 = vmatprep.subr.mxu0 0.0
    %2913 = vmatpush1.msra.mxu0 %v2122
    %2914 = vmatprep.subr.mxu0 0.0
    %2915 = vmatpush2.msra.mxu0 0.0
    %2916 = vmatprep.subr.mxu0 0.0
    %2917 = vmatpush2.msra.mxu0 0.0
    %2918 = vmatprep.subr.mxu0 0.0
    %2919 = vmatpush2.msra.mxu0 0.0
    %2920 = vmatprep.subr.mxu0 0.0
    %2921 = vmatpush2.msra.mxu0 0.0
    %2922 = vmatprep.subr.mxu0 0.0
    %2923 = vmatpush2.msra.mxu0 0.0
    %2924 = vmatprep.subr.mxu0 0.0
    %2925 = vmatpush2.msra.mxu0 0.0
    %2926 = vmatprep.subr.mxu0 0.0
    %2927 = vmatpush2.msra.mxu0 0.0
    %2928 = vmatprep.subr.mxu0 0.0
    %2929 = vmatpush2.msra.mxu0 0.0
    %2930 = vmatprep.subr.mxu0 0.0
    %2931 = vmatpush2.msra.mxu0 0.0
    %2932 = vmatprep.subr.mxu0 0.0
    %2933 = vmatpush2.msra.mxu0 0.0
    %2934 = vmatprep.subr.mxu0 0.0
    %2935 = vmatpush2.msra.mxu0 0.0
    %2936 = vmatprep.subr.mxu0 0.0
    %2937 = vmatpush2.msra.mxu0 0.0
    %2938 = vmatprep.subr.mxu0 0.0
    %2939 = vmatpush2.msra.mxu0 0.0
    %2940 = vmatprep.subr.mxu0 0.0
    %2941 = vmatpush2.msra.mxu0 0.0
    %2942 = vmatprep.subr.mxu0 0.0
    %2943 = vmatpush2.msra.mxu0 0.0
    %2944 = vmatprep.subr.mxu0 0.0
    %2945 = vmatpush2.msra.mxu0 0.0
    %2946 = vmatprep.mubr.f32.mxu0 0.0
    %2947 = vmatmul.mubr.f32.gmra.mxu0 %v2877
    %v2948 = vpop.f32.mrf.mxu0
    %v2949 = vadd.f32 0.0, %v2948
    %v2950 = vpop.f32.mrf.mxu0
    %2951 = vmatprep.mubr.f32.mxu0 0.0
    %2952 = vmatmul.mubr.f32.gmra.mxu0 %v2880
    %v2953 = vpop.f32.mrf.mxu0
    %v2954 = vadd.f32 0.0, %v2953
    %v2955 = vpop.f32.mrf.mxu0
    %2956 = vdwg.mxu0
    %v2958 = vsel %vm161, %v2465, 0
    %v2961 = vsel %vm161, %v2541, 0
    %2963 = vmatprep.subr.mxu0 0.0
    %2964 = vmatpush1.msra.mxu0 0.0
    %2965 = vmatprep.subr.mxu0 0.0
    %2966 = vmatpush1.msra.mxu0 0.0
    %2967 = vmatprep.subr.mxu0 0.0
    %2968 = vmatpush1.msra.mxu0 0.0
    %2969 = vmatprep.subr.mxu0 0.0
    %2970 = vmatpush1.msra.mxu0 0.0
    %2971 = vmatprep.subr.mxu0 0.0
    %2972 = vmatpush1.msra.mxu0 0.0
    %2973 = vmatprep.subr.mxu0 0.0
    %2974 = vmatpush1.msra.mxu0 0.0
    %2975 = vmatprep.subr.mxu0 0.0
    %2976 = vmatpush1.msra.mxu0 0.0
    %2977 = vmatprep.subr.mxu0 0.0
    %2978 = vmatpush1.msra.mxu0 0.0
    %2979 = vmatprep.subr.mxu0 0.0
    %2980 = vmatpush1.msra.mxu0 0.0
    %2981 = vmatprep.subr.mxu0 0.0
    %2982 = vmatpush1.msra.mxu0 0.0
    %2983 = vmatprep.subr.mxu0 0.0
    %2984 = vmatpush1.msra.mxu0 0.0
    %2985 = vmatprep.subr.mxu0 0.0
    %2986 = vmatpush1.msra.mxu0 0.0
    %2987 = vmatprep.subr.mxu0 0.0
    %2988 = vmatpush1.msra.mxu0 0.0
    %2989 = vmatprep.subr.mxu0 0.0
    %2990 = vmatpush1.msra.mxu0 0.0
    %2991 = vmatprep.subr.mxu0 0.0
    %2992 = vmatpush1.msra.mxu0 0.0
    %2993 = vmatprep.subr.mxu0 0.0
    %2994 = vmatpush1.msra.mxu0 %v2121
    %2995 = vmatprep.subr.mxu0 0.0
    %2996 = vmatpush2.msra.mxu0 0.0
    %2997 = vmatprep.subr.mxu0 0.0
    %2998 = vmatpush2.msra.mxu0 0.0
    %2999 = vmatprep.subr.mxu0 0.0
    %3000 = vmatpush2.msra.mxu0 0.0
    %3001 = vmatprep.subr.mxu0 0.0
    %3002 = vmatpush2.msra.mxu0 0.0
    %3003 = vmatprep.subr.mxu0 0.0
    %3004 = vmatpush2.msra.mxu0 0.0
    %3005 = vmatprep.subr.mxu0 0.0
    %3006 = vmatpush2.msra.mxu0 0.0
    %3007 = vmatprep.subr.mxu0 0.0
    %3008 = vmatpush2.msra.mxu0 0.0
    %3009 = vmatprep.subr.mxu0 0.0
    %3010 = vmatpush2.msra.mxu0 0.0
    %3011 = vmatprep.subr.mxu0 0.0
    %3012 = vmatpush2.msra.mxu0 0.0
    %3013 = vmatprep.subr.mxu0 0.0
    %3014 = vmatpush2.msra.mxu0 0.0
    %3015 = vmatprep.subr.mxu0 0.0
    %3016 = vmatpush2.msra.mxu0 0.0
    %3017 = vmatprep.subr.mxu0 0.0
    %3018 = vmatpush2.msra.mxu0 0.0
    %3019 = vmatprep.subr.mxu0 0.0
    %3020 = vmatpush2.msra.mxu0 0.0
    %3021 = vmatprep.subr.mxu0 0.0
    %3022 = vmatpush2.msra.mxu0 0.0
    %3023 = vmatprep.subr.mxu0 0.0
    %3024 = vmatpush2.msra.mxu0 0.0
    %3025 = vmatprep.subr.mxu0 0.0
    %3026 = vmatpush2.msra.mxu0 0.0
    %3027 = vmatprep.mubr.f32.mxu0 0.0
    %3028 = vmatmul.mubr.f32.gmra.mxu0 %v2958
    %v3029 = vpop.f32.mrf.mxu0
    %v3030 = vadd.f32 %v2949, %v3029
    %v3031 = vpop.f32.mrf.mxu0
    %3032 = vmatprep.mubr.f32.mxu0 0.0
    %3033 = vmatmul.mubr.f32.gmra.mxu0 %v2961
    %v3034 = vpop.f32.mrf.mxu0
    %v3035 = vadd.f32 %v2954, %v3034
    %v3036 = vpop.f32.mrf.mxu0
    %3037 = vdwg.mxu0
    %3038 = vrot.lane.b32.xlu0 %v2206, 112
    %v3039 = vpop.permute.xlu0 %3038
    %3040 = vrot.lane.b32.xlu0 %v2206, 80
    %v3041 = vpop.permute.xlu0 %3040
    %v3042 = vsel %vm161, %v3039, 0
    %v3044 = vsel %vm161, %v3041, 0
    %3046 = vmatprep.subr.mxu0 0.0
    %3047 = vmatpush1.xpose.msra.mxu0 0.0
    %3048 = vmatprep.subr.mxu0 0.0
    %3049 = vmatpush1.xpose.msra.mxu0 0.0
    %3050 = vmatprep.subr.mxu0 0.0
    %3051 = vmatpush1.xpose.msra.mxu0 0.0
    %3052 = vmatprep.subr.mxu0 0.0
    %3053 = vmatpush1.xpose.msra.mxu0 0.0
    %3054 = vmatprep.subr.mxu0 0.0
    %3055 = vmatpush1.xpose.msra.mxu0 0.0
    %3056 = vmatprep.subr.mxu0 0.0
    %3057 = vmatpush1.xpose.msra.mxu0 0.0
    %3058 = vmatprep.subr.mxu0 0.0
    %3059 = vmatpush1.xpose.msra.mxu0 0.0
    %3060 = vmatprep.subr.mxu0 0.0
    %3061 = vmatpush1.xpose.msra.mxu0 0.0
    %3062 = vmatprep.subr.mxu0 0.0
    %3063 = vmatpush1.xpose.msra.mxu0 0.0
    %3064 = vmatprep.subr.mxu0 0.0
    %3065 = vmatpush1.xpose.msra.mxu0 0.0
    %3066 = vmatprep.subr.mxu0 0.0
    %3067 = vmatpush1.xpose.msra.mxu0 0.0
    %3068 = vmatprep.subr.mxu0 0.0
    %3069 = vmatpush1.xpose.msra.mxu0 0.0
    %3070 = vmatprep.subr.mxu0 0.0
    %3071 = vmatpush1.xpose.msra.mxu0 0.0
    %3072 = vmatprep.subr.mxu0 0.0
    %3073 = vmatpush1.xpose.msra.mxu0 0.0
    %3074 = vmatprep.subr.mxu0 0.0
    %3075 = vmatpush1.xpose.msra.mxu0 0.0
    %3076 = vmatprep.subr.mxu0 0.0
    %3077 = vmatpush1.xpose.msra.mxu0 %v3044
    %3078 = vmatprep.subr.mxu0 0.0
    %3079 = vmatpush2.xpose.msra.mxu0 0.0
    %3080 = vmatprep.subr.mxu0 0.0
    %3081 = vmatpush2.xpose.msra.mxu0 0.0
    %3082 = vmatprep.subr.mxu0 0.0
    %3083 = vmatpush2.xpose.msra.mxu0 0.0
    %3084 = vmatprep.subr.mxu0 0.0
    %3085 = vmatpush2.xpose.msra.mxu0 0.0
    %3086 = vmatprep.subr.mxu0 0.0
    %3087 = vmatpush2.xpose.msra.mxu0 0.0
    %3088 = vmatprep.subr.mxu0 0.0
    %3089 = vmatpush2.xpose.msra.mxu0 0.0
    %3090 = vmatprep.subr.mxu0 0.0
    %3091 = vmatpush2.xpose.msra.mxu0 0.0
    %3092 = vmatprep.subr.mxu0 0.0
    %3093 = vmatpush2.xpose.msra.mxu0 0.0
    %3094 = vmatprep.subr.mxu0 0.0
    %3095 = vmatpush2.xpose.msra.mxu0 0.0
    %3096 = vmatprep.subr.mxu0 0.0
    %3097 = vmatpush2.xpose.msra.mxu0 0.0
    %3098 = vmatprep.subr.mxu0 0.0
    %3099 = vmatpush2.xpose.msra.mxu0 0.0
    %3100 = vmatprep.subr.mxu0 0.0
    %3101 = vmatpush2.xpose.msra.mxu0 0.0
    %3102 = vmatprep.subr.mxu0 0.0
    %3103 = vmatpush2.xpose.msra.mxu0 0.0
    %3104 = vmatprep.subr.mxu0 0.0
    %3105 = vmatpush2.xpose.msra.mxu0 0.0
    %3106 = vmatprep.subr.mxu0 0.0
    %3107 = vmatpush2.xpose.msra.mxu0 0.0
    %3108 = vmatprep.subr.mxu0 0.0
    %3109 = vmatpush2.xpose.msra.mxu0 0.0
    %3110 = vmatprep.mubr.f32.mxu0 0.0
    %3111 = vmatmul.mubr.f32.gmra.mxu0 %v3042
    %v3112 = vpop.f32.mrf.mxu0
    %v3113 = vadd.f32 0.0, %v3112
    %v3114 = vpop.f32.mrf.mxu0
    %3115 = vdwg.mxu0
    %3116 = vrot.lane.b32.xlu0 %v2211, 112
    %v3117 = vpop.permute.xlu0 %3116
    %3118 = vrot.lane.b32.xlu0 %v2211, 80
    %v3119 = vpop.permute.xlu0 %3118
    %v3120 = vsel %vm161, %v3117, 0
    %v3122 = vsel %vm161, %v3119, 0
    %3124 = vmatprep.subr.mxu0 0.0
    %3125 = vmatpush1.xpose.msra.mxu0 0.0
    %3126 = vmatprep.subr.mxu0 0.0
    %3127 = vmatpush1.xpose.msra.mxu0 0.0
    %3128 = vmatprep.subr.mxu0 0.0
    %3129 = vmatpush1.xpose.msra.mxu0 0.0
    %3130 = vmatprep.subr.mxu0 0.0
    %3131 = vmatpush1.xpose.msra.mxu0 0.0
    %3132 = vmatprep.subr.mxu0 0.0
    %3133 = vmatpush1.xpose.msra.mxu0 0.0
    %3134 = vmatprep.subr.mxu0 0.0
    %3135 = vmatpush1.xpose.msra.mxu0 0.0
    %3136 = vmatprep.subr.mxu0 0.0
    %3137 = vmatpush1.xpose.msra.mxu0 0.0
    %3138 = vmatprep.subr.mxu0 0.0
    %3139 = vmatpush1.xpose.msra.mxu0 0.0
    %3140 = vmatprep.subr.mxu0 0.0
    %3141 = vmatpush1.xpose.msra.mxu0 0.0
    %3142 = vmatprep.subr.mxu0 0.0
    %3143 = vmatpush1.xpose.msra.mxu0 0.0
    %3144 = vmatprep.subr.mxu0 0.0
    %3145 = vmatpush1.xpose.msra.mxu0 0.0
    %3146 = vmatprep.subr.mxu0 0.0
    %3147 = vmatpush1.xpose.msra.mxu0 0.0
    %3148 = vmatprep.subr.mxu0 0.0
    %3149 = vmatpush1.xpose.msra.mxu0 0.0
    %3150 = vmatprep.subr.mxu0 0.0
    %3151 = vmatpush1.xpose.msra.mxu0 0.0
    %3152 = vmatprep.subr.mxu0 0.0
    %3153 = vmatpush1.xpose.msra.mxu0 0.0
    %3154 = vmatprep.subr.mxu0 0.0
    %3155 = vmatpush1.xpose.msra.mxu0 %v3122
    %3156 = vmatprep.subr.mxu0 0.0
    %3157 = vmatpush2.xpose.msra.mxu0 0.0
    %3158 = vmatprep.subr.mxu0 0.0
    %3159 = vmatpush2.xpose.msra.mxu0 0.0
    %3160 = vmatprep.subr.mxu0 0.0
    %3161 = vmatpush2.xpose.msra.mxu0 0.0
    %3162 = vmatprep.subr.mxu0 0.0
    %3163 = vmatpush2.xpose.msra.mxu0 0.0
    %3164 = vmatprep.subr.mxu0 0.0
    %3165 = vmatpush2.xpose.msra.mxu0 0.0
    %3166 = vmatprep.subr.mxu0 0.0
    %3167 = vmatpush2.xpose.msra.mxu0 0.0
    %3168 = vmatprep.subr.mxu0 0.0
    %3169 = vmatpush2.xpose.msra.mxu0 0.0
    %3170 = vmatprep.subr.mxu0 0.0
    %3171 = vmatpush2.xpose.msra.mxu0 0.0
    %3172 = vmatprep.subr.mxu0 0.0
    %3173 = vmatpush2.xpose.msra.mxu0 0.0
    %3174 = vmatprep.subr.mxu0 0.0
    %3175 = vmatpush2.xpose.msra.mxu0 0.0
    %3176 = vmatprep.subr.mxu0 0.0
    %3177 = vmatpush2.xpose.msra.mxu0 0.0
    %3178 = vmatprep.subr.mxu0 0.0
    %3179 = vmatpush2.xpose.msra.mxu0 0.0
    %3180 = vmatprep.subr.mxu0 0.0
    %3181 = vmatpush2.xpose.msra.mxu0 0.0
    %3182 = vmatprep.subr.mxu0 0.0
    %3183 = vmatpush2.xpose.msra.mxu0 0.0
    %3184 = vmatprep.subr.mxu0 0.0
    %3185 = vmatpush2.xpose.msra.mxu0 0.0
    %3186 = vmatprep.subr.mxu0 0.0
    %3187 = vmatpush2.xpose.msra.mxu0 0.0
    %3188 = vmatprep.mubr.f32.mxu0 0.0
    %3189 = vmatmul.mubr.f32.gmra.mxu0 %v3120
    %v3190 = vpop.f32.mrf.mxu0
    %v3191 = vadd.f32 0.0, %v3190
    %v3192 = vpop.f32.mrf.mxu0
    %3193 = vdwg.mxu0
    %v3194 = vmul.f32 %v3113, 0.35355338
    %v3195 = vmul.f32 %v3191, 0.35355338
    %v3196 = vsel %vm161, %v3194, -inf
    %3197 = vmax.xlane.f32.xlu0 %v3196
    %v3198 = vpop.xlane.xlu0 %3197
    %v3199 = vsel %vm161, %v3195, -inf
    %3200 = vmax.xlane.f32.xlu0 %v3199
    %v3201 = vpop.xlane.xlu0 %3200
    %v3202 = vsub.f32 %v3194, %v3198
    %v3203 = vsub.f32 %v3195, %v3201
    %v3204 = vmul.f32 %v3202, 1.442695
    %v3205 = vpow.pop %v3204
    %v3206 = vmul.f32 %v3203, 1.442695
    %v3207 = vpow.pop %v3206
    %v3208 = vsel %vm161, %v3205, 0.0
    %3209 = vadd.xlane.f32.xlu0 %v3208
    %v3210 = vpop.xlane.xlu0 %3209
    %v3211 = vsel %vm161, %v3207, 0.0
    %3212 = vadd.xlane.f32.xlu0 %v3211
    %v3213 = vpop.xlane.xlu0 %3212
    %v3214 = vrcp.pop %v3210
    %v3215 = vrcp.pop %v3213
    %v3216 = vmul.f32 %v3205, %v3214
    %v3217 = vmul.f32 %v3207, %v3215
    %3218 = vrot.lane.b32.xlu0 %v2206, 48
    %v3219 = vpop.permute.xlu0 %3218
    %v3222 = vsel %vm161, %v3216, 0
    %3224 = vmatprep.subr.mxu0 0.0
    %3225 = vmatpush1.msra.mxu0 0.0
    %3226 = vmatprep.subr.mxu0 0.0
    %3227 = vmatpush1.msra.mxu0 0.0
    %3228 = vmatprep.subr.mxu0 0.0
    %3229 = vmatpush1.msra.mxu0 0.0
    %3230 = vmatprep.subr.mxu0 0.0
    %3231 = vmatpush1.msra.mxu0 0.0
    %3232 = vmatprep.subr.mxu0 0.0
    %3233 = vmatpush1.msra.mxu0 0.0
    %3234 = vmatprep.subr.mxu0 0.0
    %3235 = vmatpush1.msra.mxu0 0.0
    %3236 = vmatprep.subr.mxu0 0.0
    %3237 = vmatpush1.msra.mxu0 0.0
    %3238 = vmatprep.subr.mxu0 0.0
    %3239 = vmatpush1.msra.mxu0 0.0
    %3240 = vmatprep.subr.mxu0 0.0
    %3241 = vmatpush1.msra.mxu0 0.0
    %3242 = vmatprep.subr.mxu0 0.0
    %3243 = vmatpush1.msra.mxu0 0.0
    %3244 = vmatprep.subr.mxu0 0.0
    %3245 = vmatpush1.msra.mxu0 0.0
    %3246 = vmatprep.subr.mxu0 0.0
    %3247 = vmatpush1.msra.mxu0 0.0
    %3248 = vmatprep.subr.mxu0 0.0
    %3249 = vmatpush1.msra.mxu0 0.0
    %3250 = vmatprep.subr.mxu0 0.0
    %3251 = vmatpush1.msra.mxu0 0.0
    %3252 = vmatprep.subr.mxu0 0.0
    %3253 = vmatpush1.msra.mxu0 0.0
    %3254 = vmatprep.subr.mxu0 0.0
    %3255 = vmatpush1.msra.mxu0 %v3219
    %3256 = vmatprep.subr.mxu0 0.0
    %3257 = vmatpush2.msra.mxu0 0.0
    %3258 = vmatprep.subr.mxu0 0.0
    %3259 = vmatpush2.msra.mxu0 0.0
    %3260 = vmatprep.subr.mxu0 0.0
    %3261 = vmatpush2.msra.mxu0 0.0
    %3262 = vmatprep.subr.mxu0 0.0
    %3263 = vmatpush2.msra.mxu0 0.0
    %3264 = vmatprep.subr.mxu0 0.0
    %3265 = vmatpush2.msra.mxu0 0.0
    %3266 = vmatprep.subr.mxu0 0.0
    %3267 = vmatpush2.msra.mxu0 0.0
    %3268 = vmatprep.subr.mxu0 0.0
    %3269 = vmatpush2.msra.mxu0 0.0
    %3270 = vmatprep.subr.mxu0 0.0
    %3271 = vmatpush2.msra.mxu0 0.0
    %3272 = vmatprep.subr.mxu0 0.0
    %3273 = vmatpush2.msra.mxu0 0.0
    %3274 = vmatprep.subr.mxu0 0.0
    %3275 = vmatpush2.msra.mxu0 0.0
    %3276 = vmatprep.subr.mxu0 0.0
    %3277 = vmatpush2.msra.mxu0 0.0
    %3278 = vmatprep.subr.mxu0 0.0
    %3279 = vmatpush2.msra.mxu0 0.0
    %3280 = vmatprep.subr.mxu0 0.0
    %3281 = vmatpush2.msra.mxu0 0.0
    %3282 = vmatprep.subr.mxu0 0.0
    %3283 = vmatpush2.msra.mxu0 0.0
    %3284 = vmatprep.subr.mxu0 0.0
    %3285 = vmatpush2.msra.mxu0 0.0
    %3286 = vmatprep.subr.mxu0 0.0
    %3287 = vmatpush2.msra.mxu0 0.0
    %3288 = vmatprep.mubr.f32.mxu0 0.0
    %3289 = vmatmul.mubr.f32.gmra.mxu0 %v3222
    %v3290 = vpop.f32.mrf.mxu0
    %v3291 = vadd.f32 0.0, %v3290
    %v3292 = vpop.f32.mrf.mxu0
    %3293 = vdwg.mxu0
    %3294 = vrot.lane.b32.xlu0 %v2211, 48
    %v3295 = vpop.permute.xlu0 %3294
    %v3298 = vsel %vm161, %v3217, 0
    %3300 = vmatprep.subr.mxu0 0.0
    %3301 = vmatpush1.msra.mxu0 0.0
    %3302 = vmatprep.subr.mxu0 0.0
    %3303 = vmatpush1.msra.mxu0 0.0
    %3304 = vmatprep.subr.mxu0 0.0
    %3305 = vmatpush1.msra.mxu0 0.0
    %3306 = vmatprep.subr.mxu0 0.0
    %3307 = vmatpush1.msra.mxu0 0.0
    %3308 = vmatprep.subr.mxu0 0.0
    %3309 = vmatpush1.msra.mxu0 0.0
    %3310 = vmatprep.subr.mxu0 0.0
    %3311 = vmatpush1.msra.mxu0 0.0
    %3312 = vmatprep.subr.mxu0 0.0
    %3313 = vmatpush1.msra.mxu0 0.0
    %3314 = vmatprep.subr.mxu0 0.0
    %3315 = vmatpush1.msra.mxu0 0.0
    %3316 = vmatprep.subr.mxu0 0.0
    %3317 = vmatpush1.msra.mxu0 0.0
    %3318 = vmatprep.subr.mxu0 0.0
    %3319 = vmatpush1.msra.mxu0 0.0
    %3320 = vmatprep.subr.mxu0 0.0
    %3321 = vmatpush1.msra.mxu0 0.0
    %3322 = vmatprep.subr.mxu0 0.0
    %3323 = vmatpush1.msra.mxu0 0.0
    %3324 = vmatprep.subr.mxu0 0.0
    %3325 = vmatpush1.msra.mxu0 0.0
    %3326 = vmatprep.subr.mxu0 0.0
    %3327 = vmatpush1.msra.mxu0 0.0
    %3328 = vmatprep.subr.mxu0 0.0
    %3329 = vmatpush1.msra.mxu0 0.0
    %3330 = vmatprep.subr.mxu0 0.0
    %3331 = vmatpush1.msra.mxu0 %v3295
    %3332 = vmatprep.subr.mxu0 0.0
    %3333 = vmatpush2.msra.mxu0 0.0
    %3334 = vmatprep.subr.mxu0 0.0
    %3335 = vmatpush2.msra.mxu0 0.0
    %3336 = vmatprep.subr.mxu0 0.0
    %3337 = vmatpush2.msra.mxu0 0.0
    %3338 = vmatprep.subr.mxu0 0.0
    %3339 = vmatpush2.msra.mxu0 0.0
    %3340 = vmatprep.subr.mxu0 0.0
    %3341 = vmatpush2.msra.mxu0 0.0
    %3342 = vmatprep.subr.mxu0 0.0
    %3343 = vmatpush2.msra.mxu0 0.0
    %3344 = vmatprep.subr.mxu0 0.0
    %3345 = vmatpush2.msra.mxu0 0.0
    %3346 = vmatprep.subr.mxu0 0.0
    %3347 = vmatpush2.msra.mxu0 0.0
    %3348 = vmatprep.subr.mxu0 0.0
    %3349 = vmatpush2.msra.mxu0 0.0
    %3350 = vmatprep.subr.mxu0 0.0
    %3351 = vmatpush2.msra.mxu0 0.0
    %3352 = vmatprep.subr.mxu0 0.0
    %3353 = vmatpush2.msra.mxu0 0.0
    %3354 = vmatprep.subr.mxu0 0.0
    %3355 = vmatpush2.msra.mxu0 0.0
    %3356 = vmatprep.subr.mxu0 0.0
    %3357 = vmatpush2.msra.mxu0 0.0
    %3358 = vmatprep.subr.mxu0 0.0
    %3359 = vmatpush2.msra.mxu0 0.0
    %3360 = vmatprep.subr.mxu0 0.0
    %3361 = vmatpush2.msra.mxu0 0.0
    %3362 = vmatprep.subr.mxu0 0.0
    %3363 = vmatpush2.msra.mxu0 0.0
    %3364 = vmatprep.mubr.f32.mxu0 0.0
    %3365 = vmatmul.mubr.f32.gmra.mxu0 %v3298
    %v3366 = vpop.f32.mrf.mxu0
    %v3367 = vadd.f32 0.0, %v3366
    %v3368 = vpop.f32.mrf.mxu0
    %3369 = vdwg.mxu0
    %v3371 = vsel %vm161, %v3291, 0
    %v3374 = vsel %vm161, %v3367, 0
    %3376 = vmatprep.subr.mxu0 0.0
    %3377 = vmatpush1.msra.mxu0 0.0
    %3378 = vmatprep.subr.mxu0 0.0
    %3379 = vmatpush1.msra.mxu0 0.0
    %3380 = vmatprep.subr.mxu0 0.0
    %3381 = vmatpush1.msra.mxu0 0.0
    %3382 = vmatprep.subr.mxu0 0.0
    %3383 = vmatpush1.msra.mxu0 0.0
    %3384 = vmatprep.subr.mxu0 0.0
    %3385 = vmatpush1.msra.mxu0 0.0
    %3386 = vmatprep.subr.mxu0 0.0
    %3387 = vmatpush1.msra.mxu0 0.0
    %3388 = vmatprep.subr.mxu0 0.0
    %3389 = vmatpush1.msra.mxu0 0.0
    %3390 = vmatprep.subr.mxu0 0.0
    %3391 = vmatpush1.msra.mxu0 0.0
    %3392 = vmatprep.subr.mxu0 0.0
    %3393 = vmatpush1.msra.mxu0 0.0
    %3394 = vmatprep.subr.mxu0 0.0
    %3395 = vmatpush1.msra.mxu0 0.0
    %3396 = vmatprep.subr.mxu0 0.0
    %3397 = vmatpush1.msra.mxu0 0.0
    %3398 = vmatprep.subr.mxu0 0.0
    %3399 = vmatpush1.msra.mxu0 0.0
    %3400 = vmatprep.subr.mxu0 0.0
    %3401 = vmatpush1.msra.mxu0 0.0
    %3402 = vmatprep.subr.mxu0 0.0
    %3403 = vmatpush1.msra.mxu0 0.0
    %3404 = vmatprep.subr.mxu0 0.0
    %3405 = vmatpush1.msra.mxu0 0.0
    %3406 = vmatprep.subr.mxu0 0.0
    %3407 = vmatpush1.msra.mxu0 %v2123
    %3408 = vmatprep.subr.mxu0 0.0
    %3409 = vmatpush2.msra.mxu0 0.0
    %3410 = vmatprep.subr.mxu0 0.0
    %3411 = vmatpush2.msra.mxu0 0.0
    %3412 = vmatprep.subr.mxu0 0.0
    %3413 = vmatpush2.msra.mxu0 0.0
    %3414 = vmatprep.subr.mxu0 0.0
    %3415 = vmatpush2.msra.mxu0 0.0
    %3416 = vmatprep.subr.mxu0 0.0
    %3417 = vmatpush2.msra.mxu0 0.0
    %3418 = vmatprep.subr.mxu0 0.0
    %3419 = vmatpush2.msra.mxu0 0.0
    %3420 = vmatprep.subr.mxu0 0.0
    %3421 = vmatpush2.msra.mxu0 0.0
    %3422 = vmatprep.subr.mxu0 0.0
    %3423 = vmatpush2.msra.mxu0 0.0
    %3424 = vmatprep.subr.mxu0 0.0
    %3425 = vmatpush2.msra.mxu0 0.0
    %3426 = vmatprep.subr.mxu0 0.0
    %3427 = vmatpush2.msra.mxu0 0.0
    %3428 = vmatprep.subr.mxu0 0.0
    %3429 = vmatpush2.msra.mxu0 0.0
    %3430 = vmatprep.subr.mxu0 0.0
    %3431 = vmatpush2.msra.mxu0 0.0
    %3432 = vmatprep.subr.mxu0 0.0
    %3433 = vmatpush2.msra.mxu0 0.0
    %3434 = vmatprep.subr.mxu0 0.0
    %3435 = vmatpush2.msra.mxu0 0.0
    %3436 = vmatprep.subr.mxu0 0.0
    %3437 = vmatpush2.msra.mxu0 0.0
    %3438 = vmatprep.subr.mxu0 0.0
    %3439 = vmatpush2.msra.mxu0 0.0
    %3440 = vmatprep.mubr.f32.mxu0 0.0
    %3441 = vmatmul.mubr.f32.gmra.mxu0 %v3371
    %v3442 = vpop.f32.mrf.mxu0
    %v3443 = vadd.f32 0.0, %v3442
    %v3444 = vpop.f32.mrf.mxu0
    %3445 = vmatprep.mubr.f32.mxu0 0.0
    %3446 = vmatmul.mubr.f32.gmra.mxu0 %v3374
    %v3447 = vpop.f32.mrf.mxu0
    %v3448 = vadd.f32 0.0, %v3447
    %v3449 = vpop.f32.mrf.mxu0
    %3450 = vdwg.mxu0
    %v3451 = vadd.f32 %v3030, %v3443
    %v3452 = vadd.f32 %v3035, %v3448
    %3453 = vrot.lane.b32.xlu0 %v2206, 104
    %v3454 = vpop.permute.xlu0 %3453
    %3455 = vrot.lane.b32.xlu0 %v2206, 72
    %v3456 = vpop.permute.xlu0 %3455
    %v3457 = vsel %vm161, %v3454, 0
    %v3459 = vsel %vm161, %v3456, 0
    %3461 = vmatprep.subr.mxu0 0.0
    %3462 = vmatpush1.xpose.msra.mxu0 0.0
    %3463 = vmatprep.subr.mxu0 0.0
    %3464 = vmatpush1.xpose.msra.mxu0 0.0
    %3465 = vmatprep.subr.mxu0 0.0
    %3466 = vmatpush1.xpose.msra.mxu0 0.0
    %3467 = vmatprep.subr.mxu0 0.0
    %3468 = vmatpush1.xpose.msra.mxu0 0.0
    %3469 = vmatprep.subr.mxu0 0.0
    %3470 = vmatpush1.xpose.msra.mxu0 0.0
    %3471 = vmatprep.subr.mxu0 0.0
    %3472 = vmatpush1.xpose.msra.mxu0 0.0
    %3473 = vmatprep.subr.mxu0 0.0
    %3474 = vmatpush1.xpose.msra.mxu0 0.0
    %3475 = vmatprep.subr.mxu0 0.0
    %3476 = vmatpush1.xpose.msra.mxu0 0.0
    %3477 = vmatprep.subr.mxu0 0.0
    %3478 = vmatpush1.xpose.msra.mxu0 0.0
    %3479 = vmatprep.subr.mxu0 0.0
    %3480 = vmatpush1.xpose.msra.mxu0 0.0
    %3481 = vmatprep.subr.mxu0 0.0
    %3482 = vmatpush1.xpose.msra.mxu0 0.0
    %3483 = vmatprep.subr.mxu0 0.0
    %3484 = vmatpush1.xpose.msra.mxu0 0.0
    %3485 = vmatprep.subr.mxu0 0.0
    %3486 = vmatpush1.xpose.msra.mxu0 0.0
    %3487 = vmatprep.subr.mxu0 0.0
    %3488 = vmatpush1.xpose.msra.mxu0 0.0
    %3489 = vmatprep.subr.mxu0 0.0
    %3490 = vmatpush1.xpose.msra.mxu0 0.0
    %3491 = vmatprep.subr.mxu0 0.0
    %3492 = vmatpush1.xpose.msra.mxu0 %v3459
    %3493 = vmatprep.subr.mxu0 0.0
    %3494 = vmatpush2.xpose.msra.mxu0 0.0
    %3495 = vmatprep.subr.mxu0 0.0
    %3496 = vmatpush2.xpose.msra.mxu0 0.0
    %3497 = vmatprep.subr.mxu0 0.0
    %3498 = vmatpush2.xpose.msra.mxu0 0.0
    %3499 = vmatprep.subr.mxu0 0.0
    %3500 = vmatpush2.xpose.msra.mxu0 0.0
    %3501 = vmatprep.subr.mxu0 0.0
    %3502 = vmatpush2.xpose.msra.mxu0 0.0
    %3503 = vmatprep.subr.mxu0 0.0
    %3504 = vmatpush2.xpose.msra.mxu0 0.0
    %3505 = vmatprep.subr.mxu0 0.0
    %3506 = vmatpush2.xpose.msra.mxu0 0.0
    %3507 = vmatprep.subr.mxu0 0.0
    %3508 = vmatpush2.xpose.msra.mxu0 0.0
    %3509 = vmatprep.subr.mxu0 0.0
    %3510 = vmatpush2.xpose.msra.mxu0 0.0
    %3511 = vmatprep.subr.mxu0 0.0
    %3512 = vmatpush2.xpose.msra.mxu0 0.0
    %3513 = vmatprep.subr.mxu0 0.0
    %3514 = vmatpush2.xpose.msra.mxu0 0.0
    %3515 = vmatprep.subr.mxu0 0.0
    %3516 = vmatpush2.xpose.msra.mxu0 0.0
    %3517 = vmatprep.subr.mxu0 0.0
    %3518 = vmatpush2.xpose.msra.mxu0 0.0
    %3519 = vmatprep.subr.mxu0 0.0
    %3520 = vmatpush2.xpose.msra.mxu0 0.0
    %3521 = vmatprep.subr.mxu0 0.0
    %3522 = vmatpush2.xpose.msra.mxu0 0.0
    %3523 = vmatprep.subr.mxu0 0.0
    %3524 = vmatpush2.xpose.msra.mxu0 0.0
    %3525 = vmatprep.mubr.f32.mxu0 0.0
    %3526 = vmatmul.mubr.f32.gmra.mxu0 %v3457
    %v3527 = vpop.f32.mrf.mxu0
    %v3528 = vadd.f32 0.0, %v3527
    %v3529 = vpop.f32.mrf.mxu0
    %3530 = vdwg.mxu0
    %3531 = vrot.lane.b32.xlu0 %v2211, 104
    %v3532 = vpop.permute.xlu0 %3531
    %3533 = vrot.lane.b32.xlu0 %v2211, 72
    %v3534 = vpop.permute.xlu0 %3533
    %v3535 = vsel %vm161, %v3532, 0
    %v3537 = vsel %vm161, %v3534, 0
    %3539 = vmatprep.subr.mxu0 0.0
    %3540 = vmatpush1.xpose.msra.mxu0 0.0
    %3541 = vmatprep.subr.mxu0 0.0
    %3542 = vmatpush1.xpose.msra.mxu0 0.0
    %3543 = vmatprep.subr.mxu0 0.0
    %3544 = vmatpush1.xpose.msra.mxu0 0.0
    %3545 = vmatprep.subr.mxu0 0.0
    %3546 = vmatpush1.xpose.msra.mxu0 0.0
    %3547 = vmatprep.subr.mxu0 0.0
    %3548 = vmatpush1.xpose.msra.mxu0 0.0
    %3549 = vmatprep.subr.mxu0 0.0
    %3550 = vmatpush1.xpose.msra.mxu0 0.0
    %3551 = vmatprep.subr.mxu0 0.0
    %3552 = vmatpush1.xpose.msra.mxu0 0.0
    %3553 = vmatprep.subr.mxu0 0.0
    %3554 = vmatpush1.xpose.msra.mxu0 0.0
    %3555 = vmatprep.subr.mxu0 0.0
    %3556 = vmatpush1.xpose.msra.mxu0 0.0
    %3557 = vmatprep.subr.mxu0 0.0
    %3558 = vmatpush1.xpose.msra.mxu0 0.0
    %3559 = vmatprep.subr.mxu0 0.0
    %3560 = vmatpush1.xpose.msra.mxu0 0.0
    %3561 = vmatprep.subr.mxu0 0.0
    %3562 = vmatpush1.xpose.msra.mxu0 0.0
    %3563 = vmatprep.subr.mxu0 0.0
    %3564 = vmatpush1.xpose.msra.mxu0 0.0
    %3565 = vmatprep.subr.mxu0 0.0
    %3566 = vmatpush1.xpose.msra.mxu0 0.0
    %3567 = vmatprep.subr.mxu0 0.0
    %3568 = vmatpush1.xpose.msra.mxu0 0.0
    %3569 = vmatprep.subr.mxu0 0.0
    %3570 = vmatpush1.xpose.msra.mxu0 %v3537
    %3571 = vmatprep.subr.mxu0 0.0
    %3572 = vmatpush2.xpose.msra.mxu0 0.0
    %3573 = vmatprep.subr.mxu0 0.0
    %3574 = vmatpush2.xpose.msra.mxu0 0.0
    %3575 = vmatprep.subr.mxu0 0.0
    %3576 = vmatpush2.xpose.msra.mxu0 0.0
    %3577 = vmatprep.subr.mxu0 0.0
    %3578 = vmatpush2.xpose.msra.mxu0 0.0
    %3579 = vmatprep.subr.mxu0 0.0
    %3580 = vmatpush2.xpose.msra.mxu0 0.0
    %3581 = vmatprep.subr.mxu0 0.0
    %3582 = vmatpush2.xpose.msra.mxu0 0.0
    %3583 = vmatprep.subr.mxu0 0.0
    %3584 = vmatpush2.xpose.msra.mxu0 0.0
    %3585 = vmatprep.subr.mxu0 0.0
    %3586 = vmatpush2.xpose.msra.mxu0 0.0
    %3587 = vmatprep.subr.mxu0 0.0
    %3588 = vmatpush2.xpose.msra.mxu0 0.0
    %3589 = vmatprep.subr.mxu0 0.0
    %3590 = vmatpush2.xpose.msra.mxu0 0.0
    %3591 = vmatprep.subr.mxu0 0.0
    %3592 = vmatpush2.xpose.msra.mxu0 0.0
    %3593 = vmatprep.subr.mxu0 0.0
    %3594 = vmatpush2.xpose.msra.mxu0 0.0
    %3595 = vmatprep.subr.mxu0 0.0
    %3596 = vmatpush2.xpose.msra.mxu0 0.0
    %3597 = vmatprep.subr.mxu0 0.0
    %3598 = vmatpush2.xpose.msra.mxu0 0.0
    %3599 = vmatprep.subr.mxu0 0.0
    %3600 = vmatpush2.xpose.msra.mxu0 0.0
    %3601 = vmatprep.subr.mxu0 0.0
    %3602 = vmatpush2.xpose.msra.mxu0 0.0
    %3603 = vmatprep.mubr.f32.mxu0 0.0
    %3604 = vmatmul.mubr.f32.gmra.mxu0 %v3535
    %v3605 = vpop.f32.mrf.mxu0
    %v3606 = vadd.f32 0.0, %v3605
    %v3607 = vpop.f32.mrf.mxu0
    %3608 = vdwg.mxu0
    %v3609 = vmul.f32 %v3528, 0.35355338
    %v3610 = vmul.f32 %v3606, 0.35355338
    %v3611 = vsel %vm161, %v3609, -inf
    %3612 = vmax.xlane.f32.xlu0 %v3611
    %v3613 = vpop.xlane.xlu0 %3612
    %v3614 = vsel %vm161, %v3610, -inf
    %3615 = vmax.xlane.f32.xlu0 %v3614
    %v3616 = vpop.xlane.xlu0 %3615
    %v3617 = vsub.f32 %v3609, %v3613
    %v3618 = vsub.f32 %v3610, %v3616
    %v3619 = vmul.f32 %v3617, 1.442695
    %v3620 = vpow.pop %v3619
    %v3621 = vmul.f32 %v3618, 1.442695
    %v3622 = vpow.pop %v3621
    %v3623 = vsel %vm161, %v3620, 0.0
    %3624 = vadd.xlane.f32.xlu0 %v3623
    %v3625 = vpop.xlane.xlu0 %3624
    %v3626 = vsel %vm161, %v3622, 0.0
    %3627 = vadd.xlane.f32.xlu0 %v3626
    %v3628 = vpop.xlane.xlu0 %3627
    %v3629 = vrcp.pop %v3625
    %v3630 = vrcp.pop %v3628
    %v3631 = vmul.f32 %v3620, %v3629
    %v3632 = vmul.f32 %v3622, %v3630
    %3633 = vrot.lane.b32.xlu0 %v2206, 40
    %v3634 = vpop.permute.xlu0 %3633
    %v3637 = vsel %vm161, %v3631, 0
    %3639 = vmatprep.subr.mxu0 0.0
    %3640 = vmatpush1.msra.mxu0 0.0
    %3641 = vmatprep.subr.mxu0 0.0
    %3642 = vmatpush1.msra.mxu0 0.0
    %3643 = vmatprep.subr.mxu0 0.0
    %3644 = vmatpush1.msra.mxu0 0.0
    %3645 = vmatprep.subr.mxu0 0.0
    %3646 = vmatpush1.msra.mxu0 0.0
    %3647 = vmatprep.subr.mxu0 0.0
    %3648 = vmatpush1.msra.mxu0 0.0
    %3649 = vmatprep.subr.mxu0 0.0
    %3650 = vmatpush1.msra.mxu0 0.0
    %3651 = vmatprep.subr.mxu0 0.0
    %3652 = vmatpush1.msra.mxu0 0.0
    %3653 = vmatprep.subr.mxu0 0.0
    %3654 = vmatpush1.msra.mxu0 0.0
    %3655 = vmatprep.subr.mxu0 0.0
    %3656 = vmatpush1.msra.mxu0 0.0
    %3657 = vmatprep.subr.mxu0 0.0
    %3658 = vmatpush1.msra.mxu0 0.0
    %3659 = vmatprep.subr.mxu0 0.0
    %3660 = vmatpush1.msra.mxu0 0.0
    %3661 = vmatprep.subr.mxu0 0.0
    %3662 = vmatpush1.msra.mxu0 0.0
    %3663 = vmatprep.subr.mxu0 0.0
    %3664 = vmatpush1.msra.mxu0 0.0
    %3665 = vmatprep.subr.mxu0 0.0
    %3666 = vmatpush1.msra.mxu0 0.0
    %3667 = vmatprep.subr.mxu0 0.0
    %3668 = vmatpush1.msra.mxu0 0.0
    %3669 = vmatprep.subr.mxu0 0.0
    %3670 = vmatpush1.msra.mxu0 %v3634
    %3671 = vmatprep.subr.mxu0 0.0
    %3672 = vmatpush2.msra.mxu0 0.0
    %3673 = vmatprep.subr.mxu0 0.0
    %3674 = vmatpush2.msra.mxu0 0.0
    %3675 = vmatprep.subr.mxu0 0.0
    %3676 = vmatpush2.msra.mxu0 0.0
    %3677 = vmatprep.subr.mxu0 0.0
    %3678 = vmatpush2.msra.mxu0 0.0
    %3679 = vmatprep.subr.mxu0 0.0
    %3680 = vmatpush2.msra.mxu0 0.0
    %3681 = vmatprep.subr.mxu0 0.0
    %3682 = vmatpush2.msra.mxu0 0.0
    %3683 = vmatprep.subr.mxu0 0.0
    %3684 = vmatpush2.msra.mxu0 0.0
    %3685 = vmatprep.subr.mxu0 0.0
    %3686 = vmatpush2.msra.mxu0 0.0
    %3687 = vmatprep.subr.mxu0 0.0
    %3688 = vmatpush2.msra.mxu0 0.0
    %3689 = vmatprep.subr.mxu0 0.0
    %3690 = vmatpush2.msra.mxu0 0.0
    %3691 = vmatprep.subr.mxu0 0.0
    %3692 = vmatpush2.msra.mxu0 0.0
    %3693 = vmatprep.subr.mxu0 0.0
    %3694 = vmatpush2.msra.mxu0 0.0
    %3695 = vmatprep.subr.mxu0 0.0
    %3696 = vmatpush2.msra.mxu0 0.0
    %3697 = vmatprep.subr.mxu0 0.0
    %3698 = vmatpush2.msra.mxu0 0.0
    %3699 = vmatprep.subr.mxu0 0.0
    %3700 = vmatpush2.msra.mxu0 0.0
    %3701 = vmatprep.subr.mxu0 0.0
    %3702 = vmatpush2.msra.mxu0 0.0
    %3703 = vmatprep.mubr.f32.mxu0 0.0
    %3704 = vmatmul.mubr.f32.gmra.mxu0 %v3637
    %v3705 = vpop.f32.mrf.mxu0
    %v3706 = vadd.f32 0.0, %v3705
    %v3707 = vpop.f32.mrf.mxu0
    %3708 = vdwg.mxu0
    %3709 = vrot.lane.b32.xlu0 %v2211, 40
    %v3710 = vpop.permute.xlu0 %3709
    %v3713 = vsel %vm161, %v3632, 0
    %3715 = vmatprep.subr.mxu0 0.0
    %3716 = vmatpush1.msra.mxu0 0.0
    %3717 = vmatprep.subr.mxu0 0.0
    %3718 = vmatpush1.msra.mxu0 0.0
    %3719 = vmatprep.subr.mxu0 0.0
    %3720 = vmatpush1.msra.mxu0 0.0
    %3721 = vmatprep.subr.mxu0 0.0
    %3722 = vmatpush1.msra.mxu0 0.0
    %3723 = vmatprep.subr.mxu0 0.0
    %3724 = vmatpush1.msra.mxu0 0.0
    %3725 = vmatprep.subr.mxu0 0.0
    %3726 = vmatpush1.msra.mxu0 0.0
    %3727 = vmatprep.subr.mxu0 0.0
    %3728 = vmatpush1.msra.mxu0 0.0
    %3729 = vmatprep.subr.mxu0 0.0
    %3730 = vmatpush1.msra.mxu0 0.0
    %3731 = vmatprep.subr.mxu0 0.0
    %3732 = vmatpush1.msra.mxu0 0.0
    %3733 = vmatprep.subr.mxu0 0.0
    %3734 = vmatpush1.msra.mxu0 0.0
    %3735 = vmatprep.subr.mxu0 0.0
    %3736 = vmatpush1.msra.mxu0 0.0
    %3737 = vmatprep.subr.mxu0 0.0
    %3738 = vmatpush1.msra.mxu0 0.0
    %3739 = vmatprep.subr.mxu0 0.0
    %3740 = vmatpush1.msra.mxu0 0.0
    %3741 = vmatprep.subr.mxu0 0.0
    %3742 = vmatpush1.msra.mxu0 0.0
    %3743 = vmatprep.subr.mxu0 0.0
    %3744 = vmatpush1.msra.mxu0 0.0
    %3745 = vmatprep.subr.mxu0 0.0
    %3746 = vmatpush1.msra.mxu0 %v3710
    %3747 = vmatprep.subr.mxu0 0.0
    %3748 = vmatpush2.msra.mxu0 0.0
    %3749 = vmatprep.subr.mxu0 0.0
    %3750 = vmatpush2.msra.mxu0 0.0
    %3751 = vmatprep.subr.mxu0 0.0
    %3752 = vmatpush2.msra.mxu0 0.0
    %3753 = vmatprep.subr.mxu0 0.0
    %3754 = vmatpush2.msra.mxu0 0.0
    %3755 = vmatprep.subr.mxu0 0.0
    %3756 = vmatpush2.msra.mxu0 0.0
    %3757 = vmatprep.subr.mxu0 0.0
    %3758 = vmatpush2.msra.mxu0 0.0
    %3759 = vmatprep.subr.mxu0 0.0
    %3760 = vmatpush2.msra.mxu0 0.0
    %3761 = vmatprep.subr.mxu0 0.0
    %3762 = vmatpush2.msra.mxu0 0.0
    %3763 = vmatprep.subr.mxu0 0.0
    %3764 = vmatpush2.msra.mxu0 0.0
    %3765 = vmatprep.subr.mxu0 0.0
    %3766 = vmatpush2.msra.mxu0 0.0
    %3767 = vmatprep.subr.mxu0 0.0
    %3768 = vmatpush2.msra.mxu0 0.0
    %3769 = vmatprep.subr.mxu0 0.0
    %3770 = vmatpush2.msra.mxu0 0.0
    %3771 = vmatprep.subr.mxu0 0.0
    %3772 = vmatpush2.msra.mxu0 0.0
    %3773 = vmatprep.subr.mxu0 0.0
    %3774 = vmatpush2.msra.mxu0 0.0
    %3775 = vmatprep.subr.mxu0 0.0
    %3776 = vmatpush2.msra.mxu0 0.0
    %3777 = vmatprep.subr.mxu0 0.0
    %3778 = vmatpush2.msra.mxu0 0.0
    %3779 = vmatprep.mubr.f32.mxu0 0.0
    %3780 = vmatmul.mubr.f32.gmra.mxu0 %v3713
    %v3781 = vpop.f32.mrf.mxu0
    %v3782 = vadd.f32 0.0, %v3781
    %v3783 = vpop.f32.mrf.mxu0
    %3784 = vdwg.mxu0
    %v3786 = vsel %vm161, %v3706, 0
    %v3789 = vsel %vm161, %v3782, 0
    %3791 = vmatprep.subr.mxu0 0.0
    %3792 = vmatpush1.msra.mxu0 0.0
    %3793 = vmatprep.subr.mxu0 0.0
    %3794 = vmatpush1.msra.mxu0 0.0
    %3795 = vmatprep.subr.mxu0 0.0
    %3796 = vmatpush1.msra.mxu0 0.0
    %3797 = vmatprep.subr.mxu0 0.0
    %3798 = vmatpush1.msra.mxu0 0.0
    %3799 = vmatprep.subr.mxu0 0.0
    %3800 = vmatpush1.msra.mxu0 0.0
    %3801 = vmatprep.subr.mxu0 0.0
    %3802 = vmatpush1.msra.mxu0 0.0
    %3803 = vmatprep.subr.mxu0 0.0
    %3804 = vmatpush1.msra.mxu0 0.0
    %3805 = vmatprep.subr.mxu0 0.0
    %3806 = vmatpush1.msra.mxu0 0.0
    %3807 = vmatprep.subr.mxu0 0.0
    %3808 = vmatpush1.msra.mxu0 0.0
    %3809 = vmatprep.subr.mxu0 0.0
    %3810 = vmatpush1.msra.mxu0 0.0
    %3811 = vmatprep.subr.mxu0 0.0
    %3812 = vmatpush1.msra.mxu0 0.0
    %3813 = vmatprep.subr.mxu0 0.0
    %3814 = vmatpush1.msra.mxu0 0.0
    %3815 = vmatprep.subr.mxu0 0.0
    %3816 = vmatpush1.msra.mxu0 0.0
    %3817 = vmatprep.subr.mxu0 0.0
    %3818 = vmatpush1.msra.mxu0 0.0
    %3819 = vmatprep.subr.mxu0 0.0
    %3820 = vmatpush1.msra.mxu0 0.0
    %3821 = vmatprep.subr.mxu0 0.0
    %3822 = vmatpush1.msra.mxu0 %v2124
    %3823 = vmatprep.subr.mxu0 0.0
    %3824 = vmatpush2.msra.mxu0 0.0
    %3825 = vmatprep.subr.mxu0 0.0
    %3826 = vmatpush2.msra.mxu0 0.0
    %3827 = vmatprep.subr.mxu0 0.0
    %3828 = vmatpush2.msra.mxu0 0.0
    %3829 = vmatprep.subr.mxu0 0.0
    %3830 = vmatpush2.msra.mxu0 0.0
    %3831 = vmatprep.subr.mxu0 0.0
    %3832 = vmatpush2.msra.mxu0 0.0
    %3833 = vmatprep.subr.mxu0 0.0
    %3834 = vmatpush2.msra.mxu0 0.0
    %3835 = vmatprep.subr.mxu0 0.0
    %3836 = vmatpush2.msra.mxu0 0.0
    %3837 = vmatprep.subr.mxu0 0.0
    %3838 = vmatpush2.msra.mxu0 0.0
    %3839 = vmatprep.subr.mxu0 0.0
    %3840 = vmatpush2.msra.mxu0 0.0
    %3841 = vmatprep.subr.mxu0 0.0
    %3842 = vmatpush2.msra.mxu0 0.0
    %3843 = vmatprep.subr.mxu0 0.0
    %3844 = vmatpush2.msra.mxu0 0.0
    %3845 = vmatprep.subr.mxu0 0.0
    %3846 = vmatpush2.msra.mxu0 0.0
    %3847 = vmatprep.subr.mxu0 0.0
    %3848 = vmatpush2.msra.mxu0 0.0
    %3849 = vmatprep.subr.mxu0 0.0
    %3850 = vmatpush2.msra.mxu0 0.0
    %3851 = vmatprep.subr.mxu0 0.0
    %3852 = vmatpush2.msra.mxu0 0.0
    %3853 = vmatprep.subr.mxu0 0.0
    %3854 = vmatpush2.msra.mxu0 0.0
    %3855 = vmatprep.mubr.f32.mxu0 0.0
    %3856 = vmatmul.mubr.f32.gmra.mxu0 %v3786
    %v3857 = vpop.f32.mrf.mxu0
    %v3858 = vadd.f32 0.0, %v3857
    %v3859 = vpop.f32.mrf.mxu0
    %3860 = vmatprep.mubr.f32.mxu0 0.0
    %3861 = vmatmul.mubr.f32.gmra.mxu0 %v3789
    %v3862 = vpop.f32.mrf.mxu0
    %v3863 = vadd.f32 0.0, %v3862
    %v3864 = vpop.f32.mrf.mxu0
    %3865 = vdwg.mxu0
    %v3866 = vadd.f32 %v3451, %v3858
    %v3867 = vadd.f32 %v3452, %v3863
    %v3869 = vlaneseq
    %v3870 = vshrl.u32 %v3869, 7
    %v3871 = vsub.s32 0, %v3870
    %v3872 = vrot.slane %v2126, %v3871
    %v3874 = vadd.f32 %v3866, %v3872
    %v3875 = vadd.f32 %v3867, %v3872
    %v3876 = vadd.f32 %v3874, %v2111
    %v3877 = vadd.f32 %v3875, %v2112
    %s3878 = scalar_lea.vmem %s7, 1
    %v3879 = vld [vmem:[%s3878] sm:$0x1]
    %s3880 = scalar_lea.vmem %s8, 1
    %v3881 = vld [vmem:[%s3880] sm:$0x1]
    %v3882 = vsel %vm76, %v3876, 0.0
    %3883 = vadd.xlane.f32.xlu0 %v3882
    %v3884 = vpop.xlane.xlu0 %3883
    %v3885 = vsel %vm76, %v3877, 0.0
    %3886 = vadd.xlane.f32.xlu0 %v3885
    %v3887 = vpop.xlane.xlu0 %3886
    %v3888 = vmul.f32 %v3884, %v1831
    %v3889 = vmul.f32 %v3887, %v1831
    %v3890 = vsub.f32 %v3876, %v3888
    %v3891 = vsub.f32 %v3877, %v3889
    %v3892 = vmul.f32 %v3890, %v3890
    %v3893 = vmul.f32 %v3891, %v3891
    %v3894 = vsel %vm76, %v3892, 0.0
    %3895 = vadd.xlane.f32.xlu0 %v3894
    %v3896 = vpop.xlane.xlu0 %3895
    %v3897 = vsel %vm76, %v3893, 0.0
    %3898 = vadd.xlane.f32.xlu0 %v3897
    %v3899 = vpop.xlane.xlu0 %3898
    %v3900 = vmul.f32 %v3896, %v1831
    %v3901 = vmul.f32 %v3899, %v1831
    %v3902 = vadd.f32 %v3900, 1e-05
    %v3903 = vadd.f32 %v3901, 1e-05
    %v3904 = vrsqrt.pop %v3902
    %v3905 = vrsqrt.pop %v3903
    %v3906 = vmul.f32 %v3890, %v3904
    %v3907 = vmul.f32 %v3891, %v3905
    %v3909 = vlaneseq
    %v3910 = vshrl.u32 %v3909, 7
    %v3911 = vsub.s32 0, %v3910
    %v3912 = vrot.slane %v3879, %v3911
    %v3914 = vmul.f32 %v3906, %v3912
    %v3915 = vmul.f32 %v3907, %v3912
    %v3917 = vlaneseq
    %v3918 = vshrl.u32 %v3917, 7
    %v3919 = vsub.s32 0, %v3918
    %v3920 = vrot.slane %v3881, %v3919
    %v3922 = vadd.f32 %v3914, %v3920
    %v3923 = vadd.f32 %v3915, %v3920
    %s3924 = scalar_lea.vmem %s9, 32
    %v3925 = vld [vmem:[%s3924] sm:$0xff]
    %v3926 = vld [vmem:[%s3924 + $0x8] sm:$0xff]
    %v3927 = vld [vmem:[%s3924 + $0x10] sm:$0xff]
    %v3928 = vld [vmem:[%s3924 + $0x18] sm:$0xff]
    %s3929 = scalar_lea.vmem %s10, 1
    %v3930 = vld [vmem:[%s3929] sm:$0x1]
    %v3932 = vlaneseq
    %v3933 = vshrl.u32 %v3932, 7
    %v3934 = vsub.s32 0, %v3933
    %v3935 = vrot.slane %v3930, %v3934
    %v3938 = vsel %vm76, %v3922, 0
    %v3941 = vsel %vm76, %v3923, 0
    %3943 = vmatprep.subr.mxu0 0.0
    %3944 = vmatpush1.msra.mxu0 0.0
    %3945 = vmatprep.subr.mxu0 0.0
    %3946 = vmatpush1.msra.mxu0 0.0
    %3947 = vmatprep.subr.mxu0 0.0
    %3948 = vmatpush1.msra.mxu0 0.0
    %3949 = vmatprep.subr.mxu0 0.0
    %3950 = vmatpush1.msra.mxu0 0.0
    %3951 = vmatprep.subr.mxu0 0.0
    %3952 = vmatpush1.msra.mxu0 0.0
    %3953 = vmatprep.subr.mxu0 0.0
    %3954 = vmatpush1.msra.mxu0 0.0
    %3955 = vmatprep.subr.mxu0 0.0
    %3956 = vmatpush1.msra.mxu0 0.0
    %3957 = vmatprep.subr.mxu0 0.0
    %3958 = vmatpush1.msra.mxu0 0.0
    %3959 = vmatprep.subr.mxu0 0.0
    %3960 = vmatpush1.msra.mxu0 0.0
    %3961 = vmatprep.subr.mxu0 0.0
    %3962 = vmatpush1.msra.mxu0 0.0
    %3963 = vmatprep.subr.mxu0 0.0
    %3964 = vmatpush1.msra.mxu0 0.0
    %3965 = vmatprep.subr.mxu0 0.0
    %3966 = vmatpush1.msra.mxu0 0.0
    %3967 = vmatprep.subr.mxu0 0.0
    %3968 = vmatpush1.msra.mxu0 %v3928
    %3969 = vmatprep.subr.mxu0 0.0
    %3970 = vmatpush1.msra.mxu0 %v3927
    %3971 = vmatprep.subr.mxu0 0.0
    %3972 = vmatpush1.msra.mxu0 %v3926
    %3973 = vmatprep.subr.mxu0 0.0
    %3974 = vmatpush1.msra.mxu0 %v3925
    %3975 = vmatprep.subr.mxu0 0.0
    %3976 = vmatpush2.msra.mxu0 0.0
    %3977 = vmatprep.subr.mxu0 0.0
    %3978 = vmatpush2.msra.mxu0 0.0
    %3979 = vmatprep.subr.mxu0 0.0
    %3980 = vmatpush2.msra.mxu0 0.0
    %3981 = vmatprep.subr.mxu0 0.0
    %3982 = vmatpush2.msra.mxu0 0.0
    %3983 = vmatprep.subr.mxu0 0.0
    %3984 = vmatpush2.msra.mxu0 0.0
    %3985 = vmatprep.subr.mxu0 0.0
    %3986 = vmatpush2.msra.mxu0 0.0
    %3987 = vmatprep.subr.mxu0 0.0
    %3988 = vmatpush2.msra.mxu0 0.0
    %3989 = vmatprep.subr.mxu0 0.0
    %3990 = vmatpush2.msra.mxu0 0.0
    %3991 = vmatprep.subr.mxu0 0.0
    %3992 = vmatpush2.msra.mxu0 0.0
    %3993 = vmatprep.subr.mxu0 0.0
    %3994 = vmatpush2.msra.mxu0 0.0
    %3995 = vmatprep.subr.mxu0 0.0
    %3996 = vmatpush2.msra.mxu0 0.0
    %3997 = vmatprep.subr.mxu0 0.0
    %3998 = vmatpush2.msra.mxu0 0.0
    %3999 = vmatprep.subr.mxu0 0.0
    %4000 = vmatpush2.msra.mxu0 0.0
    %4001 = vmatprep.subr.mxu0 0.0
    %4002 = vmatpush2.msra.mxu0 0.0
    %4003 = vmatprep.subr.mxu0 0.0
    %4004 = vmatpush2.msra.mxu0 0.0
    %4005 = vmatprep.subr.mxu0 0.0
    %4006 = vmatpush2.msra.mxu0 0.0
    %4007 = vmatprep.mubr.f32.mxu0 0.0
    %4008 = vmatmul.mubr.f32.gmra.mxu0 %v3938
    %v4009 = vpop.f32.mrf.mxu0
    %v4010 = vadd.f32 %v3935, %v4009
    %v4011 = vpop.f32.mrf.mxu0
    %4012 = vmatprep.mubr.f32.mxu0 0.0
    %4013 = vmatmul.mubr.f32.gmra.mxu0 %v3941
    %v4014 = vpop.f32.mrf.mxu0
    %v4015 = vadd.f32 %v3935, %v4014
    %v4016 = vpop.f32.mrf.mxu0
    %4017 = vdwg.mxu0
    %v4018 = vmul.f32 %v4010, 0.5
    %v4019 = vmul.f32 %v4015, 0.5
    %v4020 = vmul.f32 %v4010, 0.70710677
    %v4021 = vmul.f32 %v4015, 0.70710677
    %v4022 = verf.f32.pop %v4020
    %v4023 = verf.f32.pop %v4021
    %v4024 = vadd.f32 %v4022, 1.0
    %v4025 = vadd.f32 %v4023, 1.0
    %v4026 = vmul.f32 %v4018, %v4024
    %v4027 = vmul.f32 %v4019, %v4025
    %s4028 = scalar_lea.vmem %s11, 64
    %v4029 = vld [vmem:[%s4028] sm:$0xff]
    %v4030 = vld [vmem:[%s4028 + $0x8] sm:$0xff]
    %v4031 = vld [vmem:[%s4028 + $0x10] sm:$0xff]
    %v4032 = vld [vmem:[%s4028 + $0x18] sm:$0xff]
    %v4033 = vld [vmem:[%s4028 + $0x20] sm:$0xff]
    %v4034 = vld [vmem:[%s4028 + $0x28] sm:$0xff]
    %v4035 = vld [vmem:[%s4028 + $0x30] sm:$0xff]
    %v4036 = vld [vmem:[%s4028 + $0x38] sm:$0xff]
    %s4037 = scalar_lea.vmem %s12, 1
    %v4038 = vld [vmem:[%s4037] sm:$0x1]
    %v4040 = vlaneseq
    %v4041 = vshrl.u32 %v4040, 7
    %v4042 = vsub.s32 0, %v4041
    %v4043 = vrot.slane %v4038, %v4042
    %v4046 = vsel %vm1985, %v4026, 0
    %v4049 = vsel %vm1985, %v4027, 0
    %4051 = vmatprep.subr.mxu0 0.0
    %4052 = vmatpush1.msra.mxu0 0.0
    %4053 = vmatprep.subr.mxu0 0.0
    %4054 = vmatpush1.msra.mxu0 0.0
    %4055 = vmatprep.subr.mxu0 0.0
    %4056 = vmatpush1.msra.mxu0 0.0
    %4057 = vmatprep.subr.mxu0 0.0
    %4058 = vmatpush1.msra.mxu0 0.0
    %4059 = vmatprep.subr.mxu0 0.0
    %4060 = vmatpush1.msra.mxu0 0.0
    %4061 = vmatprep.subr.mxu0 0.0
    %4062 = vmatpush1.msra.mxu0 0.0
    %4063 = vmatprep.subr.mxu0 0.0
    %4064 = vmatpush1.msra.mxu0 0.0
    %4065 = vmatprep.subr.mxu0 0.0
    %4066 = vmatpush1.msra.mxu0 0.0
    %4067 = vmatprep.subr.mxu0 0.0
    %4068 = vmatpush1.msra.mxu0 %v4036
    %4069 = vmatprep.subr.mxu0 0.0
    %4070 = vmatpush1.msra.mxu0 %v4035
    %4071 = vmatprep.subr.mxu0 0.0
    %4072 = vmatpush1.msra.mxu0 %v4034
    %4073 = vmatprep.subr.mxu0 0.0
    %4074 = vmatpush1.msra.mxu0 %v4033
    %4075 = vmatprep.subr.mxu0 0.0
    %4076 = vmatpush1.msra.mxu0 %v4032
    %4077 = vmatprep.subr.mxu0 0.0
    %4078 = vmatpush1.msra.mxu0 %v4031
    %4079 = vmatprep.subr.mxu0 0.0
    %4080 = vmatpush1.msra.mxu0 %v4030
    %4081 = vmatprep.subr.mxu0 0.0
    %4082 = vmatpush1.msra.mxu0 %v4029
    %4083 = vmatprep.subr.mxu0 0.0
    %4084 = vmatpush2.msra.mxu0 0.0
    %4085 = vmatprep.subr.mxu0 0.0
    %4086 = vmatpush2.msra.mxu0 0.0
    %4087 = vmatprep.subr.mxu0 0.0
    %4088 = vmatpush2.msra.mxu0 0.0
    %4089 = vmatprep.subr.mxu0 0.0
    %4090 = vmatpush2.msra.mxu0 0.0
    %4091 = vmatprep.subr.mxu0 0.0
    %4092 = vmatpush2.msra.mxu0 0.0
    %4093 = vmatprep.subr.mxu0 0.0
    %4094 = vmatpush2.msra.mxu0 0.0
    %4095 = vmatprep.subr.mxu0 0.0
    %4096 = vmatpush2.msra.mxu0 0.0
    %4097 = vmatprep.subr.mxu0 0.0
    %4098 = vmatpush2.msra.mxu0 0.0
    %4099 = vmatprep.subr.mxu0 0.0
    %4100 = vmatpush2.msra.mxu0 0.0
    %4101 = vmatprep.subr.mxu0 0.0
    %4102 = vmatpush2.msra.mxu0 0.0
    %4103 = vmatprep.subr.mxu0 0.0
    %4104 = vmatpush2.msra.mxu0 0.0
    %4105 = vmatprep.subr.mxu0 0.0
    %4106 = vmatpush2.msra.mxu0 0.0
    %4107 = vmatprep.subr.mxu0 0.0
    %4108 = vmatpush2.msra.mxu0 0.0
    %4109 = vmatprep.subr.mxu0 0.0
    %4110 = vmatpush2.msra.mxu0 0.0
    %4111 = vmatprep.subr.mxu0 0.0
    %4112 = vmatpush2.msra.mxu0 0.0
    %4113 = vmatprep.subr.mxu0 0.0
    %4114 = vmatpush2.msra.mxu0 0.0
    %4115 = vmatprep.mubr.f32.mxu0 0.0
    %4116 = vmatmul.mubr.f32.gmra.mxu0 %v4046
    %v4117 = vpop.f32.mrf.mxu0
    %v4118 = vadd.f32 %v4043, %v4117
    %v4119 = vpop.f32.mrf.mxu0
    %4120 = vmatprep.mubr.f32.mxu0 0.0
    %4121 = vmatmul.mubr.f32.gmra.mxu0 %v4049
    %v4122 = vpop.f32.mrf.mxu0
    %v4123 = vadd.f32 %v4043, %v4122
    %v4124 = vpop.f32.mrf.mxu0
    %4125 = vdwg.mxu0
    %v4126 = vadd.f32 %v4118, %v3922
    %v4127 = vadd.f32 %v4123, %v3923
    %s4128 = scalar_lea.vmem %s13, 1
    %v4129 = vld [vmem:[%s4128] sm:$0x1]
    %s4130 = scalar_lea.vmem %s14, 1
    %v4131 = vld [vmem:[%s4130] sm:$0x1]
    %v4132 = vsel %vm76, %v4126, 0.0
    %4133 = vadd.xlane.f32.xlu0 %v4132
    %v4134 = vpop.xlane.xlu0 %4133
    %v4135 = vsel %vm76, %v4127, 0.0
    %4136 = vadd.xlane.f32.xlu0 %v4135
    %v4137 = vpop.xlane.xlu0 %4136
    %v4138 = vmul.f32 %v4134, %v1831
    %v4139 = vmul.f32 %v4137, %v1831
    %v4140 = vsub.f32 %v4126, %v4138
    %v4141 = vsub.f32 %v4127, %v4139
    %v4142 = vmul.f32 %v4140, %v4140
    %v4143 = vmul.f32 %v4141, %v4141
    %v4144 = vsel %vm76, %v4142, 0.0
    %4145 = vadd.xlane.f32.xlu0 %v4144
    %v4146 = vpop.xlane.xlu0 %4145
    %v4147 = vsel %vm76, %v4143, 0.0
    %4148 = vadd.xlane.f32.xlu0 %v4147
    %v4149 = vpop.xlane.xlu0 %4148
    %v4150 = vmul.f32 %v4146, %v1831
    %v4151 = vmul.f32 %v4149, %v1831
    %v4152 = vadd.f32 %v4150, 1e-05
    %v4153 = vadd.f32 %v4151, 1e-05
    %v4154 = vrsqrt.pop %v4152
    %v4155 = vrsqrt.pop %v4153
    %v4156 = vmul.f32 %v4140, %v4154
    %v4157 = vmul.f32 %v4141, %v4155
    %v4159 = vlaneseq
    %v4160 = vshrl.u32 %v4159, 7
    %v4161 = vsub.s32 0, %v4160
    %v4162 = vrot.slane %v4129, %v4161
    %v4164 = vmul.f32 %v4156, %v4162
    %v4165 = vmul.f32 %v4157, %v4162
    %v4167 = vlaneseq
    %v4168 = vshrl.u32 %v4167, 7
    %v4169 = vsub.s32 0, %v4168
    %v4170 = vrot.slane %v4131, %v4169
    %v4172 = vadd.f32 %v4164, %v4170
    %v4173 = vadd.f32 %v4165, %v4170
    %4174 = vst.msk [vmem:[#allocation2] sm:$0xff] %vm76, %v4172
    %4175 = vst.msk [vmem:[#allocation2 + $0x8] sm:$0xff] %vm76, %v4173
    %v4176 = vld [vmem:[%s2] sm:$0xff]
    %v4177 = vld [vmem:[%s2 + $0x8] sm:$0xff]
    %4179 = vset.pattern.permute.xlu0 0
    %4180 = vperm.xlu0 %4179, %v4176
    %v4181 = vpop.permute.xlu0 %4180
    %4184 = vset.pattern.permute.xlu0 0
    %4185 = vperm.xlu0 %4184, %v4177
    %v4186 = vpop.permute.xlu0 %4185
    %v4188 = vmul.f32 %v4172, %v4181
    %v4189 = vmul.f32 %v4173, %v4186
    %v4190 = vsel %vm76, %v4188, 0.0
    %v4191 = vrot.slane %v4190, 4
    %v4192 = vadd.f32 %v4190, %v4191
    %v4193 = vrot.slane %v4192, 2
    %v4194 = vadd.f32 %v4192, %v4193
    %v4195 = vrot.slane %v4194, 1
    %v4196 = vadd.f32 %v4194, %v4195
    %v4197 = vsel %vm76, %v4189, 0.0
    %v4198 = vrot.slane %v4197, 4
    %v4199 = vadd.f32 %v4197, %v4198
    %v4200 = vrot.slane %v4199, 2
    %v4201 = vadd.f32 %v4199, %v4200
    %v4202 = vrot.slane %v4201, 1
    %v4203 = vadd.f32 %v4201, %v4202
    %vm4204 = vcmask 7168
    %v4205 = vsel %vm4204, %v4176, 0.0
    %v4206 = vrot.slane %v4205, 4
    %v4207 = vadd.f32 %v4205, %v4206
    %v4208 = vrot.slane %v4207, 2
    %v4209 = vadd.f32 %v4207, %v4208
    %v4210 = vrot.slane %v4209, 1
    %v4211 = vadd.f32 %v4209, %v4210
    %v4212 = vsel %vm4204, %v4177, 0.0
    %v4213 = vrot.slane %v4212, 4
    %v4214 = vadd.f32 %v4212, %v4213
    %v4215 = vrot.slane %v4214, 2
    %v4216 = vadd.f32 %v4214, %v4215
    %v4217 = vrot.slane %v4216, 1
    %v4218 = vadd.f32 %v4216, %v4217
    %v4219 = vmax.f32 %v4211, 1e-09
    %v4220 = vmax.f32 %v4218, 1e-09
    %v4221 = vrcp.pop %v4219
    %v4222 = vrcp.pop %v4220
    %4224 = vset.pattern.permute.xlu0 0
    %4225 = vperm.xlu0 %4224, %v4221
    %v4226 = vpop.permute.xlu0 %4225
    %4229 = vset.pattern.permute.xlu0 0
    %4230 = vperm.xlu0 %4229, %v4222
    %v4231 = vpop.permute.xlu0 %4230
    %v4233 = vmul.f32 %v4196, %v4226
    %v4234 = vmul.f32 %v4203, %v4231
    %vm4237 = vcmask 1041409
    %v4238 = vsel %vm4237, %v4234, %v4233
    %vm4240 = vcmask 254976
    %4241 = vst.msk [vmem:[#allocation4] sm:$0x3] %vm4240, %v4238
    // Predicated region
    $region62: #{tpu_custom_call.1} parent=1 // pred_check
      _
    $region63: #{tpu_custom_call.1} parent=1 // pred_check_branch
      %4243 = sbr.rel (0) target = $region65
    $region64: #{tpu_custom_call.1} parent=1 // pred_region
      %s4245 = ssub.s32 256, 256
      %4246 = vsyncadd [#allocation3], %s4245
      %s4247 = sshll.u32 [#allocation2], 4
      %s4248 = int_to_ptr.vmem [resolvable:$true] %s4247
      %4253 = dma.vmem_to_hbm [thread:$0]  %s4248, 256, %s15, [#allocation3], 128, 128, 8
    $region65: #{tpu_custom_call.1} parent=1 // pred_fallthru
      _
    // Predicated region
    $region66: #{tpu_custom_call.1} parent=1 // pred_check
      _
    $region67: #{tpu_custom_call.1} parent=1 // pred_check_branch
      %4255 = sbr.rel (0) target = $region69
    $region68: #{tpu_custom_call.1} parent=1 // pred_region
      %s4257 = ssub.s32 32, 32
      %4258 = vsyncadd [#allocation5], %s4257
      %s4260 = sshll.u32 [#allocation4], 4
      %s4261 = int_to_ptr.vmem [resolvable:$true] %s4260
      %4263 = dma.vmem_to_hbm [thread:$0]  %s4261, 32, %s16, [#allocation5]
    $region69: #{tpu_custom_call.1} parent=1 // pred_fallthru
      _
    // Predicated region
    $region70: #{tpu_custom_call.1} parent=1 // pred_check
      _
    $region71: #{tpu_custom_call.1} parent=1 // pred_check_branch
      %4265 = sbr.rel (0) target = $region73
    $region72: #{tpu_custom_call.1} parent=1 // pred_region
      %4266 = dma.done [#allocation3], 256
    $region73: #{tpu_custom_call.1} parent=1 // pred_fallthru
      _
    // Predicated region
    $region74: #{tpu_custom_call.1} parent=1 // pred_check
      _
    $region75: #{tpu_custom_call.1} parent=1 // pred_check_branch
      %4268 = sbr.rel (0) target = $region77
    $region76: #{tpu_custom_call.1} parent=1 // pred_region
      %4269 = dma.done [#allocation5], 32
    $region77: #{tpu_custom_call.1} parent=1 // pred_fallthru
      _
    %4270 = vsyncpa [#allocation3], 1
    %4271 = vsyncpa [#allocation5], 1

</llo_original>
